<compile_context>
chip_gen: v5e
topology: v5e:2x2
jax: 0.10.0
libtpu: 0.0.40
codegen_flags: <defaults>
</compile_context>

<pallas_src>
import jax
import jax.numpy as jnp
from jax.experimental import pallas as pl
from jax.experimental.pallas import tpu as pltpu


# ----------------------------------------------------------------------------
# Kernel 1: fused feature path  ->  precomputed LSTM gate inputs
#   rows r = t*B*N + b*N + n  (time-major), tiled in groups of gpt (b,t) slices
# ----------------------------------------------------------------------------
def _feature_kernel(x_ref, adjb_ref, wspa_ref, bspa_ref, wtem_ref, btem_ref,
                    wgnn_ref, bgnn_ref, wlspa_ref, blspa_ref,
                    wihs_ref, wiht_ref, bg_ref, gx_ref):
    x = x_ref[...]                                       # (TR, Din) f32
    Din = x.shape[1]
    bf = jnp.bfloat16

    # Din is tiny: input linears on the VPU as per-column rank-1 updates.
    x_spa = x[:, 0:1] * wspa_ref[0:1, :] + bspa_ref[...]
    x_tem = x[:, 0:1] * wtem_ref[0:1, :] + btem_ref[...]
    for d in range(1, Din):
        x_spa = x_spa + x[:, d:d + 1] * wspa_ref[d:d + 1, :]
        x_tem = x_tem + x[:, d:d + 1] * wtem_ref[d:d + 1, :]

    # Local GNN aggregation for the whole row tile as ONE block-diagonal
    # matmul: kron(I, adj) @ x_spa.  bf16 operands, f32 accumulation.
    agg = jnp.dot(adjb_ref[...], x_spa.astype(bf),
                  preferred_element_type=jnp.float32)
    g = jnp.maximum(
        jnp.dot(agg.astype(bf), wgnn_ref[...],
                preferred_element_type=jnp.float32) + bgnn_ref[...], 0.0)
    spatial = (jnp.dot(g.astype(bf), wlspa_ref[...],
                       preferred_element_type=jnp.float32)
               + blspa_ref[...] + x_spa)

    # gates_x = cat([spatial, x_tem]) @ W_ih + (b_ih + b_hh)  (concat folded
    # into a split matmul; LSTM input projection hoisted out of the T-loop).
    gx_ref[...] = (
        jnp.dot(spatial.astype(bf), wihs_ref[...],
                preferred_element_type=jnp.float32)
        + jnp.dot(x_tem.astype(bf), wiht_ref[...],
                  preferred_element_type=jnp.float32)
        + bg_ref[...])


def feature_call(x_flat, adj_blk, W_spa, b_spa, W_tem, b_tem, W_gnn, b_gnn,
                 W_lin_spa, b_lin_spa, W_ih_spa, W_ih_tem, b_gates, grid):
    R, Din = x_flat.shape
    H = W_gnn.shape[0]
    G4 = b_gates.shape[1]                                 # 4 * (2H)
    TR = R // grid
    c = lambda shape: pl.BlockSpec(shape, lambda g: (0, 0))
    return pl.pallas_call(
        _feature_kernel,
        out_shape=jax.ShapeDtypeStruct((R, G4), jnp.float32),
        grid_spec=pltpu.PrefetchScalarGridSpec(
            num_scalar_prefetch=0,
            grid=(grid,),
            in_specs=[pl.BlockSpec((TR, Din), lambda g: (g, 0)),
                      c((TR, TR)),
                      c((Din, H)), c((1, H)),
                      c((Din, H)), c((1, H)),
                      c((H, H)), c((1, H)),
                      c((H, H)), c((1, H)),
                      c((H, G4)), c((H, G4)), c((1, G4))],
            out_specs=pl.BlockSpec((TR, G4), lambda g: (g, 0)),
        ),
        compiler_params=pltpu.CompilerParams(
            dimension_semantics=("parallel",)),
    )(x_flat, adj_blk, W_spa, b_spa, W_tem, b_tem, W_gnn, b_gnn,
      W_lin_spa, b_lin_spa, W_ih_spa, W_ih_tem, b_gates)


# ----------------------------------------------------------------------------
# Kernel 2: recurrent LSTM (single grid step, unrolled in-kernel time loop,
#           h/c/history in VMEM scratch) + fused lane-dense output epilogue
# ----------------------------------------------------------------------------
def _lstm_out_kernel(gx_ref, whh_ref, wo1t_ref, biasT_ref, out_ref,
                     h_scr, c_scr, hist_scr):
    T = gx_ref.shape[0]
    HH = h_scr.shape[-1]

    h_scr[...] = jnp.zeros_like(h_scr)
    c_scr[...] = jnp.zeros_like(c_scr)

    def step(t, carry):
        h = h_scr[...]
        c = c_scr[...]
        # Only the recurrent matmul is on the serial critical path; the input
        # projection + biases are already folded into gx_ref.
        gates = gx_ref[t] + jnp.dot(h, whh_ref[...],
                                    preferred_element_type=jnp.float32)
        # gate columns pre-permuted to [i, f, o, g]: one sigmoid, one tanh.
        sig = jax.nn.sigmoid(gates[:, :3 * HH])
        i_g = sig[:, 0 * HH:1 * HH]
        f_g = sig[:, 1 * HH:2 * HH]
        o_g = sig[:, 2 * HH:3 * HH]
        g_g = jnp.tanh(gates[:, 3 * HH:])
        c_new = f_g * c + i_g * g_g
        h_new = o_g * jnp.tanh(c_new)
        h_scr[...] = h_new
        c_scr[...] = c_new
        hist_scr[t] = h_new
        return carry

    jax.lax.fori_loop(0, T, step, 0, unroll=True)

    # Epilogue: temporal = out_lstm + last hidden (broadcast over time),
    # output computed transposed so the store is lane-dense (Dout, R).
    temporal = hist_scr[...] + h_scr[...]                 # (T, BN, HH)
    tflat = temporal.reshape(T * hist_scr.shape[1], HH)   # (R, HH)
    out_ref[...] = (jnp.dot(wo1t_ref[...], tflat.T,
                            preferred_element_type=jnp.float32)
                    + biasT_ref[...])


def lstm_out_call(gates_x, W_hh, Wo1T, bias_T):
    T, BN, G4 = gates_x.shape
    HH = W_hh.shape[0]
    Dout, R = bias_T.shape
    c2 = lambda shape: pl.BlockSpec(shape, lambda i: (0, 0))
    c3 = lambda shape: pl.BlockSpec(shape, lambda i: (0, 0, 0))
    return pl.pallas_call(
        _lstm_out_kernel,
        out_shape=jax.ShapeDtypeStruct((Dout, R), jnp.float32),
        grid_spec=pltpu.PrefetchScalarGridSpec(
            num_scalar_prefetch=0,
            grid=(1,),                       # single step; time loop in-kernel
            in_specs=[c3((T, BN, G4)),       # whole gate sequence VMEM-resident
                      c2((HH, G4)),
                      c2((Dout, HH)),
                      c2((Dout, R))],
            out_specs=pl.BlockSpec((Dout, R), lambda i: (0, 0)),
            scratch_shapes=[pltpu.VMEM((BN, HH), jnp.float32),
                            pltpu.VMEM((BN, HH), jnp.float32),
                            pltpu.VMEM((T, BN, HH), jnp.float32)],
        ),
        compiler_params=pltpu.CompilerParams(
            dimension_semantics=("arbitrary",)),
    )(gates_x, W_hh, Wo1T, bias_T)


# ----------------------------------------------------------------------------
# Full forward (XLA does only tiny weight/bias precompute + final transpose)
# ----------------------------------------------------------------------------
def dmvstnet_forward(x, p):
    B, T, N, Din = x.shape
    H = p['W_in_spa'].shape[1]
    HH = 2 * H                        # == hidden_dim * dim_out in the module
    Dout = p['W_out'].shape[1]
    M = B * T
    BN = B * N
    R = M * N
    bf = jnp.bfloat16

    # ---- weight-only precompute (tiny; stays in XLA) ----
    def reorder(w):                   # LSTM gate blocks [i,f,g,o] -> [i,f,o,g]
        return jnp.concatenate(
            [w[..., :2 * HH], w[..., 3 * HH:], w[..., 2 * HH:3 * HH]], axis=-1)

    W_ih = reorder(p['W_ih'])
    W_hh = reorder(p['W_hh'])
    b_gates = reorder(p['b_ih'] + p['b_hh'])              # (1, 4*HH)
    W_ih_spa = W_ih[:H].astype(bf)
    W_ih_tem = W_ih[H:].astype(bf)
    W_out1 = p['W_out'][:HH]                              # (HH, Dout)
    W_out2 = p['W_out'][HH:]                              # (H, Dout)
    Wo1T = W_out1.T                                       # (Dout, HH)

    # Sensor path folded to a per-row additive bias (done once in XLA,
    # ~R*Din*Dout flops), stored transposed so Kernel 2 stays lane-dense:
    #   x_out_sen @ W_out2 = x @ (W_sen @ nw[n] @ W_out2) + b_sen @ nw[n] @ W_out2
    nw = jnp.einsum('nd,dio->nio', p['node_emb'], p['w'])             # (N,H,H)
    S = jnp.einsum('di,nio,oj->ndj', p['W_in_sen'], nw, W_out2)       # (N,Din,Dout)
    c_sen = jnp.einsum('i,nio,oj->nj', p['b_in_sen'][0], nw, W_out2)  # (N,Dout)

    # ---- data layout: flatten rows time-major (t, b, n) ----
    x_flat = x.transpose(1, 0, 2, 3).reshape(R, Din)
    sen = (jnp.einsum('mnd,ndo->mno', x_flat.reshape(M, N, Din), S)
           + c_sen).reshape(R, Dout)
    bias_T = (sen + p['b_out']).T                                     # (Dout, R)

    # ---- row tiling: fixed ~256-row block-diagonal adjacency tile ----
    gpt = max(1, min(M, 256 // N)) if N <= 256 else 1     # (b,t) groups / tile
    while M % gpt != 0:
        gpt -= 1
    grid = M // gpt                   # 1 at toy size; parallel tiles at scale
    adj_blk = jnp.kron(jnp.eye(gpt, dtype=jnp.float32), p['adj']).astype(bf)

    # ---- kernel 1: fused feature path -> LSTM gate inputs (time-major) ----
    gates_x = feature_call(
        x_flat, adj_blk,
        p['W_in_spa'], p['b_in_spa'], p['W_in_tem'], p['b_in_tem'],
        p['W_gnn'].astype(bf), p['b_gnn'],
        p['W_lin_spa'].astype(bf), p['b_lin_spa'],
        W_ih_spa, W_ih_tem, b_gates, grid)
    gates_x = gates_x.reshape(T, BN, 4 * HH)

    # ---- kernel 2: unrolled recurrent LSTM + fused transposed epilogue ----
    out_T = lstm_out_call(gates_x, W_hh, Wo1T, bias_T)    # (Dout, R)
    return out_T.T.reshape(T, B, N, Dout).transpose(1, 0, 2, 3)


# ----------------------------------------------------------------------------
# Pure-JAX reference (mirrors the PyTorch forward) for validation
# ----------------------------------------------------------------------------
def reference_forward(x, p):
    B, T, N, Din = x.shape
    H = p['W_in_spa'].shape[1]
    HH2 = 2 * H
    x_spa = x @ p['W_in_spa'] + p['b_in_spa']
    x_tem = x @ p['W_in_tem'] + p['b_in_tem']
    x_sen = x @ p['W_in_sen'] + p['b_in_sen']
    g = jax.nn.relu(jnp.einsum('vn,btnd->btvd', p['adj'], x_spa)
                    @ p['W_gnn'] + p['b_gnn'])
    spatial = g @ p['W_lin_spa'] + p['b_lin_spa'] + x_spa
    ret = jnp.concatenate([spatial, x_tem], -1)
    ret = ret.transpose(0, 2, 1, 3).reshape(B * N, T, HH2)

    def step(carry, xt):
        h, c = carry
        gates = xt @ p['W_ih'] + h @ p['W_hh'] + p['b_ih'] + p['b_hh']
        ig, fg, gg, og = jnp.split(gates, 4, axis=-1)
        c = jax.nn.sigmoid(fg) * c + jax.nn.sigmoid(ig) * jnp.tanh(gg)
        h = jax.nn.sigmoid(og) * jnp.tanh(c)
        return (h, c), h

    h0 = jnp.zeros((B * N, HH2), jnp.float32)
    (_, _), outs = jax.lax.scan(step, (h0, h0), ret.transpose(1, 0, 2))
    out_lstm = outs.transpose(1, 0, 2)
    hid = out_lstm[:, -1]
    temporal = (out_lstm.reshape(B, N, T, HH2)
                + hid.reshape(B, N, 1, HH2)).transpose(0, 2, 1, 3)
    weights = jnp.einsum('nd,dio->nio', p['node_emb'], p['w'])
    x_out_sen = jnp.einsum('btni,nio->btno', x_sen, weights)
    cat = jnp.concatenate([temporal, x_out_sen], -1)
    return cat @ p['W_out'] + p['b_out']


# ----------------------------------------------------------------------------
# Deterministic parameter init + run
# ----------------------------------------------------------------------------
def make_params(key, N, Din, Dout, H, E):
    HH2 = 2 * H  # == hidden_dim * dim_out (the module's view implies Dout == 2)
    ks = jax.random.split(key, 20)
    n = lambda k, s: (0.1 * jax.random.normal(k, s)).astype(jnp.float32)
    adj = jax.random.uniform(ks[0], (N, N), jnp.float32)
    adj = adj / jnp.sum(adj, axis=1, keepdims=True)
    p = {
        'adj': adj,
        'W_in_spa': n(ks[1], (Din, H)),  'b_in_spa': n(ks[2], (1, H)),
        'W_in_tem': n(ks[3], (Din, H)),  'b_in_tem': n(ks[4], (1, H)),
        'W_in_sen': n(ks[5], (Din, H)),  'b_in_sen': n(ks[6], (1, H)),
        'W_gnn':    n(ks[7], (H, H)),    'b_gnn':    n(ks[8], (1, H)),
        'W_lin_spa': n(ks[9], (H, H)),   'b_lin_spa': n(ks[10], (1, H)),
        'W_ih': n(ks[11], (HH2, 4 * HH2)), 'b_ih': n(ks[12], (1, 4 * HH2)),
        'W_hh': n(ks[13], (HH2, 4 * HH2)), 'b_hh': n(ks[14], (1, 4 * HH2)),
        'node_emb': n(ks[15], (N, E)),
        'w': n(ks[16], (E, H, H)),
        'W_out': n(ks[17], (HH2 + H, Dout)), 'b_out': n(ks[18], (1, Dout)),
    }
    # NOTE: Local_GNN2 / Local_GNN3 are declared in __init__ but unused in
    # forward, so they are intentionally omitted.
    return p


if __name__ == "__main__":
    B, T, N = 2, 8, 16          # batch, input_window, num_nodes
    Din, Dout = 2, 2            # dim_out must be 2 for the module's view() to work
    H, E = 32, 8                # hidden_dim, topo_embedded_dim

    key = jax.random.PRNGKey(0)
    kx, kp = jax.random.split(key)
    x = jax.random.normal(kx, (B, T, N, Din), jnp.float32)
    params = make_params(kp, N, Din, Dout, H, E)

    out = jax.jit(dmvstnet_forward)(x, params)
    out = jax.block_until_ready(out)

    ref = reference_forward(x, params)
    assert out.shape == (B, T, N, Dout)
    assert jnp.allclose(out, ref, rtol=5e-3, atol=5e-3), (
        float(jnp.max(jnp.abs(out - ref))))

    print("KERNEL_OK")
</pallas_src>

<mosaic_0001>
module attributes {stable_mosaic.version = 11 : i64} {
  func.func @_feature_kernel(%arg0: i32, %arg1: memref<256x2xf32, #tpu.memory_space<vmem>>, %arg2: memref<256x256xbf16, #tpu.memory_space<vmem>>, %arg3: memref<2x32xf32, #tpu.memory_space<vmem>>, %arg4: memref<1x32xf32, #tpu.memory_space<vmem>>, %arg5: memref<2x32xf32, #tpu.memory_space<vmem>>, %arg6: memref<1x32xf32, #tpu.memory_space<vmem>>, %arg7: memref<32x32xbf16, #tpu.memory_space<vmem>>, %arg8: memref<1x32xf32, #tpu.memory_space<vmem>>, %arg9: memref<32x32xbf16, #tpu.memory_space<vmem>>, %arg10: memref<1x32xf32, #tpu.memory_space<vmem>>, %arg11: memref<32x256xbf16, #tpu.memory_space<vmem>>, %arg12: memref<32x256xbf16, #tpu.memory_space<vmem>>, %arg13: memref<1x256xf32, #tpu.memory_space<vmem>>, %arg14: memref<256x256xf32, #tpu.memory_space<vmem>>) attributes {dimension_semantics = [#tpu.dimension_semantics<parallel>], iteration_bounds = array<i64: 1>, scalar_prefetch = 0 : i64, scratch_operands = 0 : i64, tpu.core_type = #tpu.core_type<tc>, window_params = [{transform_indices = @transform_0, window_bounds = array<i64: 256, 2>}, {pipeline_mode = #tpu.pipeline_mode<synchronous>, transform_indices = @transform_1, window_bounds = array<i64: 256, 256>}, {pipeline_mode = #tpu.pipeline_mode<synchronous>, transform_indices = @transform_2, window_bounds = array<i64: 2, 32>}, {pipeline_mode = #tpu.pipeline_mode<synchronous>, transform_indices = @transform_3, window_bounds = array<i64: 1, 32>}, {pipeline_mode = #tpu.pipeline_mode<synchronous>, transform_indices = @transform_4, window_bounds = array<i64: 2, 32>}, {pipeline_mode = #tpu.pipeline_mode<synchronous>, transform_indices = @transform_5, window_bounds = array<i64: 1, 32>}, {pipeline_mode = #tpu.pipeline_mode<synchronous>, transform_indices = @transform_6, window_bounds = array<i64: 32, 32>}, {pipeline_mode = #tpu.pipeline_mode<synchronous>, transform_indices = @transform_7, window_bounds = array<i64: 1, 32>}, {pipeline_mode = #tpu.pipeline_mode<synchronous>, transform_indices = @transform_8, window_bounds = array<i64: 32, 32>}, {pipeline_mode = #tpu.pipeline_mode<synchronous>, transform_indices = @transform_9, window_bounds = array<i64: 1, 32>}, {pipeline_mode = #tpu.pipeline_mode<synchronous>, transform_indices = @transform_10, window_bounds = array<i64: 32, 256>}, {pipeline_mode = #tpu.pipeline_mode<synchronous>, transform_indices = @transform_11, window_bounds = array<i64: 32, 256>}, {pipeline_mode = #tpu.pipeline_mode<synchronous>, transform_indices = @transform_12, window_bounds = array<i64: 1, 256>}, {transform_indices = @transform_13, window_bounds = array<i64: 256, 256>}]} {
    %c0 = arith.constant 0 : index
    %c0_0 = arith.constant 0 : index
    %0 = vector.load %arg1[%c0, %c0_0] : memref<256x2xf32, #tpu.memory_space<vmem>>, vector<256x2xf32>
    %1 = vector.extract_strided_slice %0 {offsets = [0, 0], sizes = [256, 1], strides = [1, 1]} : vector<256x2xf32> to vector<256x1xf32>
    %c0_1 = arith.constant 0 : index
    %c0_2 = arith.constant 0 : index
    %2 = vector.load %arg3[%c0_1, %c0_2] : memref<2x32xf32, #tpu.memory_space<vmem>>, vector<1x32xf32>
    %3 = vector.broadcast %1 : vector<256x1xf32> to vector<256x32xf32>
    %4 = vector.broadcast %2 : vector<1x32xf32> to vector<256x32xf32>
    %5 = arith.mulf %3, %4 : vector<256x32xf32>
    %c0_3 = arith.constant 0 : index
    %c0_4 = arith.constant 0 : index
    %6 = vector.load %arg4[%c0_3, %c0_4] : memref<1x32xf32, #tpu.memory_space<vmem>>, vector<1x32xf32>
    %7 = vector.broadcast %6 : vector<1x32xf32> to vector<256x32xf32>
    %8 = arith.addf %5, %7 : vector<256x32xf32>
    %9 = vector.extract_strided_slice %0 {offsets = [0, 0], sizes = [256, 1], strides = [1, 1]} : vector<256x2xf32> to vector<256x1xf32>
    %c0_5 = arith.constant 0 : index
    %c0_6 = arith.constant 0 : index
    %10 = vector.load %arg5[%c0_5, %c0_6] : memref<2x32xf32, #tpu.memory_space<vmem>>, vector<1x32xf32>
    %11 = vector.broadcast %9 : vector<256x1xf32> to vector<256x32xf32>
    %12 = vector.broadcast %10 : vector<1x32xf32> to vector<256x32xf32>
    %13 = arith.mulf %11, %12 : vector<256x32xf32>
    %c0_7 = arith.constant 0 : index
    %c0_8 = arith.constant 0 : index
    %14 = vector.load %arg6[%c0_7, %c0_8] : memref<1x32xf32, #tpu.memory_space<vmem>>, vector<1x32xf32>
    %15 = vector.broadcast %14 : vector<1x32xf32> to vector<256x32xf32>
    %16 = arith.addf %13, %15 : vector<256x32xf32>
    %17 = vector.extract_strided_slice %0 {offsets = [0, 1], sizes = [256, 1], strides = [1, 1]} : vector<256x2xf32> to vector<256x1xf32>
    %c1 = arith.constant 1 : index
    %c0_9 = arith.constant 0 : index
    %18 = vector.load %arg3[%c1, %c0_9] : memref<2x32xf32, #tpu.memory_space<vmem>>, vector<1x32xf32>
    %19 = vector.broadcast %17 : vector<256x1xf32> to vector<256x32xf32>
    %20 = vector.broadcast %18 : vector<1x32xf32> to vector<256x32xf32>
    %21 = arith.mulf %19, %20 : vector<256x32xf32>
    %22 = arith.addf %8, %21 : vector<256x32xf32>
    %23 = vector.extract_strided_slice %0 {offsets = [0, 1], sizes = [256, 1], strides = [1, 1]} : vector<256x2xf32> to vector<256x1xf32>
    %c1_10 = arith.constant 1 : index
    %c0_11 = arith.constant 0 : index
    %24 = vector.load %arg5[%c1_10, %c0_11] : memref<2x32xf32, #tpu.memory_space<vmem>>, vector<1x32xf32>
    %25 = vector.broadcast %23 : vector<256x1xf32> to vector<256x32xf32>
    %26 = vector.broadcast %24 : vector<1x32xf32> to vector<256x32xf32>
    %27 = arith.mulf %25, %26 : vector<256x32xf32>
    %28 = arith.addf %16, %27 : vector<256x32xf32>
    %c0_12 = arith.constant 0 : index
    %c0_13 = arith.constant 0 : index
    %29 = vector.load %arg2[%c0_12, %c0_13] : memref<256x256xbf16, #tpu.memory_space<vmem>>, vector<256x256xbf16>
    %30 = arith.truncf %22 : vector<256x32xf32> to vector<256x32xbf16>
    %cst = arith.constant dense<0.000000e+00> : vector<256x32xf32>
    %31 = tpu.matmul %29, %30, %cst {dimension_numbers = #tpu.dot_dimension_numbers<[1], [0], [0], [1], [0, 0, 1, 1], [], []>} : vector<256x256xbf16>, vector<256x32xbf16>, vector<256x32xf32> -> vector<256x32xf32>
    %32 = arith.truncf %31 : vector<256x32xf32> to vector<256x32xbf16>
    %c0_14 = arith.constant 0 : index
    %c0_15 = arith.constant 0 : index
    %33 = vector.load %arg7[%c0_14, %c0_15] : memref<32x32xbf16, #tpu.memory_space<vmem>>, vector<32x32xbf16>
    %cst_16 = arith.constant dense<0.000000e+00> : vector<256x32xf32>
    %34 = tpu.matmul %32, %33, %cst_16 {dimension_numbers = #tpu.dot_dimension_numbers<[1], [0], [0], [1], [0, 0, 1, 1], [], []>} : vector<256x32xbf16>, vector<32x32xbf16>, vector<256x32xf32> -> vector<256x32xf32>
    %c0_17 = arith.constant 0 : index
    %c0_18 = arith.constant 0 : index
    %35 = vector.load %arg8[%c0_17, %c0_18] : memref<1x32xf32, #tpu.memory_space<vmem>>, vector<1x32xf32>
    %36 = vector.broadcast %35 : vector<1x32xf32> to vector<256x32xf32>
    %37 = arith.addf %34, %36 : vector<256x32xf32>
    %cst_19 = arith.constant 0.000000e+00 : f32
    %38 = vector.broadcast %cst_19 : f32 to vector<256x32xf32>
    %39 = arith.maximumf %37, %38 : vector<256x32xf32>
    %40 = arith.truncf %39 : vector<256x32xf32> to vector<256x32xbf16>
    %c0_20 = arith.constant 0 : index
    %c0_21 = arith.constant 0 : index
    %41 = vector.load %arg9[%c0_20, %c0_21] : memref<32x32xbf16, #tpu.memory_space<vmem>>, vector<32x32xbf16>
    %cst_22 = arith.constant dense<0.000000e+00> : vector<256x32xf32>
    %42 = tpu.matmul %40, %41, %cst_22 {dimension_numbers = #tpu.dot_dimension_numbers<[1], [0], [0], [1], [0, 0, 1, 1], [], []>} : vector<256x32xbf16>, vector<32x32xbf16>, vector<256x32xf32> -> vector<256x32xf32>
    %c0_23 = arith.constant 0 : index
    %c0_24 = arith.constant 0 : index
    %43 = vector.load %arg10[%c0_23, %c0_24] : memref<1x32xf32, #tpu.memory_space<vmem>>, vector<1x32xf32>
    %44 = vector.broadcast %43 : vector<1x32xf32> to vector<256x32xf32>
    %45 = arith.addf %42, %44 : vector<256x32xf32>
    %46 = arith.addf %45, %22 : vector<256x32xf32>
    %47 = arith.truncf %46 : vector<256x32xf32> to vector<256x32xbf16>
    %c0_25 = arith.constant 0 : index
    %c0_26 = arith.constant 0 : index
    %48 = vector.load %arg11[%c0_25, %c0_26] : memref<32x256xbf16, #tpu.memory_space<vmem>>, vector<32x256xbf16>
    %cst_27 = arith.constant dense<0.000000e+00> : vector<256x256xf32>
    %49 = tpu.matmul %47, %48, %cst_27 {dimension_numbers = #tpu.dot_dimension_numbers<[1], [0], [0], [1], [0, 0, 1, 1], [], []>} : vector<256x32xbf16>, vector<32x256xbf16>, vector<256x256xf32> -> vector<256x256xf32>
    %50 = arith.truncf %28 : vector<256x32xf32> to vector<256x32xbf16>
    %c0_28 = arith.constant 0 : index
    %c0_29 = arith.constant 0 : index
    %51 = vector.load %arg12[%c0_28, %c0_29] : memref<32x256xbf16, #tpu.memory_space<vmem>>, vector<32x256xbf16>
    %cst_30 = arith.constant dense<0.000000e+00> : vector<256x256xf32>
    %52 = tpu.matmul %50, %51, %cst_30 {dimension_numbers = #tpu.dot_dimension_numbers<[1], [0], [0], [1], [0, 0, 1, 1], [], []>} : vector<256x32xbf16>, vector<32x256xbf16>, vector<256x256xf32> -> vector<256x256xf32>
    %53 = arith.addf %49, %52 : vector<256x256xf32>
    %c0_31 = arith.constant 0 : index
    %c0_32 = arith.constant 0 : index
    %54 = vector.load %arg13[%c0_31, %c0_32] : memref<1x256xf32, #tpu.memory_space<vmem>>, vector<1x256xf32>
    %55 = vector.broadcast %54 : vector<1x256xf32> to vector<256x256xf32>
    %56 = arith.addf %53, %55 : vector<256x256xf32>
    %c0_33 = arith.constant 0 : index
    %c0_34 = arith.constant 0 : index
    %57 = vector.load %arg14[%c0_33, %c0_34] : memref<256x256xf32, #tpu.memory_space<vmem>>, vector<256x256xf32>
    tpu.vector_store %arg14[%c0_33, %c0_34], %56 {strides = array<i32>} : memref<256x256xf32, #tpu.memory_space<vmem>>, vector<256x256xf32>,
    return
  }
  func.func @transform_0(%arg0: i32) -> (i32, i32) {
    %c0_i32 = arith.constant 0 : i32
    %c0_i32_0 = arith.constant 0 : i32
    return %arg0, %c0_i32 : i32, i32
  }
  func.func @transform_1(%arg0: i32) -> (i32, i32) {
    %c0_i32 = arith.constant 0 : i32
    %c0_i32_0 = arith.constant 0 : i32
    %c0_i32_1 = arith.constant 0 : i32
    return %c0_i32, %c0_i32_0 : i32, i32
  }
  func.func @transform_2(%arg0: i32) -> (i32, i32) {
    %c0_i32 = arith.constant 0 : i32
    %c0_i32_0 = arith.constant 0 : i32
    %c0_i32_1 = arith.constant 0 : i32
    return %c0_i32, %c0_i32_0 : i32, i32
  }
  func.func @transform_3(%arg0: i32) -> (i32, i32) {
    %c0_i32 = arith.constant 0 : i32
    %c0_i32_0 = arith.constant 0 : i32
    %c0_i32_1 = arith.constant 0 : i32
    return %c0_i32, %c0_i32_0 : i32, i32
  }
  func.func @transform_4(%arg0: i32) -> (i32, i32) {
    %c0_i32 = arith.constant 0 : i32
    %c0_i32_0 = arith.constant 0 : i32
    %c0_i32_1 = arith.constant 0 : i32
    return %c0_i32, %c0_i32_0 : i32, i32
  }
  func.func @transform_5(%arg0: i32) -> (i32, i32) {
    %c0_i32 = arith.constant 0 : i32
    %c0_i32_0 = arith.constant 0 : i32
    %c0_i32_1 = arith.constant 0 : i32
    return %c0_i32, %c0_i32_0 : i32, i32
  }
  func.func @transform_6(%arg0: i32) -> (i32, i32) {
    %c0_i32 = arith.constant 0 : i32
    %c0_i32_0 = arith.constant 0 : i32
    %c0_i32_1 = arith.constant 0 : i32
    return %c0_i32, %c0_i32_0 : i32, i32
  }
  func.func @transform_7(%arg0: i32) -> (i32, i32) {
    %c0_i32 = arith.constant 0 : i32
    %c0_i32_0 = arith.constant 0 : i32
    %c0_i32_1 = arith.constant 0 : i32
    return %c0_i32, %c0_i32_0 : i32, i32
  }
  func.func @transform_8(%arg0: i32) -> (i32, i32) {
    %c0_i32 = arith.constant 0 : i32
    %c0_i32_0 = arith.constant 0 : i32
    %c0_i32_1 = arith.constant 0 : i32
    return %c0_i32, %c0_i32_0 : i32, i32
  }
  func.func @transform_9(%arg0: i32) -> (i32, i32) {
    %c0_i32 = arith.constant 0 : i32
    %c0_i32_0 = arith.constant 0 : i32
    %c0_i32_1 = arith.constant 0 : i32
    return %c0_i32, %c0_i32_0 : i32, i32
  }
  func.func @transform_10(%arg0: i32) -> (i32, i32) {
    %c0_i32 = arith.constant 0 : i32
    %c0_i32_0 = arith.constant 0 : i32
    %c0_i32_1 = arith.constant 0 : i32
    return %c0_i32, %c0_i32_0 : i32, i32
  }
  func.func @transform_11(%arg0: i32) -> (i32, i32) {
    %c0_i32 = arith.constant 0 : i32
    %c0_i32_0 = arith.constant 0 : i32
    %c0_i32_1 = arith.constant 0 : i32
    return %c0_i32, %c0_i32_0 : i32, i32
  }
  func.func @transform_12(%arg0: i32) -> (i32, i32) {
    %c0_i32 = arith.constant 0 : i32
    %c0_i32_0 = arith.constant 0 : i32
    %c0_i32_1 = arith.constant 0 : i32
    return %c0_i32, %c0_i32_0 : i32, i32
  }
  func.func @transform_13(%arg0: i32) -> (i32, i32) {
    %c0_i32 = arith.constant 0 : i32
    %c0_i32_0 = arith.constant 0 : i32
    return %arg0, %c0_i32 : i32, i32
  }
}

module attributes {stable_mosaic.version = 11 : i64} {
  func.func @_lstm_out_kernel(%arg0: i32, %arg1: memref<8x32x256xf32, #tpu.memory_space<vmem>>, %arg2: memref<64x256xf32, #tpu.memory_space<vmem>>, %arg3: memref<2x64xf32, #tpu.memory_space<vmem>>, %arg4: memref<2x256xf32, #tpu.memory_space<vmem>>, %arg5: memref<2x256xf32, #tpu.memory_space<vmem>>, %arg6: memref<32x64xf32, #tpu.memory_space<vmem>>, %arg7: memref<32x64xf32, #tpu.memory_space<vmem>>, %arg8: memref<8x32x64xf32, #tpu.memory_space<vmem>>) attributes {dimension_semantics = [#tpu.dimension_semantics<arbitrary>], iteration_bounds = array<i64: 1>, scalar_prefetch = 0 : i64, scratch_operands = 3 : i64, tpu.core_type = #tpu.core_type<tc>, window_params = [{pipeline_mode = #tpu.pipeline_mode<synchronous>, transform_indices = @transform_0, window_bounds = array<i64: 8, 32, 256>}, {pipeline_mode = #tpu.pipeline_mode<synchronous>, transform_indices = @transform_1, window_bounds = array<i64: 64, 256>}, {pipeline_mode = #tpu.pipeline_mode<synchronous>, transform_indices = @transform_2, window_bounds = array<i64: 2, 64>}, {pipeline_mode = #tpu.pipeline_mode<synchronous>, transform_indices = @transform_3, window_bounds = array<i64: 2, 256>}, {pipeline_mode = #tpu.pipeline_mode<synchronous>, transform_indices = @transform_4, window_bounds = array<i64: 2, 256>}]} {
    %cst = arith.constant 0.000000e+00 : f32
    %0 = vector.broadcast %cst : f32 to vector<32x64xf32>
    %c0 = arith.constant 0 : index
    %c0_0 = arith.constant 0 : index
    %1 = vector.load %arg6[%c0, %c0_0] : memref<32x64xf32, #tpu.memory_space<vmem>>, vector<32x64xf32>
    tpu.vector_store %arg6[%c0, %c0_0], %0 {strides = array<i32>} : memref<32x64xf32, #tpu.memory_space<vmem>>, vector<32x64xf32>,
    %cst_1 = arith.constant 0.000000e+00 : f32
    %2 = vector.broadcast %cst_1 : f32 to vector<32x64xf32>
    %c0_2 = arith.constant 0 : index
    %c0_3 = arith.constant 0 : index
    %3 = vector.load %arg7[%c0_2, %c0_3] : memref<32x64xf32, #tpu.memory_space<vmem>>, vector<32x64xf32>
    tpu.vector_store %arg7[%c0_2, %c0_3], %2 {strides = array<i32>} : memref<32x64xf32, #tpu.memory_space<vmem>>, vector<32x64xf32>,
    %c0_i32 = arith.constant 0 : i32
    %c0_4 = arith.constant 0 : index
    %c0_5 = arith.constant 0 : index
    %4 = vector.load %arg6[%c0_4, %c0_5] : memref<32x64xf32, #tpu.memory_space<vmem>>, vector<32x64xf32>
    %c0_6 = arith.constant 0 : index
    %c0_7 = arith.constant 0 : index
    %5 = vector.load %arg7[%c0_6, %c0_7] : memref<32x64xf32, #tpu.memory_space<vmem>>, vector<32x64xf32>
    %6 = arith.index_cast %c0_i32 : i32 to index
    %c0_8 = arith.constant 0 : index
    %c0_9 = arith.constant 0 : index
    %7 = vector.load %arg1[%6, %c0_8, %c0_9] : memref<8x32x256xf32, #tpu.memory_space<vmem>>, vector<1x32x256xf32>
    %8 = vector.shape_cast %7 : vector<1x32x256xf32> to vector<32x256xf32>
    %c0_10 = arith.constant 0 : index
    %c0_11 = arith.constant 0 : index
    %9 = vector.load %arg2[%c0_10, %c0_11] : memref<64x256xf32, #tpu.memory_space<vmem>>, vector<64x256xf32>
    %cst_12 = arith.constant dense<0.000000e+00> : vector<32x256xf32>
    %10 = tpu.matmul %4, %9, %cst_12 {dimension_numbers = #tpu.dot_dimension_numbers<[1], [0], [0], [1], [0, 0, 1, 1], [], []>} : vector<32x64xf32>, vector<64x256xf32>, vector<32x256xf32> -> vector<32x256xf32>
    %11 = arith.addf %8, %10 : vector<32x256xf32>
    %12 = vector.extract_strided_slice %11 {offsets = [0, 0], sizes = [32, 192], strides = [1, 1]} : vector<32x256xf32> to vector<32x192xf32>
    %13 = arith.negf %12 : vector<32x192xf32>
    %14 = math.exp %13 : vector<32x192xf32>
    %cst_13 = arith.constant 1.000000e+00 : f32
    %15 = vector.broadcast %cst_13 : f32 to vector<32x192xf32>
    %16 = arith.addf %15, %14 : vector<32x192xf32>
    %17 = arith.divf %15, %16 : vector<32x192xf32>
    %18 = vector.extract_strided_slice %17 {offsets = [0, 0], sizes = [32, 64], strides = [1, 1]} : vector<32x192xf32> to vector<32x64xf32>
    %19 = vector.extract_strided_slice %17 {offsets = [0, 64], sizes = [32, 64], strides = [1, 1]} : vector<32x192xf32> to vector<32x64xf32>
    %20 = vector.extract_strided_slice %17 {offsets = [0, 128], sizes = [32, 64], strides = [1, 1]} : vector<32x192xf32> to vector<32x64xf32>
    %21 = vector.extract_strided_slice %11 {offsets = [0, 192], sizes = [32, 64], strides = [1, 1]} : vector<32x256xf32> to vector<32x64xf32>
    %22 = math.tanh %21 : vector<32x64xf32>
    %23 = arith.mulf %19, %5 : vector<32x64xf32>
    %24 = arith.mulf %18, %22 : vector<32x64xf32>
    %25 = arith.addf %23, %24 : vector<32x64xf32>
    %26 = math.tanh %25 : vector<32x64xf32>
    %27 = arith.mulf %20, %26 : vector<32x64xf32>
    %c0_14 = arith.constant 0 : index
    %c0_15 = arith.constant 0 : index
    %28 = vector.load %arg6[%c0_14, %c0_15] : memref<32x64xf32, #tpu.memory_space<vmem>>, vector<32x64xf32>
    tpu.vector_store %arg6[%c0_14, %c0_15], %27 {strides = array<i32>} : memref<32x64xf32, #tpu.memory_space<vmem>>, vector<32x64xf32>,
    %c0_16 = arith.constant 0 : index
    %c0_17 = arith.constant 0 : index
    %29 = vector.load %arg7[%c0_16, %c0_17] : memref<32x64xf32, #tpu.memory_space<vmem>>, vector<32x64xf32>
    tpu.vector_store %arg7[%c0_16, %c0_17], %25 {strides = array<i32>} : memref<32x64xf32, #tpu.memory_space<vmem>>, vector<32x64xf32>,
    %30 = arith.index_cast %c0_i32 : i32 to index
    %c0_18 = arith.constant 0 : index
    %c0_19 = arith.constant 0 : index
    %31 = vector.load %arg8[%30, %c0_18, %c0_19] : memref<8x32x64xf32, #tpu.memory_space<vmem>>, vector<1x32x64xf32>
    %32 = vector.shape_cast %31 : vector<1x32x64xf32> to vector<32x64xf32>
    %33 = vector.shape_cast %27 : vector<32x64xf32> to vector<1x32x64xf32>
    tpu.vector_store %arg8[%30, %c0_18, %c0_19], %33 {strides = array<i32>} : memref<8x32x64xf32, #tpu.memory_space<vmem>>, vector<1x32x64xf32>,
    %c1_i32 = arith.constant 1 : i32
    %c0_20 = arith.constant 0 : index
    %c0_21 = arith.constant 0 : index
    %34 = vector.load %arg6[%c0_20, %c0_21] : memref<32x64xf32, #tpu.memory_space<vmem>>, vector<32x64xf32>
    %c0_22 = arith.constant 0 : index
    %c0_23 = arith.constant 0 : index
    %35 = vector.load %arg7[%c0_22, %c0_23] : memref<32x64xf32, #tpu.memory_space<vmem>>, vector<32x64xf32>
    %36 = arith.index_cast %c1_i32 : i32 to index
    %c0_24 = arith.constant 0 : index
    %c0_25 = arith.constant 0 : index
    %37 = vector.load %arg1[%36, %c0_24, %c0_25] : memref<8x32x256xf32, #tpu.memory_space<vmem>>, vector<1x32x256xf32>
    %38 = vector.shape_cast %37 : vector<1x32x256xf32> to vector<32x256xf32>
    %c0_26 = arith.constant 0 : index
    %c0_27 = arith.constant 0 : index
    %39 = vector.load %arg2[%c0_26, %c0_27] : memref<64x256xf32, #tpu.memory_space<vmem>>, vector<64x256xf32>
    %cst_28 = arith.constant dense<0.000000e+00> : vector<32x256xf32>
    %40 = tpu.matmul %34, %39, %cst_28 {dimension_numbers = #tpu.dot_dimension_numbers<[1], [0], [0], [1], [0, 0, 1, 1], [], []>} : vector<32x64xf32>, vector<64x256xf32>, vector<32x256xf32> -> vector<32x256xf32>
    %41 = arith.addf %38, %40 : vector<32x256xf32>
    %42 = vector.extract_strided_slice %41 {offsets = [0, 0], sizes = [32, 192], strides = [1, 1]} : vector<32x256xf32> to vector<32x192xf32>
    %43 = arith.negf %42 : vector<32x192xf32>
    %44 = math.exp %43 : vector<32x192xf32>
    %cst_29 = arith.constant 1.000000e+00 : f32
    %45 = vector.broadcast %cst_29 : f32 to vector<32x192xf32>
    %46 = arith.addf %45, %44 : vector<32x192xf32>
    %47 = arith.divf %45, %46 : vector<32x192xf32>
    %48 = vector.extract_strided_slice %47 {offsets = [0, 0], sizes = [32, 64], strides = [1, 1]} : vector<32x192xf32> to vector<32x64xf32>
    %49 = vector.extract_strided_slice %47 {offsets = [0, 64], sizes = [32, 64], strides = [1, 1]} : vector<32x192xf32> to vector<32x64xf32>
    %50 = vector.extract_strided_slice %47 {offsets = [0, 128], sizes = [32, 64], strides = [1, 1]} : vector<32x192xf32> to vector<32x64xf32>
    %51 = vector.extract_strided_slice %41 {offsets = [0, 192], sizes = [32, 64], strides = [1, 1]} : vector<32x256xf32> to vector<32x64xf32>
    %52 = math.tanh %51 : vector<32x64xf32>
    %53 = arith.mulf %49, %35 : vector<32x64xf32>
    %54 = arith.mulf %48, %52 : vector<32x64xf32>
    %55 = arith.addf %53, %54 : vector<32x64xf32>
    %56 = math.tanh %55 : vector<32x64xf32>
    %57 = arith.mulf %50, %56 : vector<32x64xf32>
    %c0_30 = arith.constant 0 : index
    %c0_31 = arith.constant 0 : index
    %58 = vector.load %arg6[%c0_30, %c0_31] : memref<32x64xf32, #tpu.memory_space<vmem>>, vector<32x64xf32>
    tpu.vector_store %arg6[%c0_30, %c0_31], %57 {strides = array<i32>} : memref<32x64xf32, #tpu.memory_space<vmem>>, vector<32x64xf32>,
    %c0_32 = arith.constant 0 : index
    %c0_33 = arith.constant 0 : index
    %59 = vector.load %arg7[%c0_32, %c0_33] : memref<32x64xf32, #tpu.memory_space<vmem>>, vector<32x64xf32>
    tpu.vector_store %arg7[%c0_32, %c0_33], %55 {strides = array<i32>} : memref<32x64xf32, #tpu.memory_space<vmem>>, vector<32x64xf32>,
    %60 = arith.index_cast %c1_i32 : i32 to index
    %c0_34 = arith.constant 0 : index
    %c0_35 = arith.constant 0 : index
    %61 = vector.load %arg8[%60, %c0_34, %c0_35] : memref<8x32x64xf32, #tpu.memory_space<vmem>>, vector<1x32x64xf32>
    %62 = vector.shape_cast %61 : vector<1x32x64xf32> to vector<32x64xf32>
    %63 = vector.shape_cast %57 : vector<32x64xf32> to vector<1x32x64xf32>
    tpu.vector_store %arg8[%60, %c0_34, %c0_35], %63 {strides = array<i32>} : memref<8x32x64xf32, #tpu.memory_space<vmem>>, vector<1x32x64xf32>,
    %c2_i32 = arith.constant 2 : i32
    %c0_36 = arith.constant 0 : index
    %c0_37 = arith.constant 0 : index
    %64 = vector.load %arg6[%c0_36, %c0_37] : memref<32x64xf32, #tpu.memory_space<vmem>>, vector<32x64xf32>
    %c0_38 = arith.constant 0 : index
    %c0_39 = arith.constant 0 : index
    %65 = vector.load %arg7[%c0_38, %c0_39] : memref<32x64xf32, #tpu.memory_space<vmem>>, vector<32x64xf32>
    %66 = arith.index_cast %c2_i32 : i32 to index
    %c0_40 = arith.constant 0 : index
    %c0_41 = arith.constant 0 : index
    %67 = vector.load %arg1[%66, %c0_40, %c0_41] : memref<8x32x256xf32, #tpu.memory_space<vmem>>, vector<1x32x256xf32>
    %68 = vector.shape_cast %67 : vector<1x32x256xf32> to vector<32x256xf32>
    %c0_42 = arith.constant 0 : index
    %c0_43 = arith.constant 0 : index
    %69 = vector.load %arg2[%c0_42, %c0_43] : memref<64x256xf32, #tpu.memory_space<vmem>>, vector<64x256xf32>
    %cst_44 = arith.constant dense<0.000000e+00> : vector<32x256xf32>
    %70 = tpu.matmul %64, %69, %cst_44 {dimension_numbers = #tpu.dot_dimension_numbers<[1], [0], [0], [1], [0, 0, 1, 1], [], []>} : vector<32x64xf32>, vector<64x256xf32>, vector<32x256xf32> -> vector<32x256xf32>
    %71 = arith.addf %68, %70 : vector<32x256xf32>
    %72 = vector.extract_strided_slice %71 {offsets = [0, 0], sizes = [32, 192], strides = [1, 1]} : vector<32x256xf32> to vector<32x192xf32>
    %73 = arith.negf %72 : vector<32x192xf32>
    %74 = math.exp %73 : vector<32x192xf32>
    %cst_45 = arith.constant 1.000000e+00 : f32
    %75 = vector.broadcast %cst_45 : f32 to vector<32x192xf32>
    %76 = arith.addf %75, %74 : vector<32x192xf32>
    %77 = arith.divf %75, %76 : vector<32x192xf32>
    %78 = vector.extract_strided_slice %77 {offsets = [0, 0], sizes = [32, 64], strides = [1, 1]} : vector<32x192xf32> to vector<32x64xf32>
    %79 = vector.extract_strided_slice %77 {offsets = [0, 64], sizes = [32, 64], strides = [1, 1]} : vector<32x192xf32> to vector<32x64xf32>
    %80 = vector.extract_strided_slice %77 {offsets = [0, 128], sizes = [32, 64], strides = [1, 1]} : vector<32x192xf32> to vector<32x64xf32>
    %81 = vector.extract_strided_slice %71 {offsets = [0, 192], sizes = [32, 64], strides = [1, 1]} : vector<32x256xf32> to vector<32x64xf32>
    %82 = math.tanh %81 : vector<32x64xf32>
    %83 = arith.mulf %79, %65 : vector<32x64xf32>
    %84 = arith.mulf %78, %82 : vector<32x64xf32>
    %85 = arith.addf %83, %84 : vector<32x64xf32>
    %86 = math.tanh %85 : vector<32x64xf32>
    %87 = arith.mulf %80, %86 : vector<32x64xf32>
    %c0_46 = arith.constant 0 : index
    %c0_47 = arith.constant 0 : index
    %88 = vector.load %arg6[%c0_46, %c0_47] : memref<32x64xf32, #tpu.memory_space<vmem>>, vector<32x64xf32>
    tpu.vector_store %arg6[%c0_46, %c0_47], %87 {strides = array<i32>} : memref<32x64xf32, #tpu.memory_space<vmem>>, vector<32x64xf32>,
    %c0_48 = arith.constant 0 : index
    %c0_49 = arith.constant 0 : index
    %89 = vector.load %arg7[%c0_48, %c0_49] : memref<32x64xf32, #tpu.memory_space<vmem>>, vector<32x64xf32>
    tpu.vector_store %arg7[%c0_48, %c0_49], %85 {strides = array<i32>} : memref<32x64xf32, #tpu.memory_space<vmem>>, vector<32x64xf32>,
    %90 = arith.index_cast %c2_i32 : i32 to index
    %c0_50 = arith.constant 0 : index
    %c0_51 = arith.constant 0 : index
    %91 = vector.load %arg8[%90, %c0_50, %c0_51] : memref<8x32x64xf32, #tpu.memory_space<vmem>>, vector<1x32x64xf32>
    %92 = vector.shape_cast %91 : vector<1x32x64xf32> to vector<32x64xf32>
    %93 = vector.shape_cast %87 : vector<32x64xf32> to vector<1x32x64xf32>
    tpu.vector_store %arg8[%90, %c0_50, %c0_51], %93 {strides = array<i32>} : memref<8x32x64xf32, #tpu.memory_space<vmem>>, vector<1x32x64xf32>,
    %c3_i32 = arith.constant 3 : i32
    %c0_52 = arith.constant 0 : index
    %c0_53 = arith.constant 0 : index
    %94 = vector.load %arg6[%c0_52, %c0_53] : memref<32x64xf32, #tpu.memory_space<vmem>>, vector<32x64xf32>
    %c0_54 = arith.constant 0 : index
    %c0_55 = arith.constant 0 : index
    %95 = vector.load %arg7[%c0_54, %c0_55] : memref<32x64xf32, #tpu.memory_space<vmem>>, vector<32x64xf32>
    %96 = arith.index_cast %c3_i32 : i32 to index
    %c0_56 = arith.constant 0 : index
    %c0_57 = arith.constant 0 : index
    %97 = vector.load %arg1[%96, %c0_56, %c0_57] : memref<8x32x256xf32, #tpu.memory_space<vmem>>, vector<1x32x256xf32>
    %98 = vector.shape_cast %97 : vector<1x32x256xf32> to vector<32x256xf32>
    %c0_58 = arith.constant 0 : index
    %c0_59 = arith.constant 0 : index
    %99 = vector.load %arg2[%c0_58, %c0_59] : memref<64x256xf32, #tpu.memory_space<vmem>>, vector<64x256xf32>
    %cst_60 = arith.constant dense<0.000000e+00> : vector<32x256xf32>
    %100 = tpu.matmul %94, %99, %cst_60 {dimension_numbers = #tpu.dot_dimension_numbers<[1], [0], [0], [1], [0, 0, 1, 1], [], []>} : vector<32x64xf32>, vector<64x256xf32>, vector<32x256xf32> -> vector<32x256xf32>
    %101 = arith.addf %98, %100 : vector<32x256xf32>
    %102 = vector.extract_strided_slice %101 {offsets = [0, 0], sizes = [32, 192], strides = [1, 1]} : vector<32x256xf32> to vector<32x192xf32>
    %103 = arith.negf %102 : vector<32x192xf32>
    %104 = math.exp %103 : vector<32x192xf32>
    %cst_61 = arith.constant 1.000000e+00 : f32
    %105 = vector.broadcast %cst_61 : f32 to vector<32x192xf32>
    %106 = arith.addf %105, %104 : vector<32x192xf32>
    %107 = arith.divf %105, %106 : vector<32x192xf32>
    %108 = vector.extract_strided_slice %107 {offsets = [0, 0], sizes = [32, 64], strides = [1, 1]} : vector<32x192xf32> to vector<32x64xf32>
    %109 = vector.extract_strided_slice %107 {offsets = [0, 64], sizes = [32, 64], strides = [1, 1]} : vector<32x192xf32> to vector<32x64xf32>
    %110 = vector.extract_strided_slice %107 {offsets = [0, 128], sizes = [32, 64], strides = [1, 1]} : vector<32x192xf32> to vector<32x64xf32>
    %111 = vector.extract_strided_slice %101 {offsets = [0, 192], sizes = [32, 64], strides = [1, 1]} : vector<32x256xf32> to vector<32x64xf32>
    %112 = math.tanh %111 : vector<32x64xf32>
    %113 = arith.mulf %109, %95 : vector<32x64xf32>
    %114 = arith.mulf %108, %112 : vector<32x64xf32>
    %115 = arith.addf %113, %114 : vector<32x64xf32>
    %116 = math.tanh %115 : vector<32x64xf32>
    %117 = arith.mulf %110, %116 : vector<32x64xf32>
    %c0_62 = arith.constant 0 : index
    %c0_63 = arith.constant 0 : index
    %118 = vector.load %arg6[%c0_62, %c0_63] : memref<32x64xf32, #tpu.memory_space<vmem>>, vector<32x64xf32>
    tpu.vector_store %arg6[%c0_62, %c0_63], %117 {strides = array<i32>} : memref<32x64xf32, #tpu.memory_space<vmem>>, vector<32x64xf32>,
    %c0_64 = arith.constant 0 : index
    %c0_65 = arith.constant 0 : index
    %119 = vector.load %arg7[%c0_64, %c0_65] : memref<32x64xf32, #tpu.memory_space<vmem>>, vector<32x64xf32>
    tpu.vector_store %arg7[%c0_64, %c0_65], %115 {strides = array<i32>} : memref<32x64xf32, #tpu.memory_space<vmem>>, vector<32x64xf32>,
    %120 = arith.index_cast %c3_i32 : i32 to index
    %c0_66 = arith.constant 0 : index
    %c0_67 = arith.constant 0 : index
    %121 = vector.load %arg8[%120, %c0_66, %c0_67] : memref<8x32x64xf32, #tpu.memory_space<vmem>>, vector<1x32x64xf32>
    %122 = vector.shape_cast %121 : vector<1x32x64xf32> to vector<32x64xf32>
    %123 = vector.shape_cast %117 : vector<32x64xf32> to vector<1x32x64xf32>
    tpu.vector_store %arg8[%120, %c0_66, %c0_67], %123 {strides = array<i32>} : memref<8x32x64xf32, #tpu.memory_space<vmem>>, vector<1x32x64xf32>,
    %c4_i32 = arith.constant 4 : i32
    %c0_68 = arith.constant 0 : index
    %c0_69 = arith.constant 0 : index
    %124 = vector.load %arg6[%c0_68, %c0_69] : memref<32x64xf32, #tpu.memory_space<vmem>>, vector<32x64xf32>
    %c0_70 = arith.constant 0 : index
    %c0_71 = arith.constant 0 : index
    %125 = vector.load %arg7[%c0_70, %c0_71] : memref<32x64xf32, #tpu.memory_space<vmem>>, vector<32x64xf32>
    %126 = arith.index_cast %c4_i32 : i32 to index
    %c0_72 = arith.constant 0 : index
    %c0_73 = arith.constant 0 : index
    %127 = vector.load %arg1[%126, %c0_72, %c0_73] : memref<8x32x256xf32, #tpu.memory_space<vmem>>, vector<1x32x256xf32>
    %128 = vector.shape_cast %127 : vector<1x32x256xf32> to vector<32x256xf32>
    %c0_74 = arith.constant 0 : index
    %c0_75 = arith.constant 0 : index
    %129 = vector.load %arg2[%c0_74, %c0_75] : memref<64x256xf32, #tpu.memory_space<vmem>>, vector<64x256xf32>
    %cst_76 = arith.constant dense<0.000000e+00> : vector<32x256xf32>
    %130 = tpu.matmul %124, %129, %cst_76 {dimension_numbers = #tpu.dot_dimension_numbers<[1], [0], [0], [1], [0, 0, 1, 1], [], []>} : vector<32x64xf32>, vector<64x256xf32>, vector<32x256xf32> -> vector<32x256xf32>
    %131 = arith.addf %128, %130 : vector<32x256xf32>
    %132 = vector.extract_strided_slice %131 {offsets = [0, 0], sizes = [32, 192], strides = [1, 1]} : vector<32x256xf32> to vector<32x192xf32>
    %133 = arith.negf %132 : vector<32x192xf32>
    %134 = math.exp %133 : vector<32x192xf32>
    %cst_77 = arith.constant 1.000000e+00 : f32
    %135 = vector.broadcast %cst_77 : f32 to vector<32x192xf32>
    %136 = arith.addf %135, %134 : vector<32x192xf32>
    %137 = arith.divf %135, %136 : vector<32x192xf32>
    %138 = vector.extract_strided_slice %137 {offsets = [0, 0], sizes = [32, 64], strides = [1, 1]} : vector<32x192xf32> to vector<32x64xf32>
    %139 = vector.extract_strided_slice %137 {offsets = [0, 64], sizes = [32, 64], strides = [1, 1]} : vector<32x192xf32> to vector<32x64xf32>
    %140 = vector.extract_strided_slice %137 {offsets = [0, 128], sizes = [32, 64], strides = [1, 1]} : vector<32x192xf32> to vector<32x64xf32>
    %141 = vector.extract_strided_slice %131 {offsets = [0, 192], sizes = [32, 64], strides = [1, 1]} : vector<32x256xf32> to vector<32x64xf32>
    %142 = math.tanh %141 : vector<32x64xf32>
    %143 = arith.mulf %139, %125 : vector<32x64xf32>
    %144 = arith.mulf %138, %142 : vector<32x64xf32>
    %145 = arith.addf %143, %144 : vector<32x64xf32>
    %146 = math.tanh %145 : vector<32x64xf32>
    %147 = arith.mulf %140, %146 : vector<32x64xf32>
    %c0_78 = arith.constant 0 : index
    %c0_79 = arith.constant 0 : index
    %148 = vector.load %arg6[%c0_78, %c0_79] : memref<32x64xf32, #tpu.memory_space<vmem>>, vector<32x64xf32>
    tpu.vector_store %arg6[%c0_78, %c0_79], %147 {strides = array<i32>} : memref<32x64xf32, #tpu.memory_space<vmem>>, vector<32x64xf32>,
    %c0_80 = arith.constant 0 : index
    %c0_81 = arith.constant 0 : index
    %149 = vector.load %arg7[%c0_80, %c0_81] : memref<32x64xf32, #tpu.memory_space<vmem>>, vector<32x64xf32>
    tpu.vector_store %arg7[%c0_80, %c0_81], %145 {strides = array<i32>} : memref<32x64xf32, #tpu.memory_space<vmem>>, vector<32x64xf32>,
    %150 = arith.index_cast %c4_i32 : i32 to index
    %c0_82 = arith.constant 0 : index
    %c0_83 = arith.constant 0 : index
    %151 = vector.load %arg8[%150, %c0_82, %c0_83] : memref<8x32x64xf32, #tpu.memory_space<vmem>>, vector<1x32x64xf32>
    %152 = vector.shape_cast %151 : vector<1x32x64xf32> to vector<32x64xf32>
    %153 = vector.shape_cast %147 : vector<32x64xf32> to vector<1x32x64xf32>
    tpu.vector_store %arg8[%150, %c0_82, %c0_83], %153 {strides = array<i32>} : memref<8x32x64xf32, #tpu.memory_space<vmem>>, vector<1x32x64xf32>,
    %c5_i32 = arith.constant 5 : i32
    %c0_84 = arith.constant 0 : index
    %c0_85 = arith.constant 0 : index
    %154 = vector.load %arg6[%c0_84, %c0_85] : memref<32x64xf32, #tpu.memory_space<vmem>>, vector<32x64xf32>
    %c0_86 = arith.constant 0 : index
    %c0_87 = arith.constant 0 : index
    %155 = vector.load %arg7[%c0_86, %c0_87] : memref<32x64xf32, #tpu.memory_space<vmem>>, vector<32x64xf32>
    %156 = arith.index_cast %c5_i32 : i32 to index
    %c0_88 = arith.constant 0 : index
    %c0_89 = arith.constant 0 : index
    %157 = vector.load %arg1[%156, %c0_88, %c0_89] : memref<8x32x256xf32, #tpu.memory_space<vmem>>, vector<1x32x256xf32>
    %158 = vector.shape_cast %157 : vector<1x32x256xf32> to vector<32x256xf32>
    %c0_90 = arith.constant 0 : index
    %c0_91 = arith.constant 0 : index
    %159 = vector.load %arg2[%c0_90, %c0_91] : memref<64x256xf32, #tpu.memory_space<vmem>>, vector<64x256xf32>
    %cst_92 = arith.constant dense<0.000000e+00> : vector<32x256xf32>
    %160 = tpu.matmul %154, %159, %cst_92 {dimension_numbers = #tpu.dot_dimension_numbers<[1], [0], [0], [1], [0, 0, 1, 1], [], []>} : vector<32x64xf32>, vector<64x256xf32>, vector<32x256xf32> -> vector<32x256xf32>
    %161 = arith.addf %158, %160 : vector<32x256xf32>
    %162 = vector.extract_strided_slice %161 {offsets = [0, 0], sizes = [32, 192], strides = [1, 1]} : vector<32x256xf32> to vector<32x192xf32>
    %163 = arith.negf %162 : vector<32x192xf32>
    %164 = math.exp %163 : vector<32x192xf32>
    %cst_93 = arith.constant 1.000000e+00 : f32
    %165 = vector.broadcast %cst_93 : f32 to vector<32x192xf32>
    %166 = arith.addf %165, %164 : vector<32x192xf32>
    %167 = arith.divf %165, %166 : vector<32x192xf32>
    %168 = vector.extract_strided_slice %167 {offsets = [0, 0], sizes = [32, 64], strides = [1, 1]} : vector<32x192xf32> to vector<32x64xf32>
    %169 = vector.extract_strided_slice %167 {offsets = [0, 64], sizes = [32, 64], strides = [1, 1]} : vector<32x192xf32> to vector<32x64xf32>
    %170 = vector.extract_strided_slice %167 {offsets = [0, 128], sizes = [32, 64], strides = [1, 1]} : vector<32x192xf32> to vector<32x64xf32>
    %171 = vector.extract_strided_slice %161 {offsets = [0, 192], sizes = [32, 64], strides = [1, 1]} : vector<32x256xf32> to vector<32x64xf32>
    %172 = math.tanh %171 : vector<32x64xf32>
    %173 = arith.mulf %169, %155 : vector<32x64xf32>
    %174 = arith.mulf %168, %172 : vector<32x64xf32>
    %175 = arith.addf %173, %174 : vector<32x64xf32>
    %176 = math.tanh %175 : vector<32x64xf32>
    %177 = arith.mulf %170, %176 : vector<32x64xf32>
    %c0_94 = arith.constant 0 : index
    %c0_95 = arith.constant 0 : index
    %178 = vector.load %arg6[%c0_94, %c0_95] : memref<32x64xf32, #tpu.memory_space<vmem>>, vector<32x64xf32>
    tpu.vector_store %arg6[%c0_94, %c0_95], %177 {strides = array<i32>} : memref<32x64xf32, #tpu.memory_space<vmem>>, vector<32x64xf32>,
    %c0_96 = arith.constant 0 : index
    %c0_97 = arith.constant 0 : index
    %179 = vector.load %arg7[%c0_96, %c0_97] : memref<32x64xf32, #tpu.memory_space<vmem>>, vector<32x64xf32>
    tpu.vector_store %arg7[%c0_96, %c0_97], %175 {strides = array<i32>} : memref<32x64xf32, #tpu.memory_space<vmem>>, vector<32x64xf32>,
    %180 = arith.index_cast %c5_i32 : i32 to index
    %c0_98 = arith.constant 0 : index
    %c0_99 = arith.constant 0 : index
    %181 = vector.load %arg8[%180, %c0_98, %c0_99] : memref<8x32x64xf32, #tpu.memory_space<vmem>>, vector<1x32x64xf32>
    %182 = vector.shape_cast %181 : vector<1x32x64xf32> to vector<32x64xf32>
    %183 = vector.shape_cast %177 : vector<32x64xf32> to vector<1x32x64xf32>
    tpu.vector_store %arg8[%180, %c0_98, %c0_99], %183 {strides = array<i32>} : memref<8x32x64xf32, #tpu.memory_space<vmem>>, vector<1x32x64xf32>,
    %c6_i32 = arith.constant 6 : i32
    %c0_100 = arith.constant 0 : index
    %c0_101 = arith.constant 0 : index
    %184 = vector.load %arg6[%c0_100, %c0_101] : memref<32x64xf32, #tpu.memory_space<vmem>>, vector<32x64xf32>
    %c0_102 = arith.constant 0 : index
    %c0_103 = arith.constant 0 : index
    %185 = vector.load %arg7[%c0_102, %c0_103] : memref<32x64xf32, #tpu.memory_space<vmem>>, vector<32x64xf32>
    %186 = arith.index_cast %c6_i32 : i32 to index
    %c0_104 = arith.constant 0 : index
    %c0_105 = arith.constant 0 : index
    %187 = vector.load %arg1[%186, %c0_104, %c0_105] : memref<8x32x256xf32, #tpu.memory_space<vmem>>, vector<1x32x256xf32>
    %188 = vector.shape_cast %187 : vector<1x32x256xf32> to vector<32x256xf32>
    %c0_106 = arith.constant 0 : index
    %c0_107 = arith.constant 0 : index
    %189 = vector.load %arg2[%c0_106, %c0_107] : memref<64x256xf32, #tpu.memory_space<vmem>>, vector<64x256xf32>
    %cst_108 = arith.constant dense<0.000000e+00> : vector<32x256xf32>
    %190 = tpu.matmul %184, %189, %cst_108 {dimension_numbers = #tpu.dot_dimension_numbers<[1], [0], [0], [1], [0, 0, 1, 1], [], []>} : vector<32x64xf32>, vector<64x256xf32>, vector<32x256xf32> -> vector<32x256xf32>
    %191 = arith.addf %188, %190 : vector<32x256xf32>
    %192 = vector.extract_strided_slice %191 {offsets = [0, 0], sizes = [32, 192], strides = [1, 1]} : vector<32x256xf32> to vector<32x192xf32>
    %193 = arith.negf %192 : vector<32x192xf32>
    %194 = math.exp %193 : vector<32x192xf32>
    %cst_109 = arith.constant 1.000000e+00 : f32
    %195 = vector.broadcast %cst_109 : f32 to vector<32x192xf32>
    %196 = arith.addf %195, %194 : vector<32x192xf32>
    %197 = arith.divf %195, %196 : vector<32x192xf32>
    %198 = vector.extract_strided_slice %197 {offsets = [0, 0], sizes = [32, 64], strides = [1, 1]} : vector<32x192xf32> to vector<32x64xf32>
    %199 = vector.extract_strided_slice %197 {offsets = [0, 64], sizes = [32, 64], strides = [1, 1]} : vector<32x192xf32> to vector<32x64xf32>
    %200 = vector.extract_strided_slice %197 {offsets = [0, 128], sizes = [32, 64], strides = [1, 1]} : vector<32x192xf32> to vector<32x64xf32>
    %201 = vector.extract_strided_slice %191 {offsets = [0, 192], sizes = [32, 64], strides = [1, 1]} : vector<32x256xf32> to vector<32x64xf32>
    %202 = math.tanh %201 : vector<32x64xf32>
    %203 = arith.mulf %199, %185 : vector<32x64xf32>
    %204 = arith.mulf %198, %202 : vector<32x64xf32>
    %205 = arith.addf %203, %204 : vector<32x64xf32>
    %206 = math.tanh %205 : vector<32x64xf32>
    %207 = arith.mulf %200, %206 : vector<32x64xf32>
    %c0_110 = arith.constant 0 : index
    %c0_111 = arith.constant 0 : index
    %208 = vector.load %arg6[%c0_110, %c0_111] : memref<32x64xf32, #tpu.memory_space<vmem>>, vector<32x64xf32>
    tpu.vector_store %arg6[%c0_110, %c0_111], %207 {strides = array<i32>} : memref<32x64xf32, #tpu.memory_space<vmem>>, vector<32x64xf32>,
    %c0_112 = arith.constant 0 : index
    %c0_113 = arith.constant 0 : index
    %209 = vector.load %arg7[%c0_112, %c0_113] : memref<32x64xf32, #tpu.memory_space<vmem>>, vector<32x64xf32>
    tpu.vector_store %arg7[%c0_112, %c0_113], %205 {strides = array<i32>} : memref<32x64xf32, #tpu.memory_space<vmem>>, vector<32x64xf32>,
    %210 = arith.index_cast %c6_i32 : i32 to index
    %c0_114 = arith.constant 0 : index
    %c0_115 = arith.constant 0 : index
    %211 = vector.load %arg8[%210, %c0_114, %c0_115] : memref<8x32x64xf32, #tpu.memory_space<vmem>>, vector<1x32x64xf32>
    %212 = vector.shape_cast %211 : vector<1x32x64xf32> to vector<32x64xf32>
    %213 = vector.shape_cast %207 : vector<32x64xf32> to vector<1x32x64xf32>
    tpu.vector_store %arg8[%210, %c0_114, %c0_115], %213 {strides = array<i32>} : memref<8x32x64xf32, #tpu.memory_space<vmem>>, vector<1x32x64xf32>,
    %c7_i32 = arith.constant 7 : i32
    %c0_116 = arith.constant 0 : index
    %c0_117 = arith.constant 0 : index
    %214 = vector.load %arg6[%c0_116, %c0_117] : memref<32x64xf32, #tpu.memory_space<vmem>>, vector<32x64xf32>
    %c0_118 = arith.constant 0 : index
    %c0_119 = arith.constant 0 : index
    %215 = vector.load %arg7[%c0_118, %c0_119] : memref<32x64xf32, #tpu.memory_space<vmem>>, vector<32x64xf32>
    %216 = arith.index_cast %c7_i32 : i32 to index
    %c0_120 = arith.constant 0 : index
    %c0_121 = arith.constant 0 : index
    %217 = vector.load %arg1[%216, %c0_120, %c0_121] : memref<8x32x256xf32, #tpu.memory_space<vmem>>, vector<1x32x256xf32>
    %218 = vector.shape_cast %217 : vector<1x32x256xf32> to vector<32x256xf32>
    %c0_122 = arith.constant 0 : index
    %c0_123 = arith.constant 0 : index
    %219 = vector.load %arg2[%c0_122, %c0_123] : memref<64x256xf32, #tpu.memory_space<vmem>>, vector<64x256xf32>
    %cst_124 = arith.constant dense<0.000000e+00> : vector<32x256xf32>
    %220 = tpu.matmul %214, %219, %cst_124 {dimension_numbers = #tpu.dot_dimension_numbers<[1], [0], [0], [1], [0, 0, 1, 1], [], []>} : vector<32x64xf32>, vector<64x256xf32>, vector<32x256xf32> -> vector<32x256xf32>
    %221 = arith.addf %218, %220 : vector<32x256xf32>
    %222 = vector.extract_strided_slice %221 {offsets = [0, 0], sizes = [32, 192], strides = [1, 1]} : vector<32x256xf32> to vector<32x192xf32>
    %223 = arith.negf %222 : vector<32x192xf32>
    %224 = math.exp %223 : vector<32x192xf32>
    %cst_125 = arith.constant 1.000000e+00 : f32
    %225 = vector.broadcast %cst_125 : f32 to vector<32x192xf32>
    %226 = arith.addf %225, %224 : vector<32x192xf32>
    %227 = arith.divf %225, %226 : vector<32x192xf32>
    %228 = vector.extract_strided_slice %227 {offsets = [0, 0], sizes = [32, 64], strides = [1, 1]} : vector<32x192xf32> to vector<32x64xf32>
    %229 = vector.extract_strided_slice %227 {offsets = [0, 64], sizes = [32, 64], strides = [1, 1]} : vector<32x192xf32> to vector<32x64xf32>
    %230 = vector.extract_strided_slice %227 {offsets = [0, 128], sizes = [32, 64], strides = [1, 1]} : vector<32x192xf32> to vector<32x64xf32>
    %231 = vector.extract_strided_slice %221 {offsets = [0, 192], sizes = [32, 64], strides = [1, 1]} : vector<32x256xf32> to vector<32x64xf32>
    %232 = math.tanh %231 : vector<32x64xf32>
    %233 = arith.mulf %229, %215 : vector<32x64xf32>
    %234 = arith.mulf %228, %232 : vector<32x64xf32>
    %235 = arith.addf %233, %234 : vector<32x64xf32>
    %236 = math.tanh %235 : vector<32x64xf32>
    %237 = arith.mulf %230, %236 : vector<32x64xf32>
    %c0_126 = arith.constant 0 : index
    %c0_127 = arith.constant 0 : index
    %238 = vector.load %arg6[%c0_126, %c0_127] : memref<32x64xf32, #tpu.memory_space<vmem>>, vector<32x64xf32>
    tpu.vector_store %arg6[%c0_126, %c0_127], %237 {strides = array<i32>} : memref<32x64xf32, #tpu.memory_space<vmem>>, vector<32x64xf32>,
    %c0_128 = arith.constant 0 : index
    %c0_129 = arith.constant 0 : index
    %239 = vector.load %arg7[%c0_128, %c0_129] : memref<32x64xf32, #tpu.memory_space<vmem>>, vector<32x64xf32>
    tpu.vector_store %arg7[%c0_128, %c0_129], %235 {strides = array<i32>} : memref<32x64xf32, #tpu.memory_space<vmem>>, vector<32x64xf32>,
    %240 = arith.index_cast %c7_i32 : i32 to index
    %c0_130 = arith.constant 0 : index
    %c0_131 = arith.constant 0 : index
    %241 = vector.load %arg8[%240, %c0_130, %c0_131] : memref<8x32x64xf32, #tpu.memory_space<vmem>>, vector<1x32x64xf32>
    %242 = vector.shape_cast %241 : vector<1x32x64xf32> to vector<32x64xf32>
    %243 = vector.shape_cast %237 : vector<32x64xf32> to vector<1x32x64xf32>
    tpu.vector_store %arg8[%240, %c0_130, %c0_131], %243 {strides = array<i32>} : memref<8x32x64xf32, #tpu.memory_space<vmem>>, vector<1x32x64xf32>,
    %c8_i32 = arith.constant 8 : i32
    %c0_132 = arith.constant 0 : index
    %c0_133 = arith.constant 0 : index
    %c0_134 = arith.constant 0 : index
    %244 = vector.load %arg8[%c0_132, %c0_133, %c0_134] : memref<8x32x64xf32, #tpu.memory_space<vmem>>, vector<8x32x64xf32>
    %c0_135 = arith.constant 0 : index
    %c0_136 = arith.constant 0 : index
    %245 = vector.load %arg6[%c0_135, %c0_136] : memref<32x64xf32, #tpu.memory_space<vmem>>, vector<32x64xf32>
    %246 = vector.shape_cast %245 : vector<32x64xf32> to vector<1x32x64xf32>
    %247 = vector.broadcast %246 : vector<1x32x64xf32> to vector<8x32x64xf32>
    %248 = arith.addf %244, %247 : vector<8x32x64xf32>
    %249 = vector.shape_cast %248 : vector<8x32x64xf32> to vector<256x64xf32>
    %c0_137 = arith.constant 0 : index
    %c0_138 = arith.constant 0 : index
    %250 = vector.load %arg3[%c0_137, %c0_138] : memref<2x64xf32, #tpu.memory_space<vmem>>, vector<2x64xf32>
    %251 = tpu.transpose %249, [1, 0] : vector<256x64xf32> -> vector<64x256xf32>
    %cst_139 = arith.constant dense<0.000000e+00> : vector<2x256xf32>
    %252 = tpu.matmul %250, %251, %cst_139 {dimension_numbers = #tpu.dot_dimension_numbers<[1], [0], [0], [1], [0, 0, 1, 1], [], []>} : vector<2x64xf32>, vector<64x256xf32>, vector<2x256xf32> -> vector<2x256xf32>
    %c0_140 = arith.constant 0 : index
    %c0_141 = arith.constant 0 : index
    %253 = vector.load %arg4[%c0_140, %c0_141] : memref<2x256xf32, #tpu.memory_space<vmem>>, vector<2x256xf32>
    %254 = arith.addf %252, %253 : vector<2x256xf32>
    %c0_142 = arith.constant 0 : index
    %c0_143 = arith.constant 0 : index
    %255 = vector.load %arg5[%c0_142, %c0_143] : memref<2x256xf32, #tpu.memory_space<vmem>>, vector<2x256xf32>
    tpu.vector_store %arg5[%c0_142, %c0_143], %254 {strides = array<i32>} : memref<2x256xf32, #tpu.memory_space<vmem>>, vector<2x256xf32>,
    return
  }
  func.func @transform_0(%arg0: i32) -> (i32, i32, i32) {
    %c0_i32 = arith.constant 0 : i32
    %c0_i32_0 = arith.constant 0 : i32
    %c0_i32_1 = arith.constant 0 : i32
    %c0_i32_2 = arith.constant 0 : i32
    return %c0_i32, %c0_i32_0, %c0_i32_1 : i32, i32, i32
  }
  func.func @transform_1(%arg0: i32) -> (i32, i32) {
    %c0_i32 = arith.constant 0 : i32
    %c0_i32_0 = arith.constant 0 : i32
    %c0_i32_1 = arith.constant 0 : i32
    return %c0_i32, %c0_i32_0 : i32, i32
  }
  func.func @transform_2(%arg0: i32) -> (i32, i32) {
    %c0_i32 = arith.constant 0 : i32
    %c0_i32_0 = arith.constant 0 : i32
    %c0_i32_1 = arith.constant 0 : i32
    return %c0_i32, %c0_i32_0 : i32, i32
  }
  func.func @transform_3(%arg0: i32) -> (i32, i32) {
    %c0_i32 = arith.constant 0 : i32
    %c0_i32_0 = arith.constant 0 : i32
    %c0_i32_1 = arith.constant 0 : i32
    return %c0_i32, %c0_i32_0 : i32, i32
  }
  func.func @transform_4(%arg0: i32) -> (i32, i32) {
    %c0_i32 = arith.constant 0 : i32
    %c0_i32_0 = arith.constant 0 : i32
    %c0_i32_1 = arith.constant 0 : i32
    return %c0_i32, %c0_i32_0 : i32, i32
  }
}

</mosaic_0001>

<llo_original>
// kernel: dmvstnet_forward.2
$region0: #{dmvstnet_forward.2}
  #allocation0 [shape = 'u32[]', space=smem, size = 0x4, offset = 0x4, fixed_abs, tag = 'smem constant byte address 0x4 - core index']
  #allocation1 [shape = 'u32[72,128]{1,0:T(1,128)}', space=vmem, size = 0x9000, scoped, tag = 'internal scratch']
  %s0 = inlined_call_operand.vmem [shape: f32[256,2], index: 0, kind: input, shape index: {}]
  %s1 = inlined_call_operand.vmem [shape: bf16[256,256], index: 1, kind: input, shape index: {}]
  %s2 = inlined_call_operand.vmem [shape: f32[2,32], index: 2, kind: input, shape index: {}]
  %s3 = inlined_call_operand.vmem [shape: f32[1,32], index: 3, kind: input, shape index: {}]
  %s4 = inlined_call_operand.vmem [shape: f32[2,32], index: 4, kind: input, shape index: {}]
  %s5 = inlined_call_operand.vmem [shape: f32[1,32], index: 5, kind: input, shape index: {}]
  %s6 = inlined_call_operand.vmem [shape: bf16[32,32], index: 6, kind: input, shape index: {}]
  %s7 = inlined_call_operand.vmem [shape: f32[1,32], index: 7, kind: input, shape index: {}]
  %s8 = inlined_call_operand.vmem [shape: bf16[32,32], index: 8, kind: input, shape index: {}]
  %s9 = inlined_call_operand.vmem [shape: f32[1,32], index: 9, kind: input, shape index: {}]
  %s10 = inlined_call_operand.vmem [shape: bf16[32,256], index: 10, kind: input, shape index: {}]
  %s11 = inlined_call_operand.vmem [shape: bf16[32,256], index: 11, kind: input, shape index: {}]
  %s12 = inlined_call_operand.vmem [shape: f32[1,256], index: 12, kind: input, shape index: {}]
  %s13 = inlined_call_operand.vmem [shape: f32[256,256], index: 13, kind: output, shape index: {}]
  %s14 = sld [smem:[#allocation0]]
  $region62: #{dmvstnet_forward.2} parent=0
    _
  %s16 = ssub.s32 1, %s14
  %s17 = scalar_select 0, %s16, %s14
  // Predicated region
  $region2: #{dmvstnet_forward.2} parent=0 // pred_check
    _
  $region3: #{dmvstnet_forward.2} parent=0 // pred_check_branch
    %19 = sbr.rel (0) target = $region5
  $region4: #{dmvstnet_forward.2} parent=0 // pred_region
    _
  $region5: #{dmvstnet_forward.2} parent=0 // pred_fallthru
    _
  // Predicated region
  $region6: #{dmvstnet_forward.2} parent=0 // pred_check
    _
  $region7: #{dmvstnet_forward.2} parent=0 // pred_check_branch
    %21 = sbr.rel (0) target = $region9
  $region8: #{dmvstnet_forward.2} parent=0 // pred_region
    _
  $region9: #{dmvstnet_forward.2} parent=0 // pred_fallthru
    _
  // Predicated region
  $region10: #{dmvstnet_forward.2} parent=0 // pred_check
    _
  $region11: #{dmvstnet_forward.2} parent=0 // pred_check_branch
    %23 = sbr.rel (0) target = $region13
  $region12: #{dmvstnet_forward.2} parent=0 // pred_region
    _
  $region13: #{dmvstnet_forward.2} parent=0 // pred_fallthru
    _
  // Predicated region
  $region14: #{dmvstnet_forward.2} parent=0 // pred_check
    _
  $region15: #{dmvstnet_forward.2} parent=0 // pred_check_branch
    %25 = sbr.rel (0) target = $region17
  $region16: #{dmvstnet_forward.2} parent=0 // pred_region
    _
  $region17: #{dmvstnet_forward.2} parent=0 // pred_fallthru
    _
  // Predicated region
  $region18: #{dmvstnet_forward.2} parent=0 // pred_check
    _
  $region19: #{dmvstnet_forward.2} parent=0 // pred_check_branch
    %27 = sbr.rel (0) target = $region21
  $region20: #{dmvstnet_forward.2} parent=0 // pred_region
    _
  $region21: #{dmvstnet_forward.2} parent=0 // pred_fallthru
    _
  // Predicated region
  $region22: #{dmvstnet_forward.2} parent=0 // pred_check
    _
  $region23: #{dmvstnet_forward.2} parent=0 // pred_check_branch
    %29 = sbr.rel (0) target = $region25
  $region24: #{dmvstnet_forward.2} parent=0 // pred_region
    _
  $region25: #{dmvstnet_forward.2} parent=0 // pred_fallthru
    _
  // Predicated region
  $region26: #{dmvstnet_forward.2} parent=0 // pred_check
    _
  $region27: #{dmvstnet_forward.2} parent=0 // pred_check_branch
    %31 = sbr.rel (0) target = $region29
  $region28: #{dmvstnet_forward.2} parent=0 // pred_region
    _
  $region29: #{dmvstnet_forward.2} parent=0 // pred_fallthru
    _
  // Predicated region
  $region30: #{dmvstnet_forward.2} parent=0 // pred_check
    _
  $region31: #{dmvstnet_forward.2} parent=0 // pred_check_branch
    %33 = sbr.rel (0) target = $region33
  $region32: #{dmvstnet_forward.2} parent=0 // pred_region
    _
  $region33: #{dmvstnet_forward.2} parent=0 // pred_fallthru
    _
  // Predicated region
  $region34: #{dmvstnet_forward.2} parent=0 // pred_check
    _
  $region35: #{dmvstnet_forward.2} parent=0 // pred_check_branch
    %35 = sbr.rel (0) target = $region37
  $region36: #{dmvstnet_forward.2} parent=0 // pred_region
    _
  $region37: #{dmvstnet_forward.2} parent=0 // pred_fallthru
    _
  // Predicated region
  $region38: #{dmvstnet_forward.2} parent=0 // pred_check
    _
  $region39: #{dmvstnet_forward.2} parent=0 // pred_check_branch
    %37 = sbr.rel (0) target = $region41
  $region40: #{dmvstnet_forward.2} parent=0 // pred_region
    _
  $region41: #{dmvstnet_forward.2} parent=0 // pred_fallthru
    _
  // Predicated region
  $region42: #{dmvstnet_forward.2} parent=0 // pred_check
    _
  $region43: #{dmvstnet_forward.2} parent=0 // pred_check_branch
    %39 = sbr.rel (0) target = $region45
  $region44: #{dmvstnet_forward.2} parent=0 // pred_region
    _
  $region45: #{dmvstnet_forward.2} parent=0 // pred_fallthru
    _
  // Predicated region
  $region46: #{dmvstnet_forward.2} parent=0 // pred_check
    _
  $region47: #{dmvstnet_forward.2} parent=0 // pred_check_branch
    %41 = sbr.rel (0) target = $region49
  $region48: #{dmvstnet_forward.2} parent=0 // pred_region
    _
  $region49: #{dmvstnet_forward.2} parent=0 // pred_fallthru
    _
  // Predicated region
  $region50: #{dmvstnet_forward.2} parent=0 // pred_check
    _
  $region51: #{dmvstnet_forward.2} parent=0 // pred_check_branch
    %43 = sbr.rel (0) target = $region53
  $region52: #{dmvstnet_forward.2} parent=0 // pred_region
    _
  $region53: #{dmvstnet_forward.2} parent=0 // pred_fallthru
    _
  %v45 = vld [vmem:[%s0] sm:$0xff]
  %v46 = vld [vmem:[%s0 + $0x8] sm:$0xff]
  %v47 = vld [vmem:[%s0 + $0x10] sm:$0xff]
  %v48 = vld [vmem:[%s0 + $0x18] sm:$0xff]
  %v49 = vld [vmem:[%s0 + $0x20] sm:$0xff]
  %v50 = vld [vmem:[%s0 + $0x28] sm:$0xff]
  %v51 = vld [vmem:[%s0 + $0x30] sm:$0xff]
  %v52 = vld [vmem:[%s0 + $0x38] sm:$0xff]
  %v53 = vld [vmem:[%s0 + $0x40] sm:$0xff]
  %v54 = vld [vmem:[%s0 + $0x48] sm:$0xff]
  %v55 = vld [vmem:[%s0 + $0x50] sm:$0xff]
  %v56 = vld [vmem:[%s0 + $0x58] sm:$0xff]
  %v57 = vld [vmem:[%s0 + $0x60] sm:$0xff]
  %v58 = vld [vmem:[%s0 + $0x68] sm:$0xff]
  %v59 = vld [vmem:[%s0 + $0x70] sm:$0xff]
  %v60 = vld [vmem:[%s0 + $0x78] sm:$0xff]
  %v61 = vld [vmem:[%s0 + $0x80] sm:$0xff]
  %v62 = vld [vmem:[%s0 + $0x88] sm:$0xff]
  %v63 = vld [vmem:[%s0 + $0x90] sm:$0xff]
  %v64 = vld [vmem:[%s0 + $0x98] sm:$0xff]
  %v65 = vld [vmem:[%s0 + $0xa0] sm:$0xff]
  %v66 = vld [vmem:[%s0 + $0xa8] sm:$0xff]
  %v67 = vld [vmem:[%s0 + $0xb0] sm:$0xff]
  %v68 = vld [vmem:[%s0 + $0xb8] sm:$0xff]
  %v69 = vld [vmem:[%s0 + $0xc0] sm:$0xff]
  %v70 = vld [vmem:[%s0 + $0xc8] sm:$0xff]
  %v71 = vld [vmem:[%s0 + $0xd0] sm:$0xff]
  %v72 = vld [vmem:[%s0 + $0xd8] sm:$0xff]
  %v73 = vld [vmem:[%s0 + $0xe0] sm:$0xff]
  %v74 = vld [vmem:[%s0 + $0xe8] sm:$0xff]
  %v75 = vld [vmem:[%s0 + $0xf0] sm:$0xff]
  %v76 = vld [vmem:[%s0 + $0xf8] sm:$0xff]
  %v77 = vld [vmem:[%s2] sm:$0x1]
  %79 = vset.pattern.permute.xlu0 0
  %80 = vperm.xlu0 %79, %v45
  %v81 = vpop.permute.xlu0 %80
  %84 = vset.pattern.permute.xlu0 0
  %85 = vperm.xlu0 %84, %v46
  %v86 = vpop.permute.xlu0 %85
  %89 = vset.pattern.permute.xlu0 0
  %90 = vperm.xlu0 %89, %v47
  %v91 = vpop.permute.xlu0 %90
  %94 = vset.pattern.permute.xlu0 0
  %95 = vperm.xlu0 %94, %v48
  %v96 = vpop.permute.xlu0 %95
  %99 = vset.pattern.permute.xlu0 0
  %100 = vperm.xlu0 %99, %v49
  %v101 = vpop.permute.xlu0 %100
  %104 = vset.pattern.permute.xlu0 0
  %105 = vperm.xlu0 %104, %v50
  %v106 = vpop.permute.xlu0 %105
  %109 = vset.pattern.permute.xlu0 0
  %110 = vperm.xlu0 %109, %v51
  %v111 = vpop.permute.xlu0 %110
  %114 = vset.pattern.permute.xlu0 0
  %115 = vperm.xlu0 %114, %v52
  %v116 = vpop.permute.xlu0 %115
  %119 = vset.pattern.permute.xlu0 0
  %120 = vperm.xlu0 %119, %v53
  %v121 = vpop.permute.xlu0 %120
  %124 = vset.pattern.permute.xlu0 0
  %125 = vperm.xlu0 %124, %v54
  %v126 = vpop.permute.xlu0 %125
  %129 = vset.pattern.permute.xlu0 0
  %130 = vperm.xlu0 %129, %v55
  %v131 = vpop.permute.xlu0 %130
  %134 = vset.pattern.permute.xlu0 0
  %135 = vperm.xlu0 %134, %v56
  %v136 = vpop.permute.xlu0 %135
  %139 = vset.pattern.permute.xlu0 0
  %140 = vperm.xlu0 %139, %v57
  %v141 = vpop.permute.xlu0 %140
  %144 = vset.pattern.permute.xlu0 0
  %145 = vperm.xlu0 %144, %v58
  %v146 = vpop.permute.xlu0 %145
  %149 = vset.pattern.permute.xlu0 0
  %150 = vperm.xlu0 %149, %v59
  %v151 = vpop.permute.xlu0 %150
  %154 = vset.pattern.permute.xlu0 0
  %155 = vperm.xlu0 %154, %v60
  %v156 = vpop.permute.xlu0 %155
  %159 = vset.pattern.permute.xlu0 0
  %160 = vperm.xlu0 %159, %v61
  %v161 = vpop.permute.xlu0 %160
  %164 = vset.pattern.permute.xlu0 0
  %165 = vperm.xlu0 %164, %v62
  %v166 = vpop.permute.xlu0 %165
  %169 = vset.pattern.permute.xlu0 0
  %170 = vperm.xlu0 %169, %v63
  %v171 = vpop.permute.xlu0 %170
  %174 = vset.pattern.permute.xlu0 0
  %175 = vperm.xlu0 %174, %v64
  %v176 = vpop.permute.xlu0 %175
  %179 = vset.pattern.permute.xlu0 0
  %180 = vperm.xlu0 %179, %v65
  %v181 = vpop.permute.xlu0 %180
  %184 = vset.pattern.permute.xlu0 0
  %185 = vperm.xlu0 %184, %v66
  %v186 = vpop.permute.xlu0 %185
  %189 = vset.pattern.permute.xlu0 0
  %190 = vperm.xlu0 %189, %v67
  %v191 = vpop.permute.xlu0 %190
  %194 = vset.pattern.permute.xlu0 0
  %195 = vperm.xlu0 %194, %v68
  %v196 = vpop.permute.xlu0 %195
  %199 = vset.pattern.permute.xlu0 0
  %200 = vperm.xlu0 %199, %v69
  %v201 = vpop.permute.xlu0 %200
  %204 = vset.pattern.permute.xlu0 0
  %205 = vperm.xlu0 %204, %v70
  %v206 = vpop.permute.xlu0 %205
  %209 = vset.pattern.permute.xlu0 0
  %210 = vperm.xlu0 %209, %v71
  %v211 = vpop.permute.xlu0 %210
  %214 = vset.pattern.permute.xlu0 0
  %215 = vperm.xlu0 %214, %v72
  %v216 = vpop.permute.xlu0 %215
  %219 = vset.pattern.permute.xlu0 0
  %220 = vperm.xlu0 %219, %v73
  %v221 = vpop.permute.xlu0 %220
  %224 = vset.pattern.permute.xlu0 0
  %225 = vperm.xlu0 %224, %v74
  %v226 = vpop.permute.xlu0 %225
  %229 = vset.pattern.permute.xlu0 0
  %230 = vperm.xlu0 %229, %v75
  %v231 = vpop.permute.xlu0 %230
  %234 = vset.pattern.permute.xlu0 0
  %235 = vperm.xlu0 %234, %v76
  %v236 = vpop.permute.xlu0 %235
  %v238 = vperm.slane %v77, 0
  %v239 = vmul.f32 %v81, %v238
  %v240 = vmul.f32 %v86, %v238
  %v241 = vmul.f32 %v91, %v238
  %v242 = vmul.f32 %v96, %v238
  %v243 = vmul.f32 %v101, %v238
  %v244 = vmul.f32 %v106, %v238
  %v245 = vmul.f32 %v111, %v238
  %v246 = vmul.f32 %v116, %v238
  %v247 = vmul.f32 %v121, %v238
  %v248 = vmul.f32 %v126, %v238
  %v249 = vmul.f32 %v131, %v238
  %v250 = vmul.f32 %v136, %v238
  %v251 = vmul.f32 %v141, %v238
  %v252 = vmul.f32 %v146, %v238
  %v253 = vmul.f32 %v151, %v238
  %v254 = vmul.f32 %v156, %v238
  %v255 = vmul.f32 %v161, %v238
  %v256 = vmul.f32 %v166, %v238
  %v257 = vmul.f32 %v171, %v238
  %v258 = vmul.f32 %v176, %v238
  %v259 = vmul.f32 %v181, %v238
  %v260 = vmul.f32 %v186, %v238
  %v261 = vmul.f32 %v191, %v238
  %v262 = vmul.f32 %v196, %v238
  %v263 = vmul.f32 %v201, %v238
  %v264 = vmul.f32 %v206, %v238
  %v265 = vmul.f32 %v211, %v238
  %v266 = vmul.f32 %v216, %v238
  %v267 = vmul.f32 %v221, %v238
  %v268 = vmul.f32 %v226, %v238
  %v269 = vmul.f32 %v231, %v238
  %v270 = vmul.f32 %v236, %v238
  %v271 = vld [vmem:[%s3] sm:$0x1]
  %v273 = vperm.slane %v271, 0
  %v275 = vadd.f32 %v239, %v273
  %v276 = vadd.f32 %v240, %v273
  %v277 = vadd.f32 %v241, %v273
  %v278 = vadd.f32 %v242, %v273
  %v279 = vadd.f32 %v243, %v273
  %v280 = vadd.f32 %v244, %v273
  %v281 = vadd.f32 %v245, %v273
  %v282 = vadd.f32 %v246, %v273
  %v283 = vadd.f32 %v247, %v273
  %v284 = vadd.f32 %v248, %v273
  %v285 = vadd.f32 %v249, %v273
  %v286 = vadd.f32 %v250, %v273
  %v287 = vadd.f32 %v251, %v273
  %v288 = vadd.f32 %v252, %v273
  %v289 = vadd.f32 %v253, %v273
  %v290 = vadd.f32 %v254, %v273
  %v291 = vadd.f32 %v255, %v273
  %v292 = vadd.f32 %v256, %v273
  %v293 = vadd.f32 %v257, %v273
  %v294 = vadd.f32 %v258, %v273
  %v295 = vadd.f32 %v259, %v273
  %v296 = vadd.f32 %v260, %v273
  %v297 = vadd.f32 %v261, %v273
  %v298 = vadd.f32 %v262, %v273
  %v299 = vadd.f32 %v263, %v273
  %v300 = vadd.f32 %v264, %v273
  %v301 = vadd.f32 %v265, %v273
  %v302 = vadd.f32 %v266, %v273
  %v303 = vadd.f32 %v267, %v273
  %v304 = vadd.f32 %v268, %v273
  %v305 = vadd.f32 %v269, %v273
  %v306 = vadd.f32 %v270, %v273
  %v307 = vld [vmem:[%s4] sm:$0x1]
  %v308 = vperm.slane %v307, 0
  %v309 = vmul.f32 %v81, %v308
  %v310 = vmul.f32 %v86, %v308
  %v311 = vmul.f32 %v91, %v308
  %v312 = vmul.f32 %v96, %v308
  %v313 = vmul.f32 %v101, %v308
  %v314 = vmul.f32 %v106, %v308
  %v315 = vmul.f32 %v111, %v308
  %v316 = vmul.f32 %v116, %v308
  %v317 = vmul.f32 %v121, %v308
  %v318 = vmul.f32 %v126, %v308
  %v319 = vmul.f32 %v131, %v308
  %v320 = vmul.f32 %v136, %v308
  %v321 = vmul.f32 %v141, %v308
  %v322 = vmul.f32 %v146, %v308
  %v323 = vmul.f32 %v151, %v308
  %v324 = vmul.f32 %v156, %v308
  %v325 = vmul.f32 %v161, %v308
  %v326 = vmul.f32 %v166, %v308
  %v327 = vmul.f32 %v171, %v308
  %v328 = vmul.f32 %v176, %v308
  %v329 = vmul.f32 %v181, %v308
  %v330 = vmul.f32 %v186, %v308
  %v331 = vmul.f32 %v191, %v308
  %v332 = vmul.f32 %v196, %v308
  %v333 = vmul.f32 %v201, %v308
  %v334 = vmul.f32 %v206, %v308
  %v335 = vmul.f32 %v211, %v308
  %v336 = vmul.f32 %v216, %v308
  %v337 = vmul.f32 %v221, %v308
  %v338 = vmul.f32 %v226, %v308
  %v339 = vmul.f32 %v231, %v308
  %v340 = vmul.f32 %v236, %v308
  %v341 = vld [vmem:[%s5] sm:$0x1]
  %v343 = vperm.slane %v341, 0
  %v345 = vadd.f32 %v309, %v343
  %v346 = vadd.f32 %v310, %v343
  %v347 = vadd.f32 %v311, %v343
  %v348 = vadd.f32 %v312, %v343
  %v349 = vadd.f32 %v313, %v343
  %v350 = vadd.f32 %v314, %v343
  %v351 = vadd.f32 %v315, %v343
  %v352 = vadd.f32 %v316, %v343
  %v353 = vadd.f32 %v317, %v343
  %v354 = vadd.f32 %v318, %v343
  %v355 = vadd.f32 %v319, %v343
  %v356 = vadd.f32 %v320, %v343
  %v357 = vadd.f32 %v321, %v343
  %v358 = vadd.f32 %v322, %v343
  %v359 = vadd.f32 %v323, %v343
  %v360 = vadd.f32 %v324, %v343
  %v361 = vadd.f32 %v325, %v343
  %v362 = vadd.f32 %v326, %v343
  %v363 = vadd.f32 %v327, %v343
  %v364 = vadd.f32 %v328, %v343
  %v365 = vadd.f32 %v329, %v343
  %v366 = vadd.f32 %v330, %v343
  %v367 = vadd.f32 %v331, %v343
  %v368 = vadd.f32 %v332, %v343
  %v369 = vadd.f32 %v333, %v343
  %v370 = vadd.f32 %v334, %v343
  %v371 = vadd.f32 %v335, %v343
  %v372 = vadd.f32 %v336, %v343
  %v373 = vadd.f32 %v337, %v343
  %v374 = vadd.f32 %v338, %v343
  %v375 = vadd.f32 %v339, %v343
  %v376 = vadd.f32 %v340, %v343
  %v377 = vld [vmem:[%s2 + $0x1] sm:$0x1]
  %378 = vset.pattern.permute.xlu0 1
  %379 = vperm.xlu0 %378, %v45
  %v380 = vpop.permute.xlu0 %379
  %382 = vset.pattern.permute.xlu0 1
  %383 = vperm.xlu0 %382, %v46
  %v384 = vpop.permute.xlu0 %383
  %386 = vset.pattern.permute.xlu0 1
  %387 = vperm.xlu0 %386, %v47
  %v388 = vpop.permute.xlu0 %387
  %390 = vset.pattern.permute.xlu0 1
  %391 = vperm.xlu0 %390, %v48
  %v392 = vpop.permute.xlu0 %391
  %394 = vset.pattern.permute.xlu0 1
  %395 = vperm.xlu0 %394, %v49
  %v396 = vpop.permute.xlu0 %395
  %398 = vset.pattern.permute.xlu0 1
  %399 = vperm.xlu0 %398, %v50
  %v400 = vpop.permute.xlu0 %399
  %402 = vset.pattern.permute.xlu0 1
  %403 = vperm.xlu0 %402, %v51
  %v404 = vpop.permute.xlu0 %403
  %406 = vset.pattern.permute.xlu0 1
  %407 = vperm.xlu0 %406, %v52
  %v408 = vpop.permute.xlu0 %407
  %410 = vset.pattern.permute.xlu0 1
  %411 = vperm.xlu0 %410, %v53
  %v412 = vpop.permute.xlu0 %411
  %414 = vset.pattern.permute.xlu0 1
  %415 = vperm.xlu0 %414, %v54
  %v416 = vpop.permute.xlu0 %415
  %418 = vset.pattern.permute.xlu0 1
  %419 = vperm.xlu0 %418, %v55
  %v420 = vpop.permute.xlu0 %419
  %422 = vset.pattern.permute.xlu0 1
  %423 = vperm.xlu0 %422, %v56
  %v424 = vpop.permute.xlu0 %423
  %426 = vset.pattern.permute.xlu0 1
  %427 = vperm.xlu0 %426, %v57
  %v428 = vpop.permute.xlu0 %427
  %430 = vset.pattern.permute.xlu0 1
  %431 = vperm.xlu0 %430, %v58
  %v432 = vpop.permute.xlu0 %431
  %434 = vset.pattern.permute.xlu0 1
  %435 = vperm.xlu0 %434, %v59
  %v436 = vpop.permute.xlu0 %435
  %438 = vset.pattern.permute.xlu0 1
  %439 = vperm.xlu0 %438, %v60
  %v440 = vpop.permute.xlu0 %439
  %442 = vset.pattern.permute.xlu0 1
  %443 = vperm.xlu0 %442, %v61
  %v444 = vpop.permute.xlu0 %443
  %446 = vset.pattern.permute.xlu0 1
  %447 = vperm.xlu0 %446, %v62
  %v448 = vpop.permute.xlu0 %447
  %450 = vset.pattern.permute.xlu0 1
  %451 = vperm.xlu0 %450, %v63
  %v452 = vpop.permute.xlu0 %451
  %454 = vset.pattern.permute.xlu0 1
  %455 = vperm.xlu0 %454, %v64
  %v456 = vpop.permute.xlu0 %455
  %458 = vset.pattern.permute.xlu0 1
  %459 = vperm.xlu0 %458, %v65
  %v460 = vpop.permute.xlu0 %459
  %462 = vset.pattern.permute.xlu0 1
  %463 = vperm.xlu0 %462, %v66
  %v464 = vpop.permute.xlu0 %463
  %466 = vset.pattern.permute.xlu0 1
  %467 = vperm.xlu0 %466, %v67
  %v468 = vpop.permute.xlu0 %467
  %470 = vset.pattern.permute.xlu0 1
  %471 = vperm.xlu0 %470, %v68
  %v472 = vpop.permute.xlu0 %471
  %474 = vset.pattern.permute.xlu0 1
  %475 = vperm.xlu0 %474, %v69
  %v476 = vpop.permute.xlu0 %475
  %478 = vset.pattern.permute.xlu0 1
  %479 = vperm.xlu0 %478, %v70
  %v480 = vpop.permute.xlu0 %479
  %482 = vset.pattern.permute.xlu0 1
  %483 = vperm.xlu0 %482, %v71
  %v484 = vpop.permute.xlu0 %483
  %486 = vset.pattern.permute.xlu0 1
  %487 = vperm.xlu0 %486, %v72
  %v488 = vpop.permute.xlu0 %487
  %490 = vset.pattern.permute.xlu0 1
  %491 = vperm.xlu0 %490, %v73
  %v492 = vpop.permute.xlu0 %491
  %494 = vset.pattern.permute.xlu0 1
  %495 = vperm.xlu0 %494, %v74
  %v496 = vpop.permute.xlu0 %495
  %498 = vset.pattern.permute.xlu0 1
  %499 = vperm.xlu0 %498, %v75
  %v500 = vpop.permute.xlu0 %499
  %502 = vset.pattern.permute.xlu0 1
  %503 = vperm.xlu0 %502, %v76
  %v504 = vpop.permute.xlu0 %503
  %v506 = vperm.slane %v377, 0
  %v507 = vmul.f32 %v380, %v506
  %v508 = vmul.f32 %v384, %v506
  %v509 = vmul.f32 %v388, %v506
  %v510 = vmul.f32 %v392, %v506
  %v511 = vmul.f32 %v396, %v506
  %v512 = vmul.f32 %v400, %v506
  %v513 = vmul.f32 %v404, %v506
  %v514 = vmul.f32 %v408, %v506
  %v515 = vmul.f32 %v412, %v506
  %v516 = vmul.f32 %v416, %v506
  %v517 = vmul.f32 %v420, %v506
  %v518 = vmul.f32 %v424, %v506
  %v519 = vmul.f32 %v428, %v506
  %v520 = vmul.f32 %v432, %v506
  %v521 = vmul.f32 %v436, %v506
  %v522 = vmul.f32 %v440, %v506
  %v523 = vmul.f32 %v444, %v506
  %v524 = vmul.f32 %v448, %v506
  %v525 = vmul.f32 %v452, %v506
  %v526 = vmul.f32 %v456, %v506
  %v527 = vmul.f32 %v460, %v506
  %v528 = vmul.f32 %v464, %v506
  %v529 = vmul.f32 %v468, %v506
  %v530 = vmul.f32 %v472, %v506
  %v531 = vmul.f32 %v476, %v506
  %v532 = vmul.f32 %v480, %v506
  %v533 = vmul.f32 %v484, %v506
  %v534 = vmul.f32 %v488, %v506
  %v535 = vmul.f32 %v492, %v506
  %v536 = vmul.f32 %v496, %v506
  %v537 = vmul.f32 %v500, %v506
  %v538 = vmul.f32 %v504, %v506
  %v539 = vadd.f32 %v275, %v507
  %v540 = vadd.f32 %v276, %v508
  %v541 = vadd.f32 %v277, %v509
  %v542 = vadd.f32 %v278, %v510
  %v543 = vadd.f32 %v279, %v511
  %v544 = vadd.f32 %v280, %v512
  %v545 = vadd.f32 %v281, %v513
  %v546 = vadd.f32 %v282, %v514
  %v547 = vadd.f32 %v283, %v515
  %v548 = vadd.f32 %v284, %v516
  %v549 = vadd.f32 %v285, %v517
  %v550 = vadd.f32 %v286, %v518
  %v551 = vadd.f32 %v287, %v519
  %v552 = vadd.f32 %v288, %v520
  %v553 = vadd.f32 %v289, %v521
  %v554 = vadd.f32 %v290, %v522
  %v555 = vadd.f32 %v291, %v523
  %v556 = vadd.f32 %v292, %v524
  %v557 = vadd.f32 %v293, %v525
  %v558 = vadd.f32 %v294, %v526
  %v559 = vadd.f32 %v295, %v527
  %v560 = vadd.f32 %v296, %v528
  %v561 = vadd.f32 %v297, %v529
  %v562 = vadd.f32 %v298, %v530
  %v563 = vadd.f32 %v299, %v531
  %v564 = vadd.f32 %v300, %v532
  %v565 = vadd.f32 %v301, %v533
  %v566 = vadd.f32 %v302, %v534
  %v567 = vadd.f32 %v303, %v535
  %v568 = vadd.f32 %v304, %v536
  %v569 = vadd.f32 %v305, %v537
  %v570 = vadd.f32 %v306, %v538
  %v571 = vld [vmem:[%s4 + $0x1] sm:$0x1]
  %v572 = vperm.slane %v571, 0
  %v573 = vmul.f32 %v380, %v572
  %v574 = vmul.f32 %v384, %v572
  %v575 = vmul.f32 %v388, %v572
  %v576 = vmul.f32 %v392, %v572
  %v577 = vmul.f32 %v396, %v572
  %v578 = vmul.f32 %v400, %v572
  %v579 = vmul.f32 %v404, %v572
  %v580 = vmul.f32 %v408, %v572
  %v581 = vmul.f32 %v412, %v572
  %v582 = vmul.f32 %v416, %v572
  %v583 = vmul.f32 %v420, %v572
  %v584 = vmul.f32 %v424, %v572
  %v585 = vmul.f32 %v428, %v572
  %v586 = vmul.f32 %v432, %v572
  %v587 = vmul.f32 %v436, %v572
  %v588 = vmul.f32 %v440, %v572
  %v589 = vmul.f32 %v444, %v572
  %v590 = vmul.f32 %v448, %v572
  %v591 = vmul.f32 %v452, %v572
  %v592 = vmul.f32 %v456, %v572
  %v593 = vmul.f32 %v460, %v572
  %v594 = vmul.f32 %v464, %v572
  %v595 = vmul.f32 %v468, %v572
  %v596 = vmul.f32 %v472, %v572
  %v597 = vmul.f32 %v476, %v572
  %v598 = vmul.f32 %v480, %v572
  %v599 = vmul.f32 %v484, %v572
  %v600 = vmul.f32 %v488, %v572
  %v601 = vmul.f32 %v492, %v572
  %v602 = vmul.f32 %v496, %v572
  %v603 = vmul.f32 %v500, %v572
  %v604 = vmul.f32 %v504, %v572
  %v605 = vadd.f32 %v345, %v573
  %v606 = vadd.f32 %v346, %v574
  %v607 = vadd.f32 %v347, %v575
  %v608 = vadd.f32 %v348, %v576
  %v609 = vadd.f32 %v349, %v577
  %v610 = vadd.f32 %v350, %v578
  %v611 = vadd.f32 %v351, %v579
  %v612 = vadd.f32 %v352, %v580
  %v613 = vadd.f32 %v353, %v581
  %v614 = vadd.f32 %v354, %v582
  %v615 = vadd.f32 %v355, %v583
  %v616 = vadd.f32 %v356, %v584
  %v617 = vadd.f32 %v357, %v585
  %v618 = vadd.f32 %v358, %v586
  %v619 = vadd.f32 %v359, %v587
  %v620 = vadd.f32 %v360, %v588
  %v621 = vadd.f32 %v361, %v589
  %v622 = vadd.f32 %v362, %v590
  %v623 = vadd.f32 %v363, %v591
  %v624 = vadd.f32 %v364, %v592
  %v625 = vadd.f32 %v365, %v593
  %v626 = vadd.f32 %v366, %v594
  %v627 = vadd.f32 %v367, %v595
  %v628 = vadd.f32 %v368, %v596
  %v629 = vadd.f32 %v369, %v597
  %v630 = vadd.f32 %v370, %v598
  %v631 = vadd.f32 %v371, %v599
  %v632 = vadd.f32 %v372, %v600
  %v633 = vadd.f32 %v373, %v601
  %v634 = vadd.f32 %v374, %v602
  %v635 = vadd.f32 %v375, %v603
  %v636 = vadd.f32 %v376, %v604
  %v637 = vld [vmem:[%s1] sm:$0xff]
  %v638 = vld [vmem:[%s1 + $0x8] sm:$0xff]
  %v639 = vld [vmem:[%s1 + $0x10] sm:$0xff]
  %v640 = vld [vmem:[%s1 + $0x18] sm:$0xff]
  %v641 = vld [vmem:[%s1 + $0x20] sm:$0xff]
  %v642 = vld [vmem:[%s1 + $0x28] sm:$0xff]
  %v643 = vld [vmem:[%s1 + $0x30] sm:$0xff]
  %v644 = vld [vmem:[%s1 + $0x38] sm:$0xff]
  %v645 = vld [vmem:[%s1 + $0x40] sm:$0xff]
  %v646 = vld [vmem:[%s1 + $0x48] sm:$0xff]
  %v647 = vld [vmem:[%s1 + $0x50] sm:$0xff]
  %v648 = vld [vmem:[%s1 + $0x58] sm:$0xff]
  %v649 = vld [vmem:[%s1 + $0x60] sm:$0xff]
  %v650 = vld [vmem:[%s1 + $0x68] sm:$0xff]
  %v651 = vld [vmem:[%s1 + $0x70] sm:$0xff]
  %v652 = vld [vmem:[%s1 + $0x78] sm:$0xff]
  %v653 = vld [vmem:[%s1 + $0x80] sm:$0xff]
  %v654 = vld [vmem:[%s1 + $0x88] sm:$0xff]
  %v655 = vld [vmem:[%s1 + $0x90] sm:$0xff]
  %v656 = vld [vmem:[%s1 + $0x98] sm:$0xff]
  %v657 = vld [vmem:[%s1 + $0xa0] sm:$0xff]
  %v658 = vld [vmem:[%s1 + $0xa8] sm:$0xff]
  %v659 = vld [vmem:[%s1 + $0xb0] sm:$0xff]
  %v660 = vld [vmem:[%s1 + $0xb8] sm:$0xff]
  %v661 = vld [vmem:[%s1 + $0xc0] sm:$0xff]
  %v662 = vld [vmem:[%s1 + $0xc8] sm:$0xff]
  %v663 = vld [vmem:[%s1 + $0xd0] sm:$0xff]
  %v664 = vld [vmem:[%s1 + $0xd8] sm:$0xff]
  %v665 = vld [vmem:[%s1 + $0xe0] sm:$0xff]
  %v666 = vld [vmem:[%s1 + $0xe8] sm:$0xff]
  %v667 = vld [vmem:[%s1 + $0xf0] sm:$0xff]
  %v668 = vld [vmem:[%s1 + $0xf8] sm:$0xff]
  %v669 = vpack.c.bf16 %v540, %v539
  %v670 = vpack.c.bf16 %v542, %v541
  %v671 = vpack.c.bf16 %v544, %v543
  %v672 = vpack.c.bf16 %v546, %v545
  %v673 = vpack.c.bf16 %v548, %v547
  %v674 = vpack.c.bf16 %v550, %v549
  %v675 = vpack.c.bf16 %v552, %v551
  %v676 = vpack.c.bf16 %v554, %v553
  %v677 = vpack.c.bf16 %v556, %v555
  %v678 = vpack.c.bf16 %v558, %v557
  %v679 = vpack.c.bf16 %v560, %v559
  %v680 = vpack.c.bf16 %v562, %v561
  %v681 = vpack.c.bf16 %v564, %v563
  %v682 = vpack.c.bf16 %v566, %v565
  %v683 = vpack.c.bf16 %v568, %v567
  %v684 = vpack.c.bf16 %v570, %v569
  %v717 = vunpack.c.l.b16 %v637
  %v718 = vunpack.c.h.b16 %v637
  %v719 = vunpack.c.l.b16 %v638
  %v720 = vunpack.c.h.b16 %v638
  %v721 = vunpack.c.l.b16 %v639
  %v722 = vunpack.c.h.b16 %v639
  %v723 = vunpack.c.l.b16 %v640
  %v724 = vunpack.c.h.b16 %v640
  %v725 = vunpack.c.l.b16 %v641
  %v726 = vunpack.c.h.b16 %v641
  %v727 = vunpack.c.l.b16 %v642
  %v728 = vunpack.c.h.b16 %v642
  %v729 = vunpack.c.l.b16 %v643
  %v730 = vunpack.c.h.b16 %v643
  %v731 = vunpack.c.l.b16 %v644
  %v732 = vunpack.c.h.b16 %v644
  %v733 = vunpack.c.l.b16 %v645
  %v734 = vunpack.c.h.b16 %v645
  %v735 = vunpack.c.l.b16 %v646
  %v736 = vunpack.c.h.b16 %v646
  %v737 = vunpack.c.l.b16 %v647
  %v738 = vunpack.c.h.b16 %v647
  %v739 = vunpack.c.l.b16 %v648
  %v740 = vunpack.c.h.b16 %v648
  %v741 = vunpack.c.l.b16 %v649
  %v742 = vunpack.c.h.b16 %v649
  %v743 = vunpack.c.l.b16 %v650
  %v744 = vunpack.c.h.b16 %v650
  %v745 = vunpack.c.l.b16 %v651
  %v746 = vunpack.c.h.b16 %v651
  %v747 = vunpack.c.l.b16 %v652
  %v748 = vunpack.c.h.b16 %v652
  %v749 = vunpack.c.l.b16 %v653
  %v750 = vunpack.c.h.b16 %v653
  %v751 = vunpack.c.l.b16 %v654
  %v752 = vunpack.c.h.b16 %v654
  %v753 = vunpack.c.l.b16 %v655
  %v754 = vunpack.c.h.b16 %v655
  %v755 = vunpack.c.l.b16 %v656
  %v756 = vunpack.c.h.b16 %v656
  %v757 = vunpack.c.l.b16 %v657
  %v758 = vunpack.c.h.b16 %v657
  %v759 = vunpack.c.l.b16 %v658
  %v760 = vunpack.c.h.b16 %v658
  %v761 = vunpack.c.l.b16 %v659
  %v762 = vunpack.c.h.b16 %v659
  %v763 = vunpack.c.l.b16 %v660
  %v764 = vunpack.c.h.b16 %v660
  %v765 = vunpack.c.l.b16 %v661
  %v766 = vunpack.c.h.b16 %v661
  %v767 = vunpack.c.l.b16 %v662
  %v768 = vunpack.c.h.b16 %v662
  %v769 = vunpack.c.l.b16 %v663
  %v770 = vunpack.c.h.b16 %v663
  %v771 = vunpack.c.l.b16 %v664
  %v772 = vunpack.c.h.b16 %v664
  %v773 = vunpack.c.l.b16 %v665
  %v774 = vunpack.c.h.b16 %v665
  %v775 = vunpack.c.l.b16 %v666
  %v776 = vunpack.c.h.b16 %v666
  %v777 = vunpack.c.l.b16 %v667
  %v778 = vunpack.c.h.b16 %v667
  %v779 = vunpack.c.l.b16 %v668
  %v780 = vunpack.c.h.b16 %v668
  %v781 = vpack.c.b16 %v719, %v717
  %v782 = vpack.c.b16 %v720, %v718
  %v783 = vpack.c.b16 %v723, %v721
  %v784 = vpack.c.b16 %v724, %v722
  %v785 = vpack.c.b16 %v727, %v725
  %v786 = vpack.c.b16 %v728, %v726
  %v787 = vpack.c.b16 %v731, %v729
  %v788 = vpack.c.b16 %v732, %v730
  %v789 = vpack.c.b16 %v735, %v733
  %v790 = vpack.c.b16 %v736, %v734
  %v791 = vpack.c.b16 %v739, %v737
  %v792 = vpack.c.b16 %v740, %v738
  %v793 = vpack.c.b16 %v743, %v741
  %v794 = vpack.c.b16 %v744, %v742
  %v795 = vpack.c.b16 %v747, %v745
  %v796 = vpack.c.b16 %v748, %v746
  %v797 = vpack.c.b16 %v751, %v749
  %v798 = vpack.c.b16 %v752, %v750
  %v799 = vpack.c.b16 %v755, %v753
  %v800 = vpack.c.b16 %v756, %v754
  %v801 = vpack.c.b16 %v759, %v757
  %v802 = vpack.c.b16 %v760, %v758
  %v803 = vpack.c.b16 %v763, %v761
  %v804 = vpack.c.b16 %v764, %v762
  %v805 = vpack.c.b16 %v767, %v765
  %v806 = vpack.c.b16 %v768, %v766
  %v807 = vpack.c.b16 %v771, %v769
  %v808 = vpack.c.b16 %v772, %v770
  %v809 = vpack.c.b16 %v775, %v773
  %v810 = vpack.c.b16 %v776, %v774
  %v811 = vpack.c.b16 %v779, %v777
  %v812 = vpack.c.b16 %v780, %v778
  %845 = vmatpush.bf16.msra.mxu0 %v676
  %846 = vmatpush.bf16.msra.mxu0 %v675
  %847 = vmatpush.bf16.msra.mxu0 %v674
  %848 = vmatpush.bf16.msra.mxu0 %v673
  %849 = vmatpush.bf16.msra.mxu0 %v672
  %850 = vmatpush.bf16.msra.mxu0 %v671
  %851 = vmatpush.bf16.msra.mxu0 %v670
  %852 = vmatpush.bf16.msra.mxu0 %v669
  %853 = vmatmul.bf16.gmra.mxu0 %v781
  %v854 = vpop.f32.mrf.mxu0
  %v855 = vadd.f32 0.0, %v854
  %v856 = vpop.f32.mrf.mxu0
  %v857 = vadd.f32 0.0, %v856
  %858 = vmatmul.bf16.gmra.mxu0 %v783
  %v859 = vpop.f32.mrf.mxu0
  %v860 = vadd.f32 0.0, %v859
  %v861 = vpop.f32.mrf.mxu0
  %v862 = vadd.f32 0.0, %v861
  %863 = vmatmul.bf16.gmra.mxu0 %v785
  %v864 = vpop.f32.mrf.mxu0
  %v865 = vadd.f32 0.0, %v864
  %v866 = vpop.f32.mrf.mxu0
  %v867 = vadd.f32 0.0, %v866
  %868 = vmatmul.bf16.gmra.mxu0 %v787
  %v869 = vpop.f32.mrf.mxu0
  %v870 = vadd.f32 0.0, %v869
  %v871 = vpop.f32.mrf.mxu0
  %v872 = vadd.f32 0.0, %v871
  %873 = vmatmul.bf16.gmra.mxu0 %v789
  %v874 = vpop.f32.mrf.mxu0
  %v875 = vadd.f32 0.0, %v874
  %v876 = vpop.f32.mrf.mxu0
  %v877 = vadd.f32 0.0, %v876
  %878 = vmatmul.bf16.gmra.mxu0 %v791
  %v879 = vpop.f32.mrf.mxu0
  %v880 = vadd.f32 0.0, %v879
  %v881 = vpop.f32.mrf.mxu0
  %v882 = vadd.f32 0.0, %v881
  %883 = vmatmul.bf16.gmra.mxu0 %v793
  %v884 = vpop.f32.mrf.mxu0
  %v885 = vadd.f32 0.0, %v884
  %v886 = vpop.f32.mrf.mxu0
  %v887 = vadd.f32 0.0, %v886
  %888 = vmatmul.bf16.gmra.mxu0 %v795
  %v889 = vpop.f32.mrf.mxu0
  %v890 = vadd.f32 0.0, %v889
  %v891 = vpop.f32.mrf.mxu0
  %v892 = vadd.f32 0.0, %v891
  %893 = vmatmul.bf16.gmra.mxu0 %v797
  %v894 = vpop.f32.mrf.mxu0
  %v895 = vadd.f32 0.0, %v894
  %v896 = vpop.f32.mrf.mxu0
  %v897 = vadd.f32 0.0, %v896
  %898 = vmatmul.bf16.gmra.mxu0 %v799
  %v899 = vpop.f32.mrf.mxu0
  %v900 = vadd.f32 0.0, %v899
  %v901 = vpop.f32.mrf.mxu0
  %v902 = vadd.f32 0.0, %v901
  %903 = vmatmul.bf16.gmra.mxu0 %v801
  %v904 = vpop.f32.mrf.mxu0
  %v905 = vadd.f32 0.0, %v904
  %v906 = vpop.f32.mrf.mxu0
  %v907 = vadd.f32 0.0, %v906
  %908 = vmatmul.bf16.gmra.mxu0 %v803
  %v909 = vpop.f32.mrf.mxu0
  %v910 = vadd.f32 0.0, %v909
  %v911 = vpop.f32.mrf.mxu0
  %v912 = vadd.f32 0.0, %v911
  %913 = vmatmul.bf16.gmra.mxu0 %v805
  %v914 = vpop.f32.mrf.mxu0
  %v915 = vadd.f32 0.0, %v914
  %v916 = vpop.f32.mrf.mxu0
  %v917 = vadd.f32 0.0, %v916
  %918 = vmatmul.bf16.gmra.mxu0 %v807
  %v919 = vpop.f32.mrf.mxu0
  %v920 = vadd.f32 0.0, %v919
  %v921 = vpop.f32.mrf.mxu0
  %v922 = vadd.f32 0.0, %v921
  %923 = vmatmul.bf16.gmra.mxu0 %v809
  %v924 = vpop.f32.mrf.mxu0
  %v925 = vadd.f32 0.0, %v924
  %v926 = vpop.f32.mrf.mxu0
  %v927 = vadd.f32 0.0, %v926
  %928 = vmatmul.bf16.gmra.mxu0 %v811
  %v929 = vpop.f32.mrf.mxu0
  %v930 = vadd.f32 0.0, %v929
  %v931 = vpop.f32.mrf.mxu0
  %v932 = vadd.f32 0.0, %v931
  %933 = vdwg.mxu0
  %934 = vmatpush.bf16.msra.mxu0 %v684
  %935 = vmatpush.bf16.msra.mxu0 %v683
  %936 = vmatpush.bf16.msra.mxu0 %v682
  %937 = vmatpush.bf16.msra.mxu0 %v681
  %938 = vmatpush.bf16.msra.mxu0 %v680
  %939 = vmatpush.bf16.msra.mxu0 %v679
  %940 = vmatpush.bf16.msra.mxu0 %v678
  %941 = vmatpush.bf16.msra.mxu0 %v677
  %942 = vmatmul.bf16.gmra.mxu0 %v782
  %v943 = vpop.f32.mrf.mxu0
  %v944 = vadd.f32 %v855, %v943
  %v945 = vpop.f32.mrf.mxu0
  %v946 = vadd.f32 %v857, %v945
  %947 = vmatmul.bf16.gmra.mxu0 %v784
  %v948 = vpop.f32.mrf.mxu0
  %v949 = vadd.f32 %v860, %v948
  %v950 = vpop.f32.mrf.mxu0
  %v951 = vadd.f32 %v862, %v950
  %952 = vmatmul.bf16.gmra.mxu0 %v786
  %v953 = vpop.f32.mrf.mxu0
  %v954 = vadd.f32 %v865, %v953
  %v955 = vpop.f32.mrf.mxu0
  %v956 = vadd.f32 %v867, %v955
  %957 = vmatmul.bf16.gmra.mxu0 %v788
  %v958 = vpop.f32.mrf.mxu0
  %v959 = vadd.f32 %v870, %v958
  %v960 = vpop.f32.mrf.mxu0
  %v961 = vadd.f32 %v872, %v960
  %962 = vmatmul.bf16.gmra.mxu0 %v790
  %v963 = vpop.f32.mrf.mxu0
  %v964 = vadd.f32 %v875, %v963
  %v965 = vpop.f32.mrf.mxu0
  %v966 = vadd.f32 %v877, %v965
  %967 = vmatmul.bf16.gmra.mxu0 %v792
  %v968 = vpop.f32.mrf.mxu0
  %v969 = vadd.f32 %v880, %v968
  %v970 = vpop.f32.mrf.mxu0
  %v971 = vadd.f32 %v882, %v970
  %972 = vmatmul.bf16.gmra.mxu0 %v794
  %v973 = vpop.f32.mrf.mxu0
  %v974 = vadd.f32 %v885, %v973
  %v975 = vpop.f32.mrf.mxu0
  %v976 = vadd.f32 %v887, %v975
  %977 = vmatmul.bf16.gmra.mxu0 %v796
  %v978 = vpop.f32.mrf.mxu0
  %v979 = vadd.f32 %v890, %v978
  %v980 = vpop.f32.mrf.mxu0
  %v981 = vadd.f32 %v892, %v980
  %982 = vmatmul.bf16.gmra.mxu0 %v798
  %v983 = vpop.f32.mrf.mxu0
  %v984 = vadd.f32 %v895, %v983
  %v985 = vpop.f32.mrf.mxu0
  %v986 = vadd.f32 %v897, %v985
  %987 = vmatmul.bf16.gmra.mxu0 %v800
  %v988 = vpop.f32.mrf.mxu0
  %v989 = vadd.f32 %v900, %v988
  %v990 = vpop.f32.mrf.mxu0
  %v991 = vadd.f32 %v902, %v990
  %992 = vmatmul.bf16.gmra.mxu0 %v802
  %v993 = vpop.f32.mrf.mxu0
  %v994 = vadd.f32 %v905, %v993
  %v995 = vpop.f32.mrf.mxu0
  %v996 = vadd.f32 %v907, %v995
  %997 = vmatmul.bf16.gmra.mxu0 %v804
  %v998 = vpop.f32.mrf.mxu0
  %v999 = vadd.f32 %v910, %v998
  %v1000 = vpop.f32.mrf.mxu0
  %v1001 = vadd.f32 %v912, %v1000
  %1002 = vmatmul.bf16.gmra.mxu0 %v806
  %v1003 = vpop.f32.mrf.mxu0
  %v1004 = vadd.f32 %v915, %v1003
  %v1005 = vpop.f32.mrf.mxu0
  %v1006 = vadd.f32 %v917, %v1005
  %1007 = vmatmul.bf16.gmra.mxu0 %v808
  %v1008 = vpop.f32.mrf.mxu0
  %v1009 = vadd.f32 %v920, %v1008
  %v1010 = vpop.f32.mrf.mxu0
  %v1011 = vadd.f32 %v922, %v1010
  %1012 = vmatmul.bf16.gmra.mxu0 %v810
  %v1013 = vpop.f32.mrf.mxu0
  %v1014 = vadd.f32 %v925, %v1013
  %v1015 = vpop.f32.mrf.mxu0
  %v1016 = vadd.f32 %v927, %v1015
  %1017 = vmatmul.bf16.gmra.mxu0 %v812
  %v1018 = vpop.f32.mrf.mxu0
  %v1019 = vadd.f32 %v930, %v1018
  %v1020 = vpop.f32.mrf.mxu0
  %v1021 = vadd.f32 %v932, %v1020
  %1022 = vdwg.mxu0
  %v1023 = vpack.c.bf16 %v946, %v944
  %v1024 = vpack.c.bf16 %v951, %v949
  %v1025 = vpack.c.bf16 %v956, %v954
  %v1026 = vpack.c.bf16 %v961, %v959
  %v1027 = vpack.c.bf16 %v966, %v964
  %v1028 = vpack.c.bf16 %v971, %v969
  %v1029 = vpack.c.bf16 %v976, %v974
  %v1030 = vpack.c.bf16 %v981, %v979
  %v1031 = vpack.c.bf16 %v986, %v984
  %v1032 = vpack.c.bf16 %v991, %v989
  %v1033 = vpack.c.bf16 %v996, %v994
  %v1034 = vpack.c.bf16 %v1001, %v999
  %v1035 = vpack.c.bf16 %v1006, %v1004
  %v1036 = vpack.c.bf16 %v1011, %v1009
  %v1037 = vpack.c.bf16 %v1016, %v1014
  %v1038 = vpack.c.bf16 %v1021, %v1019
  %v1039 = vld [vmem:[%s6] sm:$0xf]
  %v1040 = vld [vmem:[%s6 + $0x4] sm:$0xf]
  %v1041 = vld [vmem:[%s6 + $0x8] sm:$0xf]
  %v1042 = vld [vmem:[%s6 + $0xc] sm:$0xf]
  %v1043 = vld [vmem:[%s7] sm:$0x1]
  %v1045 = vperm.slane %v1043, 0
  %v1051 = vunpack.c.l.b16 %v1039
  %v1052 = vunpack.c.l.b16 %v1040
  %v1053 = vunpack.c.l.b16 %v1041
  %v1054 = vunpack.c.l.b16 %v1042
  %v1055 = vpack.c.b16 %v1052, %v1051
  %v1056 = vpack.c.b16 %v1054, %v1053
  %vm1059 = vcmask 261120
  %v1061 = vsel %vm1059, %v1023, 0
  %v1064 = vsel %vm1059, %v1024, 0
  %v1067 = vsel %vm1059, %v1025, 0
  %v1070 = vsel %vm1059, %v1026, 0
  %v1073 = vsel %vm1059, %v1027, 0
  %v1076 = vsel %vm1059, %v1028, 0
  %v1079 = vsel %vm1059, %v1029, 0
  %v1082 = vsel %vm1059, %v1030, 0
  %v1085 = vsel %vm1059, %v1031, 0
  %v1088 = vsel %vm1059, %v1032, 0
  %v1091 = vsel %vm1059, %v1033, 0
  %v1094 = vsel %vm1059, %v1034, 0
  %v1097 = vsel %vm1059, %v1035, 0
  %v1100 = vsel %vm1059, %v1036, 0
  %v1103 = vsel %vm1059, %v1037, 0
  %v1106 = vsel %vm1059, %v1038, 0
  %1108 = vmatpush.bf16.msra.mxu0 0
  %1109 = vmatpush.bf16.msra.mxu0 0
  %1110 = vmatpush.bf16.msra.mxu0 0
  %1111 = vmatpush.bf16.msra.mxu0 0
  %1112 = vmatpush.bf16.msra.mxu0 0
  %1113 = vmatpush.bf16.msra.mxu0 0
  %1114 = vmatpush.bf16.msra.mxu0 %v1056
  %1115 = vmatpush.bf16.msra.mxu0 %v1055
  %1116 = vmatmul.bf16.gmra.mxu0 %v1061
  %v1117 = vpop.f32.mrf.mxu0
  %v1118 = vadd.f32 %v1045, %v1117
  %v1119 = vpop.f32.mrf.mxu0
  %v1120 = vadd.f32 %v1045, %v1119
  %1121 = vmatmul.bf16.gmra.mxu0 %v1064
  %v1122 = vpop.f32.mrf.mxu0
  %v1123 = vadd.f32 %v1045, %v1122
  %v1124 = vpop.f32.mrf.mxu0
  %v1125 = vadd.f32 %v1045, %v1124
  %1126 = vmatmul.bf16.gmra.mxu0 %v1067
  %v1127 = vpop.f32.mrf.mxu0
  %v1128 = vadd.f32 %v1045, %v1127
  %v1129 = vpop.f32.mrf.mxu0
  %v1130 = vadd.f32 %v1045, %v1129
  %1131 = vmatmul.bf16.gmra.mxu0 %v1070
  %v1132 = vpop.f32.mrf.mxu0
  %v1133 = vadd.f32 %v1045, %v1132
  %v1134 = vpop.f32.mrf.mxu0
  %v1135 = vadd.f32 %v1045, %v1134
  %1136 = vmatmul.bf16.gmra.mxu0 %v1073
  %v1137 = vpop.f32.mrf.mxu0
  %v1138 = vadd.f32 %v1045, %v1137
  %v1139 = vpop.f32.mrf.mxu0
  %v1140 = vadd.f32 %v1045, %v1139
  %1141 = vmatmul.bf16.gmra.mxu0 %v1076
  %v1142 = vpop.f32.mrf.mxu0
  %v1143 = vadd.f32 %v1045, %v1142
  %v1144 = vpop.f32.mrf.mxu0
  %v1145 = vadd.f32 %v1045, %v1144
  %1146 = vmatmul.bf16.gmra.mxu0 %v1079
  %v1147 = vpop.f32.mrf.mxu0
  %v1148 = vadd.f32 %v1045, %v1147
  %v1149 = vpop.f32.mrf.mxu0
  %v1150 = vadd.f32 %v1045, %v1149
  %1151 = vmatmul.bf16.gmra.mxu0 %v1082
  %v1152 = vpop.f32.mrf.mxu0
  %v1153 = vadd.f32 %v1045, %v1152
  %v1154 = vpop.f32.mrf.mxu0
  %v1155 = vadd.f32 %v1045, %v1154
  %1156 = vmatmul.bf16.gmra.mxu0 %v1085
  %v1157 = vpop.f32.mrf.mxu0
  %v1158 = vadd.f32 %v1045, %v1157
  %v1159 = vpop.f32.mrf.mxu0
  %v1160 = vadd.f32 %v1045, %v1159
  %1161 = vmatmul.bf16.gmra.mxu0 %v1088
  %v1162 = vpop.f32.mrf.mxu0
  %v1163 = vadd.f32 %v1045, %v1162
  %v1164 = vpop.f32.mrf.mxu0
  %v1165 = vadd.f32 %v1045, %v1164
  %1166 = vmatmul.bf16.gmra.mxu0 %v1091
  %v1167 = vpop.f32.mrf.mxu0
  %v1168 = vadd.f32 %v1045, %v1167
  %v1169 = vpop.f32.mrf.mxu0
  %v1170 = vadd.f32 %v1045, %v1169
  %1171 = vmatmul.bf16.gmra.mxu0 %v1094
  %v1172 = vpop.f32.mrf.mxu0
  %v1173 = vadd.f32 %v1045, %v1172
  %v1174 = vpop.f32.mrf.mxu0
  %v1175 = vadd.f32 %v1045, %v1174
  %1176 = vmatmul.bf16.gmra.mxu0 %v1097
  %v1177 = vpop.f32.mrf.mxu0
  %v1178 = vadd.f32 %v1045, %v1177
  %v1179 = vpop.f32.mrf.mxu0
  %v1180 = vadd.f32 %v1045, %v1179
  %1181 = vmatmul.bf16.gmra.mxu0 %v1100
  %v1182 = vpop.f32.mrf.mxu0
  %v1183 = vadd.f32 %v1045, %v1182
  %v1184 = vpop.f32.mrf.mxu0
  %v1185 = vadd.f32 %v1045, %v1184
  %1186 = vmatmul.bf16.gmra.mxu0 %v1103
  %v1187 = vpop.f32.mrf.mxu0
  %v1188 = vadd.f32 %v1045, %v1187
  %v1189 = vpop.f32.mrf.mxu0
  %v1190 = vadd.f32 %v1045, %v1189
  %1191 = vmatmul.bf16.gmra.mxu0 %v1106
  %v1192 = vpop.f32.mrf.mxu0
  %v1193 = vadd.f32 %v1045, %v1192
  %v1194 = vpop.f32.mrf.mxu0
  %v1195 = vadd.f32 %v1045, %v1194
  %1196 = vdwg.mxu0
  %v1197 = vmax.f32 %v1118, 0.0
  %v1198 = vmax.f32 %v1120, 0.0
  %v1199 = vmax.f32 %v1123, 0.0
  %v1200 = vmax.f32 %v1125, 0.0
  %v1201 = vmax.f32 %v1128, 0.0
  %v1202 = vmax.f32 %v1130, 0.0
  %v1203 = vmax.f32 %v1133, 0.0
  %v1204 = vmax.f32 %v1135, 0.0
  %v1205 = vmax.f32 %v1138, 0.0
  %v1206 = vmax.f32 %v1140, 0.0
  %v1207 = vmax.f32 %v1143, 0.0
  %v1208 = vmax.f32 %v1145, 0.0
  %v1209 = vmax.f32 %v1148, 0.0
  %v1210 = vmax.f32 %v1150, 0.0
  %v1211 = vmax.f32 %v1153, 0.0
  %v1212 = vmax.f32 %v1155, 0.0
  %v1213 = vmax.f32 %v1158, 0.0
  %v1214 = vmax.f32 %v1160, 0.0
  %v1215 = vmax.f32 %v1163, 0.0
  %v1216 = vmax.f32 %v1165, 0.0
  %v1217 = vmax.f32 %v1168, 0.0
  %v1218 = vmax.f32 %v1170, 0.0
  %v1219 = vmax.f32 %v1173, 0.0
  %v1220 = vmax.f32 %v1175, 0.0
  %v1221 = vmax.f32 %v1178, 0.0
  %v1222 = vmax.f32 %v1180, 0.0
  %v1223 = vmax.f32 %v1183, 0.0
  %v1224 = vmax.f32 %v1185, 0.0
  %v1225 = vmax.f32 %v1188, 0.0
  %v1226 = vmax.f32 %v1190, 0.0
  %v1227 = vmax.f32 %v1193, 0.0
  %v1228 = vmax.f32 %v1195, 0.0
  %v1229 = vpack.c.bf16 %v1198, %v1197
  %v1230 = vpack.c.bf16 %v1200, %v1199
  %v1231 = vpack.c.bf16 %v1202, %v1201
  %v1232 = vpack.c.bf16 %v1204, %v1203
  %v1233 = vpack.c.bf16 %v1206, %v1205
  %v1234 = vpack.c.bf16 %v1208, %v1207
  %v1235 = vpack.c.bf16 %v1210, %v1209
  %v1236 = vpack.c.bf16 %v1212, %v1211
  %v1237 = vpack.c.bf16 %v1214, %v1213
  %v1238 = vpack.c.bf16 %v1216, %v1215
  %v1239 = vpack.c.bf16 %v1218, %v1217
  %v1240 = vpack.c.bf16 %v1220, %v1219
  %v1241 = vpack.c.bf16 %v1222, %v1221
  %v1242 = vpack.c.bf16 %v1224, %v1223
  %v1243 = vpack.c.bf16 %v1226, %v1225
  %v1244 = vpack.c.bf16 %v1228, %v1227
  %v1245 = vld [vmem:[%s8] sm:$0xf]
  %v1246 = vld [vmem:[%s8 + $0x4] sm:$0xf]
  %v1247 = vld [vmem:[%s8 + $0x8] sm:$0xf]
  %v1248 = vld [vmem:[%s8 + $0xc] sm:$0xf]
  %v1249 = vld [vmem:[%s9] sm:$0x1]
  %v1251 = vperm.slane %v1249, 0
  %v1257 = vunpack.c.l.b16 %v1245
  %v1258 = vunpack.c.l.b16 %v1246
  %v1259 = vunpack.c.l.b16 %v1247
  %v1260 = vunpack.c.l.b16 %v1248
  %v1261 = vpack.c.b16 %v1258, %v1257
  %v1262 = vpack.c.b16 %v1260, %v1259
  %v1266 = vsel %vm1059, %v1229, 0
  %v1269 = vsel %vm1059, %v1230, 0
  %v1272 = vsel %vm1059, %v1231, 0
  %v1275 = vsel %vm1059, %v1232, 0
  %v1278 = vsel %vm1059, %v1233, 0
  %v1281 = vsel %vm1059, %v1234, 0
  %v1284 = vsel %vm1059, %v1235, 0
  %v1287 = vsel %vm1059, %v1236, 0
  %v1290 = vsel %vm1059, %v1237, 0
  %v1293 = vsel %vm1059, %v1238, 0
  %v1296 = vsel %vm1059, %v1239, 0
  %v1299 = vsel %vm1059, %v1240, 0
  %v1302 = vsel %vm1059, %v1241, 0
  %v1305 = vsel %vm1059, %v1242, 0
  %v1308 = vsel %vm1059, %v1243, 0
  %v1311 = vsel %vm1059, %v1244, 0
  %1313 = vmatpush.bf16.msra.mxu0 0
  %1314 = vmatpush.bf16.msra.mxu0 0
  %1315 = vmatpush.bf16.msra.mxu0 0
  %1316 = vmatpush.bf16.msra.mxu0 0
  %1317 = vmatpush.bf16.msra.mxu0 0
  %1318 = vmatpush.bf16.msra.mxu0 0
  %1319 = vmatpush.bf16.msra.mxu0 %v1262
  %1320 = vmatpush.bf16.msra.mxu0 %v1261
  %1321 = vmatmul.bf16.gmra.mxu0 %v1266
  %v1322 = vpop.f32.mrf.mxu0
  %v1323 = vadd.f32 %v1251, %v1322
  %v1324 = vpop.f32.mrf.mxu0
  %v1325 = vadd.f32 %v1251, %v1324
  %1326 = vmatmul.bf16.gmra.mxu0 %v1269
  %v1327 = vpop.f32.mrf.mxu0
  %v1328 = vadd.f32 %v1251, %v1327
  %v1329 = vpop.f32.mrf.mxu0
  %v1330 = vadd.f32 %v1251, %v1329
  %1331 = vmatmul.bf16.gmra.mxu0 %v1272
  %v1332 = vpop.f32.mrf.mxu0
  %v1333 = vadd.f32 %v1251, %v1332
  %v1334 = vpop.f32.mrf.mxu0
  %v1335 = vadd.f32 %v1251, %v1334
  %1336 = vmatmul.bf16.gmra.mxu0 %v1275
  %v1337 = vpop.f32.mrf.mxu0
  %v1338 = vadd.f32 %v1251, %v1337
  %v1339 = vpop.f32.mrf.mxu0
  %v1340 = vadd.f32 %v1251, %v1339
  %1341 = vmatmul.bf16.gmra.mxu0 %v1278
  %v1342 = vpop.f32.mrf.mxu0
  %v1343 = vadd.f32 %v1251, %v1342
  %v1344 = vpop.f32.mrf.mxu0
  %v1345 = vadd.f32 %v1251, %v1344
  %1346 = vmatmul.bf16.gmra.mxu0 %v1281
  %v1347 = vpop.f32.mrf.mxu0
  %v1348 = vadd.f32 %v1251, %v1347
  %v1349 = vpop.f32.mrf.mxu0
  %v1350 = vadd.f32 %v1251, %v1349
  %1351 = vmatmul.bf16.gmra.mxu0 %v1284
  %v1352 = vpop.f32.mrf.mxu0
  %v1353 = vadd.f32 %v1251, %v1352
  %v1354 = vpop.f32.mrf.mxu0
  %v1355 = vadd.f32 %v1251, %v1354
  %1356 = vmatmul.bf16.gmra.mxu0 %v1287
  %v1357 = vpop.f32.mrf.mxu0
  %v1358 = vadd.f32 %v1251, %v1357
  %v1359 = vpop.f32.mrf.mxu0
  %v1360 = vadd.f32 %v1251, %v1359
  %1361 = vmatmul.bf16.gmra.mxu0 %v1290
  %v1362 = vpop.f32.mrf.mxu0
  %v1363 = vadd.f32 %v1251, %v1362
  %v1364 = vpop.f32.mrf.mxu0
  %v1365 = vadd.f32 %v1251, %v1364
  %1366 = vmatmul.bf16.gmra.mxu0 %v1293
  %v1367 = vpop.f32.mrf.mxu0
  %v1368 = vadd.f32 %v1251, %v1367
  %v1369 = vpop.f32.mrf.mxu0
  %v1370 = vadd.f32 %v1251, %v1369
  %1371 = vmatmul.bf16.gmra.mxu0 %v1296
  %v1372 = vpop.f32.mrf.mxu0
  %v1373 = vadd.f32 %v1251, %v1372
  %v1374 = vpop.f32.mrf.mxu0
  %v1375 = vadd.f32 %v1251, %v1374
  %1376 = vmatmul.bf16.gmra.mxu0 %v1299
  %v1377 = vpop.f32.mrf.mxu0
  %v1378 = vadd.f32 %v1251, %v1377
  %v1379 = vpop.f32.mrf.mxu0
  %v1380 = vadd.f32 %v1251, %v1379
  %1381 = vmatmul.bf16.gmra.mxu0 %v1302
  %v1382 = vpop.f32.mrf.mxu0
  %v1383 = vadd.f32 %v1251, %v1382
  %v1384 = vpop.f32.mrf.mxu0
  %v1385 = vadd.f32 %v1251, %v1384
  %1386 = vmatmul.bf16.gmra.mxu0 %v1305
  %v1387 = vpop.f32.mrf.mxu0
  %v1388 = vadd.f32 %v1251, %v1387
  %v1389 = vpop.f32.mrf.mxu0
  %v1390 = vadd.f32 %v1251, %v1389
  %1391 = vmatmul.bf16.gmra.mxu0 %v1308
  %v1392 = vpop.f32.mrf.mxu0
  %v1393 = vadd.f32 %v1251, %v1392
  %v1394 = vpop.f32.mrf.mxu0
  %v1395 = vadd.f32 %v1251, %v1394
  %1396 = vmatmul.bf16.gmra.mxu0 %v1311
  %v1397 = vpop.f32.mrf.mxu0
  %v1398 = vadd.f32 %v1251, %v1397
  %v1399 = vpop.f32.mrf.mxu0
  %v1400 = vadd.f32 %v1251, %v1399
  %1401 = vdwg.mxu0
  %v1402 = vadd.f32 %v1323, %v539
  %v1403 = vadd.f32 %v1325, %v540
  %v1404 = vadd.f32 %v1328, %v541
  %v1405 = vadd.f32 %v1330, %v542
  %v1406 = vadd.f32 %v1333, %v543
  %v1407 = vadd.f32 %v1335, %v544
  %v1408 = vadd.f32 %v1338, %v545
  %v1409 = vadd.f32 %v1340, %v546
  %v1410 = vadd.f32 %v1343, %v547
  %v1411 = vadd.f32 %v1345, %v548
  %v1412 = vadd.f32 %v1348, %v549
  %v1413 = vadd.f32 %v1350, %v550
  %v1414 = vadd.f32 %v1353, %v551
  %v1415 = vadd.f32 %v1355, %v552
  %v1416 = vadd.f32 %v1358, %v553
  %v1417 = vadd.f32 %v1360, %v554
  %v1418 = vadd.f32 %v1363, %v555
  %v1419 = vadd.f32 %v1365, %v556
  %v1420 = vadd.f32 %v1368, %v557
  %v1421 = vadd.f32 %v1370, %v558
  %v1422 = vadd.f32 %v1373, %v559
  %v1423 = vadd.f32 %v1375, %v560
  %v1424 = vadd.f32 %v1378, %v561
  %v1425 = vadd.f32 %v1380, %v562
  %v1426 = vadd.f32 %v1383, %v563
  %v1427 = vadd.f32 %v1385, %v564
  %v1428 = vadd.f32 %v1388, %v565
  %v1429 = vadd.f32 %v1390, %v566
  %v1430 = vadd.f32 %v1393, %v567
  %v1431 = vadd.f32 %v1395, %v568
  %v1432 = vadd.f32 %v1398, %v569
  %v1433 = vadd.f32 %v1400, %v570
  %v1434 = vpack.c.bf16 %v1403, %v1402
  %v1435 = vpack.c.bf16 %v1405, %v1404
  %v1436 = vpack.c.bf16 %v1407, %v1406
  %v1437 = vpack.c.bf16 %v1409, %v1408
  %v1438 = vpack.c.bf16 %v1411, %v1410
  %v1439 = vpack.c.bf16 %v1413, %v1412
  %v1440 = vpack.c.bf16 %v1415, %v1414
  %v1441 = vpack.c.bf16 %v1417, %v1416
  %v1442 = vpack.c.bf16 %v1419, %v1418
  %v1443 = vpack.c.bf16 %v1421, %v1420
  %v1444 = vpack.c.bf16 %v1423, %v1422
  %v1445 = vpack.c.bf16 %v1425, %v1424
  %v1446 = vpack.c.bf16 %v1427, %v1426
  %v1447 = vpack.c.bf16 %v1429, %v1428
  %v1448 = vpack.c.bf16 %v1431, %v1430
  %v1449 = vpack.c.bf16 %v1433, %v1432
  %v1450 = vld [vmem:[%s10] sm:$0xff]
  %v1451 = vld [vmem:[%s10 + $0x8] sm:$0xff]
  %v1452 = vld [vmem:[%s10 + $0x10] sm:$0xff]
  %v1453 = vld [vmem:[%s10 + $0x18] sm:$0xff]
  %v1454 = vpack.c.bf16 %v606, %v605
  %v1455 = vpack.c.bf16 %v608, %v607
  %v1456 = vpack.c.bf16 %v610, %v609
  %v1457 = vpack.c.bf16 %v612, %v611
  %v1458 = vpack.c.bf16 %v614, %v613
  %v1459 = vpack.c.bf16 %v616, %v615
  %v1460 = vpack.c.bf16 %v618, %v617
  %v1461 = vpack.c.bf16 %v620, %v619
  %v1462 = vpack.c.bf16 %v622, %v621
  %v1463 = vpack.c.bf16 %v624, %v623
  %v1464 = vpack.c.bf16 %v626, %v625
  %v1465 = vpack.c.bf16 %v628, %v627
  %v1466 = vpack.c.bf16 %v630, %v629
  %v1467 = vpack.c.bf16 %v632, %v631
  %v1468 = vpack.c.bf16 %v634, %v633
  %v1469 = vpack.c.bf16 %v636, %v635
  %v1470 = vld [vmem:[%s11] sm:$0xff]
  %v1471 = vld [vmem:[%s11 + $0x8] sm:$0xff]
  %v1472 = vld [vmem:[%s11 + $0x10] sm:$0xff]
  %v1473 = vld [vmem:[%s11 + $0x18] sm:$0xff]
  %v1478 = vunpack.c.l.b16 %v1470
  %v1479 = vunpack.c.h.b16 %v1470
  %v1480 = vunpack.c.l.b16 %v1471
  %v1481 = vunpack.c.h.b16 %v1471
  %v1482 = vunpack.c.l.b16 %v1472
  %v1483 = vunpack.c.h.b16 %v1472
  %v1484 = vunpack.c.l.b16 %v1473
  %v1485 = vunpack.c.h.b16 %v1473
  %v1486 = vpack.c.b16 %v1480, %v1478
  %v1487 = vpack.c.b16 %v1481, %v1479
  %v1488 = vpack.c.b16 %v1484, %v1482
  %v1489 = vpack.c.b16 %v1485, %v1483
  %v1495 = vsel %vm1059, %v1454, 0
  %v1498 = vsel %vm1059, %v1455, 0
  %v1501 = vsel %vm1059, %v1456, 0
  %v1504 = vsel %vm1059, %v1457, 0
  %v1507 = vsel %vm1059, %v1458, 0
  %v1510 = vsel %vm1059, %v1459, 0
  %v1513 = vsel %vm1059, %v1460, 0
  %v1516 = vsel %vm1059, %v1461, 0
  %v1519 = vsel %vm1059, %v1462, 0
  %v1522 = vsel %vm1059, %v1463, 0
  %v1525 = vsel %vm1059, %v1464, 0
  %v1528 = vsel %vm1059, %v1465, 0
  %v1531 = vsel %vm1059, %v1466, 0
  %v1534 = vsel %vm1059, %v1467, 0
  %v1537 = vsel %vm1059, %v1468, 0
  %v1540 = vsel %vm1059, %v1469, 0
  %1542 = vmatpush.bf16.msra.mxu0 0
  %1543 = vmatpush.bf16.msra.mxu0 0
  %1544 = vmatpush.bf16.msra.mxu0 0
  %1545 = vmatpush.bf16.msra.mxu0 0
  %1546 = vmatpush.bf16.msra.mxu0 0
  %1547 = vmatpush.bf16.msra.mxu0 0
  %1548 = vmatpush.bf16.msra.mxu0 %v1488
  %1549 = vmatpush.bf16.msra.mxu0 %v1486
  %1550 = vmatmul.bf16.gmra.mxu0 %v1495
  %v1551 = vpop.f32.mrf.mxu0
  %v1552 = vadd.f32 0.0, %v1551
  %v1553 = vpop.f32.mrf.mxu0
  %v1554 = vadd.f32 0.0, %v1553
  %1555 = vmatmul.bf16.gmra.mxu0 %v1498
  %v1556 = vpop.f32.mrf.mxu0
  %v1557 = vadd.f32 0.0, %v1556
  %v1558 = vpop.f32.mrf.mxu0
  %v1559 = vadd.f32 0.0, %v1558
  %1560 = vmatmul.bf16.gmra.mxu0 %v1501
  %v1561 = vpop.f32.mrf.mxu0
  %v1562 = vadd.f32 0.0, %v1561
  %v1563 = vpop.f32.mrf.mxu0
  %v1564 = vadd.f32 0.0, %v1563
  %1565 = vmatmul.bf16.gmra.mxu0 %v1504
  %v1566 = vpop.f32.mrf.mxu0
  %v1567 = vadd.f32 0.0, %v1566
  %v1568 = vpop.f32.mrf.mxu0
  %v1569 = vadd.f32 0.0, %v1568
  %1570 = vmatmul.bf16.gmra.mxu0 %v1507
  %v1571 = vpop.f32.mrf.mxu0
  %v1572 = vadd.f32 0.0, %v1571
  %v1573 = vpop.f32.mrf.mxu0
  %v1574 = vadd.f32 0.0, %v1573
  %1575 = vmatmul.bf16.gmra.mxu0 %v1510
  %v1576 = vpop.f32.mrf.mxu0
  %v1577 = vadd.f32 0.0, %v1576
  %v1578 = vpop.f32.mrf.mxu0
  %v1579 = vadd.f32 0.0, %v1578
  %1580 = vmatmul.bf16.gmra.mxu0 %v1513
  %v1581 = vpop.f32.mrf.mxu0
  %v1582 = vadd.f32 0.0, %v1581
  %v1583 = vpop.f32.mrf.mxu0
  %v1584 = vadd.f32 0.0, %v1583
  %1585 = vmatmul.bf16.gmra.mxu0 %v1516
  %v1586 = vpop.f32.mrf.mxu0
  %v1587 = vadd.f32 0.0, %v1586
  %v1588 = vpop.f32.mrf.mxu0
  %v1589 = vadd.f32 0.0, %v1588
  %1590 = vmatmul.bf16.gmra.mxu0 %v1519
  %v1591 = vpop.f32.mrf.mxu0
  %v1592 = vadd.f32 0.0, %v1591
  %v1593 = vpop.f32.mrf.mxu0
  %v1594 = vadd.f32 0.0, %v1593
  %1595 = vmatmul.bf16.gmra.mxu0 %v1522
  %v1596 = vpop.f32.mrf.mxu0
  %v1597 = vadd.f32 0.0, %v1596
  %v1598 = vpop.f32.mrf.mxu0
  %v1599 = vadd.f32 0.0, %v1598
  %1600 = vmatmul.bf16.gmra.mxu0 %v1525
  %v1601 = vpop.f32.mrf.mxu0
  %v1602 = vadd.f32 0.0, %v1601
  %v1603 = vpop.f32.mrf.mxu0
  %v1604 = vadd.f32 0.0, %v1603
  %1605 = vmatmul.bf16.gmra.mxu0 %v1528
  %v1606 = vpop.f32.mrf.mxu0
  %v1607 = vadd.f32 0.0, %v1606
  %v1608 = vpop.f32.mrf.mxu0
  %v1609 = vadd.f32 0.0, %v1608
  %1610 = vmatmul.bf16.gmra.mxu0 %v1531
  %v1611 = vpop.f32.mrf.mxu0
  %v1612 = vadd.f32 0.0, %v1611
  %v1613 = vpop.f32.mrf.mxu0
  %v1614 = vadd.f32 0.0, %v1613
  %1615 = vmatmul.bf16.gmra.mxu0 %v1534
  %v1616 = vpop.f32.mrf.mxu0
  %v1617 = vadd.f32 0.0, %v1616
  %v1618 = vpop.f32.mrf.mxu0
  %v1619 = vadd.f32 0.0, %v1618
  %1620 = vmatmul.bf16.gmra.mxu0 %v1537
  %v1621 = vpop.f32.mrf.mxu0
  %v1622 = vadd.f32 0.0, %v1621
  %v1623 = vpop.f32.mrf.mxu0
  %v1624 = vadd.f32 0.0, %v1623
  %1625 = vmatmul.bf16.gmra.mxu0 %v1540
  %v1626 = vpop.f32.mrf.mxu0
  %v1627 = vadd.f32 0.0, %v1626
  %v1628 = vpop.f32.mrf.mxu0
  %v1629 = vadd.f32 0.0, %v1628
  %1630 = vdwg.mxu0
  %1631 = vmatpush.bf16.msra.mxu0 0
  %1632 = vmatpush.bf16.msra.mxu0 0
  %1633 = vmatpush.bf16.msra.mxu0 0
  %1634 = vmatpush.bf16.msra.mxu0 0
  %1635 = vmatpush.bf16.msra.mxu0 0
  %1636 = vmatpush.bf16.msra.mxu0 0
  %1637 = vmatpush.bf16.msra.mxu0 %v1489
  %1638 = vmatpush.bf16.msra.mxu0 %v1487
  %1639 = vmatmul.bf16.gmra.mxu0 %v1495
  %v1640 = vpop.f32.mrf.mxu0
  %v1641 = vadd.f32 0.0, %v1640
  %v1642 = vpop.f32.mrf.mxu0
  %v1643 = vadd.f32 0.0, %v1642
  %1644 = vmatmul.bf16.gmra.mxu0 %v1498
  %v1645 = vpop.f32.mrf.mxu0
  %v1646 = vadd.f32 0.0, %v1645
  %v1647 = vpop.f32.mrf.mxu0
  %v1648 = vadd.f32 0.0, %v1647
  %1649 = vmatmul.bf16.gmra.mxu0 %v1501
  %v1650 = vpop.f32.mrf.mxu0
  %v1651 = vadd.f32 0.0, %v1650
  %v1652 = vpop.f32.mrf.mxu0
  %v1653 = vadd.f32 0.0, %v1652
  %1654 = vmatmul.bf16.gmra.mxu0 %v1504
  %v1655 = vpop.f32.mrf.mxu0
  %v1656 = vadd.f32 0.0, %v1655
  %v1657 = vpop.f32.mrf.mxu0
  %v1658 = vadd.f32 0.0, %v1657
  %1659 = vmatmul.bf16.gmra.mxu0 %v1507
  %v1660 = vpop.f32.mrf.mxu0
  %v1661 = vadd.f32 0.0, %v1660
  %v1662 = vpop.f32.mrf.mxu0
  %v1663 = vadd.f32 0.0, %v1662
  %1664 = vmatmul.bf16.gmra.mxu0 %v1510
  %v1665 = vpop.f32.mrf.mxu0
  %v1666 = vadd.f32 0.0, %v1665
  %v1667 = vpop.f32.mrf.mxu0
  %v1668 = vadd.f32 0.0, %v1667
  %1669 = vmatmul.bf16.gmra.mxu0 %v1513
  %v1670 = vpop.f32.mrf.mxu0
  %v1671 = vadd.f32 0.0, %v1670
  %v1672 = vpop.f32.mrf.mxu0
  %v1673 = vadd.f32 0.0, %v1672
  %1674 = vmatmul.bf16.gmra.mxu0 %v1516
  %v1675 = vpop.f32.mrf.mxu0
  %v1676 = vadd.f32 0.0, %v1675
  %v1677 = vpop.f32.mrf.mxu0
  %v1678 = vadd.f32 0.0, %v1677
  %1679 = vmatmul.bf16.gmra.mxu0 %v1519
  %v1680 = vpop.f32.mrf.mxu0
  %v1681 = vadd.f32 0.0, %v1680
  %v1682 = vpop.f32.mrf.mxu0
  %v1683 = vadd.f32 0.0, %v1682
  %1684 = vmatmul.bf16.gmra.mxu0 %v1522
  %v1685 = vpop.f32.mrf.mxu0
  %v1686 = vadd.f32 0.0, %v1685
  %v1687 = vpop.f32.mrf.mxu0
  %v1688 = vadd.f32 0.0, %v1687
  %1689 = vmatmul.bf16.gmra.mxu0 %v1525
  %v1690 = vpop.f32.mrf.mxu0
  %v1691 = vadd.f32 0.0, %v1690
  %v1692 = vpop.f32.mrf.mxu0
  %v1693 = vadd.f32 0.0, %v1692
  %1694 = vmatmul.bf16.gmra.mxu0 %v1528
  %v1695 = vpop.f32.mrf.mxu0
  %v1696 = vadd.f32 0.0, %v1695
  %v1697 = vpop.f32.mrf.mxu0
  %v1698 = vadd.f32 0.0, %v1697
  %1699 = vmatmul.bf16.gmra.mxu0 %v1531
  %v1700 = vpop.f32.mrf.mxu0
  %v1701 = vadd.f32 0.0, %v1700
  %v1702 = vpop.f32.mrf.mxu0
  %v1703 = vadd.f32 0.0, %v1702
  %1704 = vmatmul.bf16.gmra.mxu0 %v1534
  %v1705 = vpop.f32.mrf.mxu0
  %v1706 = vadd.f32 0.0, %v1705
  %v1707 = vpop.f32.mrf.mxu0
  %v1708 = vadd.f32 0.0, %v1707
  %1709 = vmatmul.bf16.gmra.mxu0 %v1537
  %v1710 = vpop.f32.mrf.mxu0
  %v1711 = vadd.f32 0.0, %v1710
  %v1712 = vpop.f32.mrf.mxu0
  %v1713 = vadd.f32 0.0, %v1712
  %1714 = vmatmul.bf16.gmra.mxu0 %v1540
  %v1715 = vpop.f32.mrf.mxu0
  %v1716 = vadd.f32 0.0, %v1715
  %v1717 = vpop.f32.mrf.mxu0
  %v1718 = vadd.f32 0.0, %v1717
  %1719 = vdwg.mxu0
  %v1724 = vunpack.c.l.b16 %v1450
  %v1725 = vunpack.c.h.b16 %v1450
  %v1726 = vunpack.c.l.b16 %v1451
  %v1727 = vunpack.c.h.b16 %v1451
  %v1728 = vunpack.c.l.b16 %v1452
  %v1729 = vunpack.c.h.b16 %v1452
  %v1730 = vunpack.c.l.b16 %v1453
  %v1731 = vunpack.c.h.b16 %v1453
  %v1732 = vpack.c.b16 %v1726, %v1724
  %v1733 = vpack.c.b16 %v1727, %v1725
  %v1734 = vpack.c.b16 %v1730, %v1728
  %v1735 = vpack.c.b16 %v1731, %v1729
  %v1741 = vsel %vm1059, %v1434, 0
  %v1744 = vsel %vm1059, %v1435, 0
  %v1747 = vsel %vm1059, %v1436, 0
  %v1750 = vsel %vm1059, %v1437, 0
  %v1753 = vsel %vm1059, %v1438, 0
  %v1756 = vsel %vm1059, %v1439, 0
  %v1759 = vsel %vm1059, %v1440, 0
  %v1762 = vsel %vm1059, %v1441, 0
  %v1765 = vsel %vm1059, %v1442, 0
  %v1768 = vsel %vm1059, %v1443, 0
  %v1771 = vsel %vm1059, %v1444, 0
  %v1774 = vsel %vm1059, %v1445, 0
  %v1777 = vsel %vm1059, %v1446, 0
  %v1780 = vsel %vm1059, %v1447, 0
  %v1783 = vsel %vm1059, %v1448, 0
  %v1786 = vsel %vm1059, %v1449, 0
  %1788 = vmatpush.bf16.msra.mxu0 0
  %1789 = vmatpush.bf16.msra.mxu0 0
  %1790 = vmatpush.bf16.msra.mxu0 0
  %1791 = vmatpush.bf16.msra.mxu0 0
  %1792 = vmatpush.bf16.msra.mxu0 0
  %1793 = vmatpush.bf16.msra.mxu0 0
  %1794 = vmatpush.bf16.msra.mxu0 %v1734
  %1795 = vmatpush.bf16.msra.mxu0 %v1732
  %1796 = vmatmul.bf16.gmra.mxu0 %v1741
  %v1797 = vpop.f32.mrf.mxu0
  %v1798 = vadd.f32 %v1552, %v1797
  %v1799 = vpop.f32.mrf.mxu0
  %v1800 = vadd.f32 %v1554, %v1799
  %1801 = vmatmul.bf16.gmra.mxu0 %v1744
  %v1802 = vpop.f32.mrf.mxu0
  %v1803 = vadd.f32 %v1557, %v1802
  %v1804 = vpop.f32.mrf.mxu0
  %v1805 = vadd.f32 %v1559, %v1804
  %1806 = vmatmul.bf16.gmra.mxu0 %v1747
  %v1807 = vpop.f32.mrf.mxu0
  %v1808 = vadd.f32 %v1562, %v1807
  %v1809 = vpop.f32.mrf.mxu0
  %v1810 = vadd.f32 %v1564, %v1809
  %1811 = vmatmul.bf16.gmra.mxu0 %v1750
  %v1812 = vpop.f32.mrf.mxu0
  %v1813 = vadd.f32 %v1567, %v1812
  %v1814 = vpop.f32.mrf.mxu0
  %v1815 = vadd.f32 %v1569, %v1814
  %1816 = vmatmul.bf16.gmra.mxu0 %v1753
  %v1817 = vpop.f32.mrf.mxu0
  %v1818 = vadd.f32 %v1572, %v1817
  %v1819 = vpop.f32.mrf.mxu0
  %v1820 = vadd.f32 %v1574, %v1819
  %1821 = vmatmul.bf16.gmra.mxu0 %v1756
  %v1822 = vpop.f32.mrf.mxu0
  %v1823 = vadd.f32 %v1577, %v1822
  %v1824 = vpop.f32.mrf.mxu0
  %v1825 = vadd.f32 %v1579, %v1824
  %1826 = vmatmul.bf16.gmra.mxu0 %v1759
  %v1827 = vpop.f32.mrf.mxu0
  %v1828 = vadd.f32 %v1582, %v1827
  %v1829 = vpop.f32.mrf.mxu0
  %v1830 = vadd.f32 %v1584, %v1829
  %1831 = vmatmul.bf16.gmra.mxu0 %v1762
  %v1832 = vpop.f32.mrf.mxu0
  %v1833 = vadd.f32 %v1587, %v1832
  %v1834 = vpop.f32.mrf.mxu0
  %v1835 = vadd.f32 %v1589, %v1834
  %1836 = vmatmul.bf16.gmra.mxu0 %v1765
  %v1837 = vpop.f32.mrf.mxu0
  %v1838 = vadd.f32 %v1592, %v1837
  %v1839 = vpop.f32.mrf.mxu0
  %v1840 = vadd.f32 %v1594, %v1839
  %1841 = vmatmul.bf16.gmra.mxu0 %v1768
  %v1842 = vpop.f32.mrf.mxu0
  %v1843 = vadd.f32 %v1597, %v1842
  %v1844 = vpop.f32.mrf.mxu0
  %v1845 = vadd.f32 %v1599, %v1844
  %1846 = vmatmul.bf16.gmra.mxu0 %v1771
  %v1847 = vpop.f32.mrf.mxu0
  %v1848 = vadd.f32 %v1602, %v1847
  %v1849 = vpop.f32.mrf.mxu0
  %v1850 = vadd.f32 %v1604, %v1849
  %1851 = vmatmul.bf16.gmra.mxu0 %v1774
  %v1852 = vpop.f32.mrf.mxu0
  %v1853 = vadd.f32 %v1607, %v1852
  %v1854 = vpop.f32.mrf.mxu0
  %v1855 = vadd.f32 %v1609, %v1854
  %1856 = vmatmul.bf16.gmra.mxu0 %v1777
  %v1857 = vpop.f32.mrf.mxu0
  %v1858 = vadd.f32 %v1612, %v1857
  %v1859 = vpop.f32.mrf.mxu0
  %v1860 = vadd.f32 %v1614, %v1859
  %1861 = vmatmul.bf16.gmra.mxu0 %v1780
  %v1862 = vpop.f32.mrf.mxu0
  %v1863 = vadd.f32 %v1617, %v1862
  %v1864 = vpop.f32.mrf.mxu0
  %v1865 = vadd.f32 %v1619, %v1864
  %1866 = vmatmul.bf16.gmra.mxu0 %v1783
  %v1867 = vpop.f32.mrf.mxu0
  %v1868 = vadd.f32 %v1622, %v1867
  %v1869 = vpop.f32.mrf.mxu0
  %v1870 = vadd.f32 %v1624, %v1869
  %1871 = vmatmul.bf16.gmra.mxu0 %v1786
  %v1872 = vpop.f32.mrf.mxu0
  %v1873 = vadd.f32 %v1627, %v1872
  %v1874 = vpop.f32.mrf.mxu0
  %v1875 = vadd.f32 %v1629, %v1874
  %1876 = vdwg.mxu0
  %1877 = vmatpush.bf16.msra.mxu0 0
  %1878 = vmatpush.bf16.msra.mxu0 0
  %1879 = vmatpush.bf16.msra.mxu0 0
  %1880 = vmatpush.bf16.msra.mxu0 0
  %1881 = vmatpush.bf16.msra.mxu0 0
  %1882 = vmatpush.bf16.msra.mxu0 0
  %1883 = vmatpush.bf16.msra.mxu0 %v1735
  %1884 = vmatpush.bf16.msra.mxu0 %v1733
  %1885 = vmatmul.bf16.gmra.mxu0 %v1741
  %v1886 = vpop.f32.mrf.mxu0
  %v1887 = vadd.f32 %v1641, %v1886
  %v1888 = vpop.f32.mrf.mxu0
  %v1889 = vadd.f32 %v1643, %v1888
  %1890 = vmatmul.bf16.gmra.mxu0 %v1744
  %v1891 = vpop.f32.mrf.mxu0
  %v1892 = vadd.f32 %v1646, %v1891
  %v1893 = vpop.f32.mrf.mxu0
  %v1894 = vadd.f32 %v1648, %v1893
  %1895 = vmatmul.bf16.gmra.mxu0 %v1747
  %v1896 = vpop.f32.mrf.mxu0
  %v1897 = vadd.f32 %v1651, %v1896
  %v1898 = vpop.f32.mrf.mxu0
  %v1899 = vadd.f32 %v1653, %v1898
  %1900 = vmatmul.bf16.gmra.mxu0 %v1750
  %v1901 = vpop.f32.mrf.mxu0
  %v1902 = vadd.f32 %v1656, %v1901
  %v1903 = vpop.f32.mrf.mxu0
  %v1904 = vadd.f32 %v1658, %v1903
  %1905 = vmatmul.bf16.gmra.mxu0 %v1753
  %v1906 = vpop.f32.mrf.mxu0
  %v1907 = vadd.f32 %v1661, %v1906
  %v1908 = vpop.f32.mrf.mxu0
  %v1909 = vadd.f32 %v1663, %v1908
  %1910 = vmatmul.bf16.gmra.mxu0 %v1756
  %v1911 = vpop.f32.mrf.mxu0
  %v1912 = vadd.f32 %v1666, %v1911
  %v1913 = vpop.f32.mrf.mxu0
  %v1914 = vadd.f32 %v1668, %v1913
  %1915 = vmatmul.bf16.gmra.mxu0 %v1759
  %v1916 = vpop.f32.mrf.mxu0
  %v1917 = vadd.f32 %v1671, %v1916
  %v1918 = vpop.f32.mrf.mxu0
  %v1919 = vadd.f32 %v1673, %v1918
  %1920 = vmatmul.bf16.gmra.mxu0 %v1762
  %v1921 = vpop.f32.mrf.mxu0
  %v1922 = vadd.f32 %v1676, %v1921
  %v1923 = vpop.f32.mrf.mxu0
  %v1924 = vadd.f32 %v1678, %v1923
  %1925 = vmatmul.bf16.gmra.mxu0 %v1765
  %v1926 = vpop.f32.mrf.mxu0
  %v1927 = vadd.f32 %v1681, %v1926
  %v1928 = vpop.f32.mrf.mxu0
  %v1929 = vadd.f32 %v1683, %v1928
  %1930 = vmatmul.bf16.gmra.mxu0 %v1768
  %v1931 = vpop.f32.mrf.mxu0
  %v1932 = vadd.f32 %v1686, %v1931
  %v1933 = vpop.f32.mrf.mxu0
  %v1934 = vadd.f32 %v1688, %v1933
  %1935 = vmatmul.bf16.gmra.mxu0 %v1771
  %v1936 = vpop.f32.mrf.mxu0
  %v1937 = vadd.f32 %v1691, %v1936
  %v1938 = vpop.f32.mrf.mxu0
  %v1939 = vadd.f32 %v1693, %v1938
  %1940 = vmatmul.bf16.gmra.mxu0 %v1774
  %v1941 = vpop.f32.mrf.mxu0
  %v1942 = vadd.f32 %v1696, %v1941
  %v1943 = vpop.f32.mrf.mxu0
  %v1944 = vadd.f32 %v1698, %v1943
  %1945 = vmatmul.bf16.gmra.mxu0 %v1777
  %v1946 = vpop.f32.mrf.mxu0
  %v1947 = vadd.f32 %v1701, %v1946
  %v1948 = vpop.f32.mrf.mxu0
  %v1949 = vadd.f32 %v1703, %v1948
  %1950 = vmatmul.bf16.gmra.mxu0 %v1780
  %v1951 = vpop.f32.mrf.mxu0
  %v1952 = vadd.f32 %v1706, %v1951
  %v1953 = vpop.f32.mrf.mxu0
  %v1954 = vadd.f32 %v1708, %v1953
  %1955 = vmatmul.bf16.gmra.mxu0 %v1783
  %v1956 = vpop.f32.mrf.mxu0
  %v1957 = vadd.f32 %v1711, %v1956
  %v1958 = vpop.f32.mrf.mxu0
  %v1959 = vadd.f32 %v1713, %v1958
  %1960 = vmatmul.bf16.gmra.mxu0 %v1786
  %v1961 = vpop.f32.mrf.mxu0
  %v1962 = vadd.f32 %v1716, %v1961
  %v1963 = vpop.f32.mrf.mxu0
  %v1964 = vadd.f32 %v1718, %v1963
  %1965 = vdwg.mxu0
  %v1966 = vld [vmem:[%s12] sm:$0x3]
  %v1968 = vperm.slane %v1966, 0
  %v1969 = vperm.slane %v1966, 1
  %v1972 = vadd.f32 %v1798, %v1968
  %v1973 = vadd.f32 %v1887, %v1969
  %v1974 = vadd.f32 %v1800, %v1968
  %v1975 = vadd.f32 %v1889, %v1969
  %v1976 = vadd.f32 %v1803, %v1968
  %v1977 = vadd.f32 %v1892, %v1969
  %v1978 = vadd.f32 %v1805, %v1968
  %v1979 = vadd.f32 %v1894, %v1969
  %v1980 = vadd.f32 %v1808, %v1968
  %v1981 = vadd.f32 %v1897, %v1969
  %v1982 = vadd.f32 %v1810, %v1968
  %v1983 = vadd.f32 %v1899, %v1969
  %v1984 = vadd.f32 %v1813, %v1968
  %v1985 = vadd.f32 %v1902, %v1969
  %v1986 = vadd.f32 %v1815, %v1968
  %v1987 = vadd.f32 %v1904, %v1969
  %v1988 = vadd.f32 %v1818, %v1968
  %v1989 = vadd.f32 %v1907, %v1969
  %v1990 = vadd.f32 %v1820, %v1968
  %v1991 = vadd.f32 %v1909, %v1969
  %v1992 = vadd.f32 %v1823, %v1968
  %v1993 = vadd.f32 %v1912, %v1969
  %v1994 = vadd.f32 %v1825, %v1968
  %v1995 = vadd.f32 %v1914, %v1969
  %v1996 = vadd.f32 %v1828, %v1968
  %v1997 = vadd.f32 %v1917, %v1969
  %v1998 = vadd.f32 %v1830, %v1968
  %v1999 = vadd.f32 %v1919, %v1969
  %v2000 = vadd.f32 %v1833, %v1968
  %v2001 = vadd.f32 %v1922, %v1969
  %v2002 = vadd.f32 %v1835, %v1968
  %v2003 = vadd.f32 %v1924, %v1969
  %v2004 = vadd.f32 %v1838, %v1968
  %v2005 = vadd.f32 %v1927, %v1969
  %v2006 = vadd.f32 %v1840, %v1968
  %v2007 = vadd.f32 %v1929, %v1969
  %v2008 = vadd.f32 %v1843, %v1968
  %v2009 = vadd.f32 %v1932, %v1969
  %v2010 = vadd.f32 %v1845, %v1968
  %v2011 = vadd.f32 %v1934, %v1969
  %v2012 = vadd.f32 %v1848, %v1968
  %v2013 = vadd.f32 %v1937, %v1969
  %v2014 = vadd.f32 %v1850, %v1968
  %v2015 = vadd.f32 %v1939, %v1969
  %v2016 = vadd.f32 %v1853, %v1968
  %v2017 = vadd.f32 %v1942, %v1969
  %v2018 = vadd.f32 %v1855, %v1968
  %v2019 = vadd.f32 %v1944, %v1969
  %v2020 = vadd.f32 %v1858, %v1968
  %v2021 = vadd.f32 %v1947, %v1969
  %v2022 = vadd.f32 %v1860, %v1968
  %v2023 = vadd.f32 %v1949, %v1969
  %v2024 = vadd.f32 %v1863, %v1968
  %v2025 = vadd.f32 %v1952, %v1969
  %v2026 = vadd.f32 %v1865, %v1968
  %v2027 = vadd.f32 %v1954, %v1969
  %v2028 = vadd.f32 %v1868, %v1968
  %v2029 = vadd.f32 %v1957, %v1969
  %v2030 = vadd.f32 %v1870, %v1968
  %v2031 = vadd.f32 %v1959, %v1969
  %v2032 = vadd.f32 %v1873, %v1968
  %v2033 = vadd.f32 %v1962, %v1969
  %v2034 = vadd.f32 %v1875, %v1968
  %v2035 = vadd.f32 %v1964, %v1969
  %2036 = vst [vmem:[%s13] sm:$0xff] %v1972
  %2037 = vst [vmem:[%s13 + $0x8] sm:$0xff] %v1973
  %2038 = vst [vmem:[%s13 + $0x10] sm:$0xff] %v1974
  %2039 = vst [vmem:[%s13 + $0x18] sm:$0xff] %v1975
  %2040 = vst [vmem:[%s13 + $0x20] sm:$0xff] %v1976
  %2041 = vst [vmem:[%s13 + $0x28] sm:$0xff] %v1977
  %2042 = vst [vmem:[%s13 + $0x30] sm:$0xff] %v1978
  %2043 = vst [vmem:[%s13 + $0x38] sm:$0xff] %v1979
  %2044 = vst [vmem:[%s13 + $0x40] sm:$0xff] %v1980
  %2045 = vst [vmem:[%s13 + $0x48] sm:$0xff] %v1981
  %2046 = vst [vmem:[%s13 + $0x50] sm:$0xff] %v1982
  %2047 = vst [vmem:[%s13 + $0x58] sm:$0xff] %v1983
  %2048 = vst [vmem:[%s13 + $0x60] sm:$0xff] %v1984
  %2049 = vst [vmem:[%s13 + $0x68] sm:$0xff] %v1985
  %2050 = vst [vmem:[%s13 + $0x70] sm:$0xff] %v1986
  %2051 = vst [vmem:[%s13 + $0x78] sm:$0xff] %v1987
  %2052 = vst [vmem:[%s13 + $0x80] sm:$0xff] %v1988
  %2053 = vst [vmem:[%s13 + $0x88] sm:$0xff] %v1989
  %2054 = vst [vmem:[%s13 + $0x90] sm:$0xff] %v1990
  %2055 = vst [vmem:[%s13 + $0x98] sm:$0xff] %v1991
  %2056 = vst [vmem:[%s13 + $0xa0] sm:$0xff] %v1992
  %2057 = vst [vmem:[%s13 + $0xa8] sm:$0xff] %v1993
  %2058 = vst [vmem:[%s13 + $0xb0] sm:$0xff] %v1994
  %2059 = vst [vmem:[%s13 + $0xb8] sm:$0xff] %v1995
  %2060 = vst [vmem:[%s13 + $0xc0] sm:$0xff] %v1996
  %2061 = vst [vmem:[%s13 + $0xc8] sm:$0xff] %v1997
  %2062 = vst [vmem:[%s13 + $0xd0] sm:$0xff] %v1998
  %2063 = vst [vmem:[%s13 + $0xd8] sm:$0xff] %v1999
  %2064 = vst [vmem:[%s13 + $0xe0] sm:$0xff] %v2000
  %2065 = vst [vmem:[%s13 + $0xe8] sm:$0xff] %v2001
  %2066 = vst [vmem:[%s13 + $0xf0] sm:$0xff] %v2002
  %2067 = vst [vmem:[%s13 + $0xf8] sm:$0xff] %v2003
  %2068 = vst [vmem:[%s13 + $0x100] sm:$0xff] %v2004
  %2069 = vst [vmem:[%s13 + $0x108] sm:$0xff] %v2005
  %2070 = vst [vmem:[%s13 + $0x110] sm:$0xff] %v2006
  %2071 = vst [vmem:[%s13 + $0x118] sm:$0xff] %v2007
  %2072 = vst [vmem:[%s13 + $0x120] sm:$0xff] %v2008
  %2073 = vst [vmem:[%s13 + $0x128] sm:$0xff] %v2009
  %2074 = vst [vmem:[%s13 + $0x130] sm:$0xff] %v2010
  %2075 = vst [vmem:[%s13 + $0x138] sm:$0xff] %v2011
  %2076 = vst [vmem:[%s13 + $0x140] sm:$0xff] %v2012
  %2077 = vst [vmem:[%s13 + $0x148] sm:$0xff] %v2013
  %2078 = vst [vmem:[%s13 + $0x150] sm:$0xff] %v2014
  %2079 = vst [vmem:[%s13 + $0x158] sm:$0xff] %v2015
  %2080 = vst [vmem:[%s13 + $0x160] sm:$0xff] %v2016
  %2081 = vst [vmem:[%s13 + $0x168] sm:$0xff] %v2017
  %2082 = vst [vmem:[%s13 + $0x170] sm:$0xff] %v2018
  %2083 = vst [vmem:[%s13 + $0x178] sm:$0xff] %v2019
  %2084 = vst [vmem:[%s13 + $0x180] sm:$0xff] %v2020
  %2085 = vst [vmem:[%s13 + $0x188] sm:$0xff] %v2021
  %2086 = vst [vmem:[%s13 + $0x190] sm:$0xff] %v2022
  %2087 = vst [vmem:[%s13 + $0x198] sm:$0xff] %v2023
  %2088 = vst [vmem:[%s13 + $0x1a0] sm:$0xff] %v2024
  %2089 = vst [vmem:[%s13 + $0x1a8] sm:$0xff] %v2025
  %2090 = vst [vmem:[%s13 + $0x1b0] sm:$0xff] %v2026
  %2091 = vst [vmem:[%s13 + $0x1b8] sm:$0xff] %v2027
  %2092 = vst [vmem:[%s13 + $0x1c0] sm:$0xff] %v2028
  %2093 = vst [vmem:[%s13 + $0x1c8] sm:$0xff] %v2029
  %2094 = vst [vmem:[%s13 + $0x1d0] sm:$0xff] %v2030
  %2095 = vst [vmem:[%s13 + $0x1d8] sm:$0xff] %v2031
  %2096 = vst [vmem:[%s13 + $0x1e0] sm:$0xff] %v2032
  %2097 = vst [vmem:[%s13 + $0x1e8] sm:$0xff] %v2033
  %2098 = vst [vmem:[%s13 + $0x1f0] sm:$0xff] %v2034
  %2099 = vst [vmem:[%s13 + $0x1f8] sm:$0xff] %v2035
  // Predicated region
  $region54: #{dmvstnet_forward.2} parent=0 // pred_check
    _
  $region55: #{dmvstnet_forward.2} parent=0 // pred_check_branch
    %2101 = sbr.rel (0) target = $region57
  $region56: #{dmvstnet_forward.2} parent=0 // pred_region
    _
  $region57: #{dmvstnet_forward.2} parent=0 // pred_fallthru
    _
  // Predicated region
  $region58: #{dmvstnet_forward.2} parent=0 // pred_check
    _
  $region59: #{dmvstnet_forward.2} parent=0 // pred_check_branch
    %2103 = sbr.rel (0) target = $region61
  $region60: #{dmvstnet_forward.2} parent=0 // pred_region
    _
  $region61: #{dmvstnet_forward.2} parent=0 // pred_fallthru
    _

// kernel: dmvstnet_forward.3
$region0: #{dmvstnet_forward.3}
  #allocation0 [shape = 'u32[]', space=smem, size = 0x4, offset = 0x4, fixed_abs, tag = 'smem constant byte address 0x4 - core index']
  #allocation1 [shape = 'u32[72,128]{1,0:T(1,128)}', space=vmem, size = 0x9000, scoped, tag = 'internal scratch']
  #allocation2 [shape = 'f32[32,64]{1,0:T(8,128)}', space=vmem, size = 0x4000, scoped, tag = 'scratch operand']
  #allocation3 [shape = 'f32[32,64]{1,0:T(8,128)}', space=vmem, size = 0x4000, scoped, tag = 'scratch operand']
  #allocation4 [shape = 'f32[8,32,64]{2,1,0:T(8,128)}', space=vmem, size = 0x20000, scoped, tag = 'scratch operand']
  %s0 = inlined_call_operand.vmem [shape: f32[8,32,256], index: 0, kind: input, shape index: {}]
  %s1 = inlined_call_operand.vmem [shape: f32[64,256], index: 1, kind: input, shape index: {}]
  %s2 = inlined_call_operand.vmem [shape: f32[2,64], index: 2, kind: input, shape index: {}]
  %s3 = inlined_call_operand.vmem [shape: f32[2,256], index: 3, kind: input, shape index: {}]
  %s4 = inlined_call_operand.vmem [shape: f32[2,256], index: 4, kind: output, shape index: {}]
  %s5 = sld [smem:[#allocation0]]
  $region26: #{dmvstnet_forward.3} parent=0
    _
  %s7 = ssub.s32 1, %s5
  %s8 = scalar_select 0, %s7, %s5
  // Predicated region
  $region2: #{dmvstnet_forward.3} parent=0 // pred_check
    _
  $region3: #{dmvstnet_forward.3} parent=0 // pred_check_branch
    %10 = sbr.rel (0) target = $region5
  $region4: #{dmvstnet_forward.3} parent=0 // pred_region
    _
  $region5: #{dmvstnet_forward.3} parent=0 // pred_fallthru
    _
  // Predicated region
  $region6: #{dmvstnet_forward.3} parent=0 // pred_check
    _
  $region7: #{dmvstnet_forward.3} parent=0 // pred_check_branch
    %12 = sbr.rel (0) target = $region9
  $region8: #{dmvstnet_forward.3} parent=0 // pred_region
    _
  $region9: #{dmvstnet_forward.3} parent=0 // pred_fallthru
    _
  // Predicated region
  $region10: #{dmvstnet_forward.3} parent=0 // pred_check
    _
  $region11: #{dmvstnet_forward.3} parent=0 // pred_check_branch
    %14 = sbr.rel (0) target = $region13
  $region12: #{dmvstnet_forward.3} parent=0 // pred_region
    _
  $region13: #{dmvstnet_forward.3} parent=0 // pred_fallthru
    _
  // Predicated region
  $region14: #{dmvstnet_forward.3} parent=0 // pred_check
    _
  $region15: #{dmvstnet_forward.3} parent=0 // pred_check_branch
    %16 = sbr.rel (0) target = $region17
  $region16: #{dmvstnet_forward.3} parent=0 // pred_region
    _
  $region17: #{dmvstnet_forward.3} parent=0 // pred_fallthru
    _
  %vm17 = vcmask 523264
  %18 = vst.msk [vmem:[#allocation2] sm:$0xff] %vm17, 0.0
  %19 = vst.msk [vmem:[#allocation2 + $0x8] sm:$0xff] %vm17, 0.0
  %20 = vst.msk [vmem:[#allocation2 + $0x10] sm:$0xff] %vm17, 0.0
  %21 = vst.msk [vmem:[#allocation2 + $0x18] sm:$0xff] %vm17, 0.0
  %22 = vst.msk [vmem:[#allocation3] sm:$0xff] %vm17, 0.0
  %23 = vst.msk [vmem:[#allocation3 + $0x8] sm:$0xff] %vm17, 0.0
  %24 = vst.msk [vmem:[#allocation3 + $0x10] sm:$0xff] %vm17, 0.0
  %25 = vst.msk [vmem:[#allocation3 + $0x18] sm:$0xff] %vm17, 0.0
  %v26 = vld [vmem:[#allocation2] sm:$0xff]
  %v27 = vld [vmem:[#allocation2 + $0x8] sm:$0xff]
  %v28 = vld [vmem:[#allocation2 + $0x10] sm:$0xff]
  %v29 = vld [vmem:[#allocation2 + $0x18] sm:$0xff]
  %v30 = vld [vmem:[#allocation3] sm:$0xff]
  %v31 = vld [vmem:[#allocation3 + $0x8] sm:$0xff]
  %v32 = vld [vmem:[#allocation3 + $0x10] sm:$0xff]
  %v33 = vld [vmem:[#allocation3 + $0x18] sm:$0xff]
  %v34 = vld [vmem:[%s0] sm:$0xff]
  %v35 = vld [vmem:[%s0 + $0x8] sm:$0xff]
  %v36 = vld [vmem:[%s0 + $0x10] sm:$0xff]
  %v37 = vld [vmem:[%s0 + $0x18] sm:$0xff]
  %v38 = vld [vmem:[%s0 + $0x20] sm:$0xff]
  %v39 = vld [vmem:[%s0 + $0x28] sm:$0xff]
  %v40 = vld [vmem:[%s0 + $0x30] sm:$0xff]
  %v41 = vld [vmem:[%s0 + $0x38] sm:$0xff]
  %v42 = vld [vmem:[%s1] sm:$0xff]
  %v43 = vld [vmem:[%s1 + $0x8] sm:$0xff]
  %v44 = vld [vmem:[%s1 + $0x10] sm:$0xff]
  %v45 = vld [vmem:[%s1 + $0x18] sm:$0xff]
  %v46 = vld [vmem:[%s1 + $0x20] sm:$0xff]
  %v47 = vld [vmem:[%s1 + $0x28] sm:$0xff]
  %v48 = vld [vmem:[%s1 + $0x30] sm:$0xff]
  %v49 = vld [vmem:[%s1 + $0x38] sm:$0xff]
  %v50 = vld [vmem:[%s1 + $0x40] sm:$0xff]
  %v51 = vld [vmem:[%s1 + $0x48] sm:$0xff]
  %v52 = vld [vmem:[%s1 + $0x50] sm:$0xff]
  %v53 = vld [vmem:[%s1 + $0x58] sm:$0xff]
  %v54 = vld [vmem:[%s1 + $0x60] sm:$0xff]
  %v55 = vld [vmem:[%s1 + $0x68] sm:$0xff]
  %v56 = vld [vmem:[%s1 + $0x70] sm:$0xff]
  %v57 = vld [vmem:[%s1 + $0x78] sm:$0xff]
  %v59 = vsel %vm17, %v26, 0
  %v62 = vsel %vm17, %v27, 0
  %v65 = vsel %vm17, %v28, 0
  %v68 = vsel %vm17, %v29, 0
  %70 = vmatpush.msra.mxu0 0.0
  %71 = vmatpush.msra.mxu0 0.0
  %72 = vmatpush.msra.mxu0 0.0
  %73 = vmatpush.msra.mxu0 0.0
  %74 = vmatpush.msra.mxu0 0.0
  %75 = vmatpush.msra.mxu0 0.0
  %76 = vmatpush.msra.mxu0 0.0
  %77 = vmatpush.msra.mxu0 0.0
  %78 = vmatpush.msra.mxu0 %v56
  %79 = vmatpush.msra.mxu0 %v54
  %80 = vmatpush.msra.mxu0 %v52
  %81 = vmatpush.msra.mxu0 %v50
  %82 = vmatpush.msra.mxu0 %v48
  %83 = vmatpush.msra.mxu0 %v46
  %84 = vmatpush.msra.mxu0 %v44
  %85 = vmatpush.msra.mxu0 %v42
  %86 = vmatmul.f32.gmra.mxu0 %v59
  %v87 = vpop.f32.mrf.mxu0
  %v88 = vadd.f32 0.0, %v87
  %89 = vmatmul.f32.gmra.mxu0 %v62
  %v90 = vpop.f32.mrf.mxu0
  %v91 = vadd.f32 0.0, %v90
  %92 = vmatmul.f32.gmra.mxu0 %v65
  %v93 = vpop.f32.mrf.mxu0
  %v94 = vadd.f32 0.0, %v93
  %95 = vmatmul.f32.gmra.mxu0 %v68
  %v96 = vpop.f32.mrf.mxu0
  %v97 = vadd.f32 0.0, %v96
  %98 = vdwg.mxu0
  %99 = vmatpush.msra.mxu0 0.0
  %100 = vmatpush.msra.mxu0 0.0
  %101 = vmatpush.msra.mxu0 0.0
  %102 = vmatpush.msra.mxu0 0.0
  %103 = vmatpush.msra.mxu0 0.0
  %104 = vmatpush.msra.mxu0 0.0
  %105 = vmatpush.msra.mxu0 0.0
  %106 = vmatpush.msra.mxu0 0.0
  %107 = vmatpush.msra.mxu0 %v57
  %108 = vmatpush.msra.mxu0 %v55
  %109 = vmatpush.msra.mxu0 %v53
  %110 = vmatpush.msra.mxu0 %v51
  %111 = vmatpush.msra.mxu0 %v49
  %112 = vmatpush.msra.mxu0 %v47
  %113 = vmatpush.msra.mxu0 %v45
  %114 = vmatpush.msra.mxu0 %v43
  %115 = vmatmul.f32.gmra.mxu0 %v59
  %v116 = vpop.f32.mrf.mxu0
  %v117 = vadd.f32 0.0, %v116
  %118 = vmatmul.f32.gmra.mxu0 %v62
  %v119 = vpop.f32.mrf.mxu0
  %v120 = vadd.f32 0.0, %v119
  %121 = vmatmul.f32.gmra.mxu0 %v65
  %v122 = vpop.f32.mrf.mxu0
  %v123 = vadd.f32 0.0, %v122
  %124 = vmatmul.f32.gmra.mxu0 %v68
  %v125 = vpop.f32.mrf.mxu0
  %v126 = vadd.f32 0.0, %v125
  %127 = vdwg.mxu0
  %v128 = vadd.f32 %v34, %v88
  %v129 = vadd.f32 %v35, %v117
  %v130 = vadd.f32 %v36, %v91
  %v131 = vadd.f32 %v37, %v120
  %v132 = vadd.f32 %v38, %v94
  %v133 = vadd.f32 %v39, %v123
  %v134 = vadd.f32 %v40, %v97
  %v135 = vadd.f32 %v41, %v126
  %v136 = vxor.u32 %v128, 2147483648
  %v137 = vxor.u32 %v129, 2147483648
  %v138 = vxor.u32 %v130, 2147483648
  %v139 = vxor.u32 %v131, 2147483648
  %v140 = vxor.u32 %v132, 2147483648
  %v141 = vxor.u32 %v133, 2147483648
  %v142 = vxor.u32 %v134, 2147483648
  %v143 = vxor.u32 %v135, 2147483648
  %v144 = vmul.f32 %v136, 1.442695
  %v145 = vpow.pop %v144
  %v146 = vmul.f32 %v137, 1.442695
  %v147 = vpow.pop %v146
  %v148 = vmul.f32 %v138, 1.442695
  %v149 = vpow.pop %v148
  %v150 = vmul.f32 %v139, 1.442695
  %v151 = vpow.pop %v150
  %v152 = vmul.f32 %v140, 1.442695
  %v153 = vpow.pop %v152
  %v154 = vmul.f32 %v141, 1.442695
  %v155 = vpow.pop %v154
  %v156 = vmul.f32 %v142, 1.442695
  %v157 = vpow.pop %v156
  %v158 = vmul.f32 %v143, 1.442695
  %v159 = vpow.pop %v158
  %v160 = vadd.f32 %v145, 1.0
  %v161 = vadd.f32 %v147, 1.0
  %v162 = vadd.f32 %v149, 1.0
  %v163 = vadd.f32 %v151, 1.0
  %v164 = vadd.f32 %v153, 1.0
  %v165 = vadd.f32 %v155, 1.0
  %v166 = vadd.f32 %v157, 1.0
  %v167 = vadd.f32 %v159, 1.0
  %v168 = vrcp.pop %v160
  %v169 = vmul.f32 %v160, %v168
  %v170 = vsub.f32 1.0, %v169
  %v171 = vmul.f32 %v168, %v170
  %v172 = vadd.f32 %v168, %v171
  %vm173 = vweird.f32 %v160
  %vm174 = vweird.f32 %v168
  %vm175 = vmor %vm173, %vm174
  %v176 = vsel %vm175, %v168, %v172
  %v177 = vand.u32 2147483647, %v160
  %vm178 = vcmp.eq.f32.partialorder %v177, 8.507059e+37
  %v179 = vand.u32 %v160, 2147483648
  %v180 = vor.u32 1.1754944e-38, %v179
  %v181 = vsel %vm178, %v180, %v176
  %v182 = vmul.f32 1.0, %v181
  %v183 = vrcp.pop %v161
  %v184 = vmul.f32 %v161, %v183
  %v185 = vsub.f32 1.0, %v184
  %v186 = vmul.f32 %v183, %v185
  %v187 = vadd.f32 %v183, %v186
  %vm188 = vweird.f32 %v161
  %vm189 = vweird.f32 %v183
  %vm190 = vmor %vm188, %vm189
  %v191 = vsel %vm190, %v183, %v187
  %v192 = vand.u32 2147483647, %v161
  %vm193 = vcmp.eq.f32.partialorder %v192, 8.507059e+37
  %v194 = vand.u32 %v161, 2147483648
  %v195 = vor.u32 1.1754944e-38, %v194
  %v196 = vsel %vm193, %v195, %v191
  %v197 = vmul.f32 1.0, %v196
  %v198 = vrcp.pop %v162
  %v199 = vmul.f32 %v162, %v198
  %v200 = vsub.f32 1.0, %v199
  %v201 = vmul.f32 %v198, %v200
  %v202 = vadd.f32 %v198, %v201
  %vm203 = vweird.f32 %v162
  %vm204 = vweird.f32 %v198
  %vm205 = vmor %vm203, %vm204
  %v206 = vsel %vm205, %v198, %v202
  %v207 = vand.u32 2147483647, %v162
  %vm208 = vcmp.eq.f32.partialorder %v207, 8.507059e+37
  %v209 = vand.u32 %v162, 2147483648
  %v210 = vor.u32 1.1754944e-38, %v209
  %v211 = vsel %vm208, %v210, %v206
  %v212 = vmul.f32 1.0, %v211
  %v213 = vrcp.pop %v163
  %v214 = vmul.f32 %v163, %v213
  %v215 = vsub.f32 1.0, %v214
  %v216 = vmul.f32 %v213, %v215
  %v217 = vadd.f32 %v213, %v216
  %vm218 = vweird.f32 %v163
  %vm219 = vweird.f32 %v213
  %vm220 = vmor %vm218, %vm219
  %v221 = vsel %vm220, %v213, %v217
  %v222 = vand.u32 2147483647, %v163
  %vm223 = vcmp.eq.f32.partialorder %v222, 8.507059e+37
  %v224 = vand.u32 %v163, 2147483648
  %v225 = vor.u32 1.1754944e-38, %v224
  %v226 = vsel %vm223, %v225, %v221
  %v227 = vmul.f32 1.0, %v226
  %v228 = vrcp.pop %v164
  %v229 = vmul.f32 %v164, %v228
  %v230 = vsub.f32 1.0, %v229
  %v231 = vmul.f32 %v228, %v230
  %v232 = vadd.f32 %v228, %v231
  %vm233 = vweird.f32 %v164
  %vm234 = vweird.f32 %v228
  %vm235 = vmor %vm233, %vm234
  %v236 = vsel %vm235, %v228, %v232
  %v237 = vand.u32 2147483647, %v164
  %vm238 = vcmp.eq.f32.partialorder %v237, 8.507059e+37
  %v239 = vand.u32 %v164, 2147483648
  %v240 = vor.u32 1.1754944e-38, %v239
  %v241 = vsel %vm238, %v240, %v236
  %v242 = vmul.f32 1.0, %v241
  %v243 = vrcp.pop %v165
  %v244 = vmul.f32 %v165, %v243
  %v245 = vsub.f32 1.0, %v244
  %v246 = vmul.f32 %v243, %v245
  %v247 = vadd.f32 %v243, %v246
  %vm248 = vweird.f32 %v165
  %vm249 = vweird.f32 %v243
  %vm250 = vmor %vm248, %vm249
  %v251 = vsel %vm250, %v243, %v247
  %v252 = vand.u32 2147483647, %v165
  %vm253 = vcmp.eq.f32.partialorder %v252, 8.507059e+37
  %v254 = vand.u32 %v165, 2147483648
  %v255 = vor.u32 1.1754944e-38, %v254
  %v256 = vsel %vm253, %v255, %v251
  %v257 = vmul.f32 1.0, %v256
  %v258 = vrcp.pop %v166
  %v259 = vmul.f32 %v166, %v258
  %v260 = vsub.f32 1.0, %v259
  %v261 = vmul.f32 %v258, %v260
  %v262 = vadd.f32 %v258, %v261
  %vm263 = vweird.f32 %v166
  %vm264 = vweird.f32 %v258
  %vm265 = vmor %vm263, %vm264
  %v266 = vsel %vm265, %v258, %v262
  %v267 = vand.u32 2147483647, %v166
  %vm268 = vcmp.eq.f32.partialorder %v267, 8.507059e+37
  %v269 = vand.u32 %v166, 2147483648
  %v270 = vor.u32 1.1754944e-38, %v269
  %v271 = vsel %vm268, %v270, %v266
  %v272 = vmul.f32 1.0, %v271
  %v273 = vrcp.pop %v167
  %v274 = vmul.f32 %v167, %v273
  %v275 = vsub.f32 1.0, %v274
  %v276 = vmul.f32 %v273, %v275
  %v277 = vadd.f32 %v273, %v276
  %vm278 = vweird.f32 %v167
  %vm279 = vweird.f32 %v273
  %vm280 = vmor %vm278, %vm279
  %v281 = vsel %vm280, %v273, %v277
  %v282 = vand.u32 2147483647, %v167
  %vm283 = vcmp.eq.f32.partialorder %v282, 8.507059e+37
  %v284 = vand.u32 %v167, 2147483648
  %v285 = vor.u32 1.1754944e-38, %v284
  %v286 = vsel %vm283, %v285, %v281
  %v287 = vmul.f32 1.0, %v286
  %v288 = vtanh.pop %v129
  %v289 = vtanh.pop %v131
  %v290 = vtanh.pop %v133
  %v291 = vtanh.pop %v135
  %296 = vrot.lane.b32.xlu0 %v30, 64
  %v297 = vpop.permute.xlu0 %296
  %298 = vrot.lane.b32.xlu0 %v31, 64
  %v299 = vpop.permute.xlu0 %298
  %300 = vrot.lane.b32.xlu0 %v32, 64
  %v301 = vpop.permute.xlu0 %300
  %302 = vrot.lane.b32.xlu0 %v33, 64
  %v303 = vpop.permute.xlu0 %302
  %v308 = vmul.f32 %v182, %v297
  %v309 = vmul.f32 %v212, %v299
  %v310 = vmul.f32 %v242, %v301
  %v311 = vmul.f32 %v272, %v303
  %316 = vrot.lane.b32.xlu0 %v288, 64
  %v317 = vpop.permute.xlu0 %316
  %318 = vrot.lane.b32.xlu0 %v289, 64
  %v319 = vpop.permute.xlu0 %318
  %320 = vrot.lane.b32.xlu0 %v290, 64
  %v321 = vpop.permute.xlu0 %320
  %322 = vrot.lane.b32.xlu0 %v291, 64
  %v323 = vpop.permute.xlu0 %322
  %v328 = vmul.f32 %v182, %v317
  %v329 = vmul.f32 %v212, %v319
  %v330 = vmul.f32 %v242, %v321
  %v331 = vmul.f32 %v272, %v323
  %336 = vrot.lane.b32.xlu0 %v328, 64
  %v337 = vpop.permute.xlu0 %336
  %338 = vrot.lane.b32.xlu0 %v329, 64
  %v339 = vpop.permute.xlu0 %338
  %340 = vrot.lane.b32.xlu0 %v330, 64
  %v341 = vpop.permute.xlu0 %340
  %342 = vrot.lane.b32.xlu0 %v331, 64
  %v343 = vpop.permute.xlu0 %342
  %v348 = vadd.f32 %v308, %v337
  %v349 = vadd.f32 %v309, %v339
  %v350 = vadd.f32 %v310, %v341
  %v351 = vadd.f32 %v311, %v343
  %v352 = vtanh.pop %v348
  %v353 = vtanh.pop %v349
  %v354 = vtanh.pop %v350
  %v355 = vtanh.pop %v351
  %360 = vrot.lane.b32.xlu0 %v352, 64
  %v361 = vpop.permute.xlu0 %360
  %362 = vrot.lane.b32.xlu0 %v353, 64
  %v363 = vpop.permute.xlu0 %362
  %364 = vrot.lane.b32.xlu0 %v354, 64
  %v365 = vpop.permute.xlu0 %364
  %366 = vrot.lane.b32.xlu0 %v355, 64
  %v367 = vpop.permute.xlu0 %366
  %v372 = vmul.f32 %v197, %v361
  %v373 = vmul.f32 %v227, %v363
  %v374 = vmul.f32 %v257, %v365
  %v375 = vmul.f32 %v287, %v367
  %376 = vst.msk [vmem:[#allocation2] sm:$0xff] %vm17, %v372
  %377 = vst.msk [vmem:[#allocation2 + $0x8] sm:$0xff] %vm17, %v373
  %378 = vst.msk [vmem:[#allocation2 + $0x10] sm:$0xff] %vm17, %v374
  %379 = vst.msk [vmem:[#allocation2 + $0x18] sm:$0xff] %vm17, %v375
  %384 = vrot.lane.b32.xlu0 %v348, 64
  %v385 = vpop.permute.xlu0 %384
  %386 = vrot.lane.b32.xlu0 %v349, 64
  %v387 = vpop.permute.xlu0 %386
  %388 = vrot.lane.b32.xlu0 %v350, 64
  %v389 = vpop.permute.xlu0 %388
  %390 = vrot.lane.b32.xlu0 %v351, 64
  %v391 = vpop.permute.xlu0 %390
  %396 = vst.msk [vmem:[#allocation3] sm:$0xff] %vm17, %v385
  %397 = vst.msk [vmem:[#allocation3 + $0x8] sm:$0xff] %vm17, %v387
  %398 = vst.msk [vmem:[#allocation3 + $0x10] sm:$0xff] %vm17, %v389
  %399 = vst.msk [vmem:[#allocation3 + $0x18] sm:$0xff] %vm17, %v391
  %400 = vst.msk [vmem:[#allocation4] sm:$0xff] %vm17, %v372
  %401 = vst.msk [vmem:[#allocation4 + $0x8] sm:$0xff] %vm17, %v373
  %402 = vst.msk [vmem:[#allocation4 + $0x10] sm:$0xff] %vm17, %v374
  %403 = vst.msk [vmem:[#allocation4 + $0x18] sm:$0xff] %vm17, %v375
  %v404 = vld [vmem:[#allocation2] sm:$0xff]
  %v405 = vld [vmem:[#allocation2 + $0x8] sm:$0xff]
  %v406 = vld [vmem:[#allocation2 + $0x10] sm:$0xff]
  %v407 = vld [vmem:[#allocation2 + $0x18] sm:$0xff]
  %v408 = vld [vmem:[#allocation3] sm:$0xff]
  %v409 = vld [vmem:[#allocation3 + $0x8] sm:$0xff]
  %v410 = vld [vmem:[#allocation3 + $0x10] sm:$0xff]
  %v411 = vld [vmem:[#allocation3 + $0x18] sm:$0xff]
  %s412 = scalar_lea.vmem %s0, 64
  %v413 = vld [vmem:[%s412] sm:$0xff]
  %v414 = vld [vmem:[%s412 + $0x8] sm:$0xff]
  %v415 = vld [vmem:[%s412 + $0x10] sm:$0xff]
  %v416 = vld [vmem:[%s412 + $0x18] sm:$0xff]
  %v417 = vld [vmem:[%s412 + $0x20] sm:$0xff]
  %v418 = vld [vmem:[%s412 + $0x28] sm:$0xff]
  %v419 = vld [vmem:[%s412 + $0x30] sm:$0xff]
  %v420 = vld [vmem:[%s412 + $0x38] sm:$0xff]
  %v421 = vld [vmem:[%s1] sm:$0xff]
  %v422 = vld [vmem:[%s1 + $0x8] sm:$0xff]
  %v423 = vld [vmem:[%s1 + $0x10] sm:$0xff]
  %v424 = vld [vmem:[%s1 + $0x18] sm:$0xff]
  %v425 = vld [vmem:[%s1 + $0x20] sm:$0xff]
  %v426 = vld [vmem:[%s1 + $0x28] sm:$0xff]
  %v427 = vld [vmem:[%s1 + $0x30] sm:$0xff]
  %v428 = vld [vmem:[%s1 + $0x38] sm:$0xff]
  %v429 = vld [vmem:[%s1 + $0x40] sm:$0xff]
  %v430 = vld [vmem:[%s1 + $0x48] sm:$0xff]
  %v431 = vld [vmem:[%s1 + $0x50] sm:$0xff]
  %v432 = vld [vmem:[%s1 + $0x58] sm:$0xff]
  %v433 = vld [vmem:[%s1 + $0x60] sm:$0xff]
  %v434 = vld [vmem:[%s1 + $0x68] sm:$0xff]
  %v435 = vld [vmem:[%s1 + $0x70] sm:$0xff]
  %v436 = vld [vmem:[%s1 + $0x78] sm:$0xff]
  %v438 = vsel %vm17, %v404, 0
  %v441 = vsel %vm17, %v405, 0
  %v444 = vsel %vm17, %v406, 0
  %v447 = vsel %vm17, %v407, 0
  %449 = vmatpush.msra.mxu0 0.0
  %450 = vmatpush.msra.mxu0 0.0
  %451 = vmatpush.msra.mxu0 0.0
  %452 = vmatpush.msra.mxu0 0.0
  %453 = vmatpush.msra.mxu0 0.0
  %454 = vmatpush.msra.mxu0 0.0
  %455 = vmatpush.msra.mxu0 0.0
  %456 = vmatpush.msra.mxu0 0.0
  %457 = vmatpush.msra.mxu0 %v435
  %458 = vmatpush.msra.mxu0 %v433
  %459 = vmatpush.msra.mxu0 %v431
  %460 = vmatpush.msra.mxu0 %v429
  %461 = vmatpush.msra.mxu0 %v427
  %462 = vmatpush.msra.mxu0 %v425
  %463 = vmatpush.msra.mxu0 %v423
  %464 = vmatpush.msra.mxu0 %v421
  %465 = vmatmul.f32.gmra.mxu0 %v438
  %v466 = vpop.f32.mrf.mxu0
  %v467 = vadd.f32 0.0, %v466
  %468 = vmatmul.f32.gmra.mxu0 %v441
  %v469 = vpop.f32.mrf.mxu0
  %v470 = vadd.f32 0.0, %v469
  %471 = vmatmul.f32.gmra.mxu0 %v444
  %v472 = vpop.f32.mrf.mxu0
  %v473 = vadd.f32 0.0, %v472
  %474 = vmatmul.f32.gmra.mxu0 %v447
  %v475 = vpop.f32.mrf.mxu0
  %v476 = vadd.f32 0.0, %v475
  %477 = vdwg.mxu0
  %478 = vmatpush.msra.mxu0 0.0
  %479 = vmatpush.msra.mxu0 0.0
  %480 = vmatpush.msra.mxu0 0.0
  %481 = vmatpush.msra.mxu0 0.0
  %482 = vmatpush.msra.mxu0 0.0
  %483 = vmatpush.msra.mxu0 0.0
  %484 = vmatpush.msra.mxu0 0.0
  %485 = vmatpush.msra.mxu0 0.0
  %486 = vmatpush.msra.mxu0 %v436
  %487 = vmatpush.msra.mxu0 %v434
  %488 = vmatpush.msra.mxu0 %v432
  %489 = vmatpush.msra.mxu0 %v430
  %490 = vmatpush.msra.mxu0 %v428
  %491 = vmatpush.msra.mxu0 %v426
  %492 = vmatpush.msra.mxu0 %v424
  %493 = vmatpush.msra.mxu0 %v422
  %494 = vmatmul.f32.gmra.mxu0 %v438
  %v495 = vpop.f32.mrf.mxu0
  %v496 = vadd.f32 0.0, %v495
  %497 = vmatmul.f32.gmra.mxu0 %v441
  %v498 = vpop.f32.mrf.mxu0
  %v499 = vadd.f32 0.0, %v498
  %500 = vmatmul.f32.gmra.mxu0 %v444
  %v501 = vpop.f32.mrf.mxu0
  %v502 = vadd.f32 0.0, %v501
  %503 = vmatmul.f32.gmra.mxu0 %v447
  %v504 = vpop.f32.mrf.mxu0
  %v505 = vadd.f32 0.0, %v504
  %506 = vdwg.mxu0
  %v507 = vadd.f32 %v413, %v467
  %v508 = vadd.f32 %v414, %v496
  %v509 = vadd.f32 %v415, %v470
  %v510 = vadd.f32 %v416, %v499
  %v511 = vadd.f32 %v417, %v473
  %v512 = vadd.f32 %v418, %v502
  %v513 = vadd.f32 %v419, %v476
  %v514 = vadd.f32 %v420, %v505
  %v515 = vxor.u32 %v507, 2147483648
  %v516 = vxor.u32 %v508, 2147483648
  %v517 = vxor.u32 %v509, 2147483648
  %v518 = vxor.u32 %v510, 2147483648
  %v519 = vxor.u32 %v511, 2147483648
  %v520 = vxor.u32 %v512, 2147483648
  %v521 = vxor.u32 %v513, 2147483648
  %v522 = vxor.u32 %v514, 2147483648
  %v523 = vmul.f32 %v515, 1.442695
  %v524 = vpow.pop %v523
  %v525 = vmul.f32 %v516, 1.442695
  %v526 = vpow.pop %v525
  %v527 = vmul.f32 %v517, 1.442695
  %v528 = vpow.pop %v527
  %v529 = vmul.f32 %v518, 1.442695
  %v530 = vpow.pop %v529
  %v531 = vmul.f32 %v519, 1.442695
  %v532 = vpow.pop %v531
  %v533 = vmul.f32 %v520, 1.442695
  %v534 = vpow.pop %v533
  %v535 = vmul.f32 %v521, 1.442695
  %v536 = vpow.pop %v535
  %v537 = vmul.f32 %v522, 1.442695
  %v538 = vpow.pop %v537
  %v539 = vadd.f32 %v524, 1.0
  %v540 = vadd.f32 %v526, 1.0
  %v541 = vadd.f32 %v528, 1.0
  %v542 = vadd.f32 %v530, 1.0
  %v543 = vadd.f32 %v532, 1.0
  %v544 = vadd.f32 %v534, 1.0
  %v545 = vadd.f32 %v536, 1.0
  %v546 = vadd.f32 %v538, 1.0
  %v547 = vrcp.pop %v539
  %v548 = vmul.f32 %v539, %v547
  %v549 = vsub.f32 1.0, %v548
  %v550 = vmul.f32 %v547, %v549
  %v551 = vadd.f32 %v547, %v550
  %vm552 = vweird.f32 %v539
  %vm553 = vweird.f32 %v547
  %vm554 = vmor %vm552, %vm553
  %v555 = vsel %vm554, %v547, %v551
  %v556 = vand.u32 2147483647, %v539
  %vm557 = vcmp.eq.f32.partialorder %v556, 8.507059e+37
  %v558 = vand.u32 %v539, 2147483648
  %v559 = vor.u32 1.1754944e-38, %v558
  %v560 = vsel %vm557, %v559, %v555
  %v561 = vmul.f32 1.0, %v560
  %v562 = vrcp.pop %v540
  %v563 = vmul.f32 %v540, %v562
  %v564 = vsub.f32 1.0, %v563
  %v565 = vmul.f32 %v562, %v564
  %v566 = vadd.f32 %v562, %v565
  %vm567 = vweird.f32 %v540
  %vm568 = vweird.f32 %v562
  %vm569 = vmor %vm567, %vm568
  %v570 = vsel %vm569, %v562, %v566
  %v571 = vand.u32 2147483647, %v540
  %vm572 = vcmp.eq.f32.partialorder %v571, 8.507059e+37
  %v573 = vand.u32 %v540, 2147483648
  %v574 = vor.u32 1.1754944e-38, %v573
  %v575 = vsel %vm572, %v574, %v570
  %v576 = vmul.f32 1.0, %v575
  %v577 = vrcp.pop %v541
  %v578 = vmul.f32 %v541, %v577
  %v579 = vsub.f32 1.0, %v578
  %v580 = vmul.f32 %v577, %v579
  %v581 = vadd.f32 %v577, %v580
  %vm582 = vweird.f32 %v541
  %vm583 = vweird.f32 %v577
  %vm584 = vmor %vm582, %vm583
  %v585 = vsel %vm584, %v577, %v581
  %v586 = vand.u32 2147483647, %v541
  %vm587 = vcmp.eq.f32.partialorder %v586, 8.507059e+37
  %v588 = vand.u32 %v541, 2147483648
  %v589 = vor.u32 1.1754944e-38, %v588
  %v590 = vsel %vm587, %v589, %v585
  %v591 = vmul.f32 1.0, %v590
  %v592 = vrcp.pop %v542
  %v593 = vmul.f32 %v542, %v592
  %v594 = vsub.f32 1.0, %v593
  %v595 = vmul.f32 %v592, %v594
  %v596 = vadd.f32 %v592, %v595
  %vm597 = vweird.f32 %v542
  %vm598 = vweird.f32 %v592
  %vm599 = vmor %vm597, %vm598
  %v600 = vsel %vm599, %v592, %v596
  %v601 = vand.u32 2147483647, %v542
  %vm602 = vcmp.eq.f32.partialorder %v601, 8.507059e+37
  %v603 = vand.u32 %v542, 2147483648
  %v604 = vor.u32 1.1754944e-38, %v603
  %v605 = vsel %vm602, %v604, %v600
  %v606 = vmul.f32 1.0, %v605
  %v607 = vrcp.pop %v543
  %v608 = vmul.f32 %v543, %v607
  %v609 = vsub.f32 1.0, %v608
  %v610 = vmul.f32 %v607, %v609
  %v611 = vadd.f32 %v607, %v610
  %vm612 = vweird.f32 %v543
  %vm613 = vweird.f32 %v607
  %vm614 = vmor %vm612, %vm613
  %v615 = vsel %vm614, %v607, %v611
  %v616 = vand.u32 2147483647, %v543
  %vm617 = vcmp.eq.f32.partialorder %v616, 8.507059e+37
  %v618 = vand.u32 %v543, 2147483648
  %v619 = vor.u32 1.1754944e-38, %v618
  %v620 = vsel %vm617, %v619, %v615
  %v621 = vmul.f32 1.0, %v620
  %v622 = vrcp.pop %v544
  %v623 = vmul.f32 %v544, %v622
  %v624 = vsub.f32 1.0, %v623
  %v625 = vmul.f32 %v622, %v624
  %v626 = vadd.f32 %v622, %v625
  %vm627 = vweird.f32 %v544
  %vm628 = vweird.f32 %v622
  %vm629 = vmor %vm627, %vm628
  %v630 = vsel %vm629, %v622, %v626
  %v631 = vand.u32 2147483647, %v544
  %vm632 = vcmp.eq.f32.partialorder %v631, 8.507059e+37
  %v633 = vand.u32 %v544, 2147483648
  %v634 = vor.u32 1.1754944e-38, %v633
  %v635 = vsel %vm632, %v634, %v630
  %v636 = vmul.f32 1.0, %v635
  %v637 = vrcp.pop %v545
  %v638 = vmul.f32 %v545, %v637
  %v639 = vsub.f32 1.0, %v638
  %v640 = vmul.f32 %v637, %v639
  %v641 = vadd.f32 %v637, %v640
  %vm642 = vweird.f32 %v545
  %vm643 = vweird.f32 %v637
  %vm644 = vmor %vm642, %vm643
  %v645 = vsel %vm644, %v637, %v641
  %v646 = vand.u32 2147483647, %v545
  %vm647 = vcmp.eq.f32.partialorder %v646, 8.507059e+37
  %v648 = vand.u32 %v545, 2147483648
  %v649 = vor.u32 1.1754944e-38, %v648
  %v650 = vsel %vm647, %v649, %v645
  %v651 = vmul.f32 1.0, %v650
  %v652 = vrcp.pop %v546
  %v653 = vmul.f32 %v546, %v652
  %v654 = vsub.f32 1.0, %v653
  %v655 = vmul.f32 %v652, %v654
  %v656 = vadd.f32 %v652, %v655
  %vm657 = vweird.f32 %v546
  %vm658 = vweird.f32 %v652
  %vm659 = vmor %vm657, %vm658
  %v660 = vsel %vm659, %v652, %v656
  %v661 = vand.u32 2147483647, %v546
  %vm662 = vcmp.eq.f32.partialorder %v661, 8.507059e+37
  %v663 = vand.u32 %v546, 2147483648
  %v664 = vor.u32 1.1754944e-38, %v663
  %v665 = vsel %vm662, %v664, %v660
  %v666 = vmul.f32 1.0, %v665
  %v667 = vtanh.pop %v508
  %v668 = vtanh.pop %v510
  %v669 = vtanh.pop %v512
  %v670 = vtanh.pop %v514
  %675 = vrot.lane.b32.xlu0 %v408, 64
  %v676 = vpop.permute.xlu0 %675
  %677 = vrot.lane.b32.xlu0 %v409, 64
  %v678 = vpop.permute.xlu0 %677
  %679 = vrot.lane.b32.xlu0 %v410, 64
  %v680 = vpop.permute.xlu0 %679
  %681 = vrot.lane.b32.xlu0 %v411, 64
  %v682 = vpop.permute.xlu0 %681
  %v687 = vmul.f32 %v561, %v676
  %v688 = vmul.f32 %v591, %v678
  %v689 = vmul.f32 %v621, %v680
  %v690 = vmul.f32 %v651, %v682
  %695 = vrot.lane.b32.xlu0 %v667, 64
  %v696 = vpop.permute.xlu0 %695
  %697 = vrot.lane.b32.xlu0 %v668, 64
  %v698 = vpop.permute.xlu0 %697
  %699 = vrot.lane.b32.xlu0 %v669, 64
  %v700 = vpop.permute.xlu0 %699
  %701 = vrot.lane.b32.xlu0 %v670, 64
  %v702 = vpop.permute.xlu0 %701
  %v707 = vmul.f32 %v561, %v696
  %v708 = vmul.f32 %v591, %v698
  %v709 = vmul.f32 %v621, %v700
  %v710 = vmul.f32 %v651, %v702
  %715 = vrot.lane.b32.xlu0 %v707, 64
  %v716 = vpop.permute.xlu0 %715
  %717 = vrot.lane.b32.xlu0 %v708, 64
  %v718 = vpop.permute.xlu0 %717
  %719 = vrot.lane.b32.xlu0 %v709, 64
  %v720 = vpop.permute.xlu0 %719
  %721 = vrot.lane.b32.xlu0 %v710, 64
  %v722 = vpop.permute.xlu0 %721
  %v727 = vadd.f32 %v687, %v716
  %v728 = vadd.f32 %v688, %v718
  %v729 = vadd.f32 %v689, %v720
  %v730 = vadd.f32 %v690, %v722
  %v731 = vtanh.pop %v727
  %v732 = vtanh.pop %v728
  %v733 = vtanh.pop %v729
  %v734 = vtanh.pop %v730
  %739 = vrot.lane.b32.xlu0 %v731, 64
  %v740 = vpop.permute.xlu0 %739
  %741 = vrot.lane.b32.xlu0 %v732, 64
  %v742 = vpop.permute.xlu0 %741
  %743 = vrot.lane.b32.xlu0 %v733, 64
  %v744 = vpop.permute.xlu0 %743
  %745 = vrot.lane.b32.xlu0 %v734, 64
  %v746 = vpop.permute.xlu0 %745
  %v751 = vmul.f32 %v576, %v740
  %v752 = vmul.f32 %v606, %v742
  %v753 = vmul.f32 %v636, %v744
  %v754 = vmul.f32 %v666, %v746
  %755 = vst.msk [vmem:[#allocation2] sm:$0xff] %vm17, %v751
  %756 = vst.msk [vmem:[#allocation2 + $0x8] sm:$0xff] %vm17, %v752
  %757 = vst.msk [vmem:[#allocation2 + $0x10] sm:$0xff] %vm17, %v753
  %758 = vst.msk [vmem:[#allocation2 + $0x18] sm:$0xff] %vm17, %v754
  %763 = vrot.lane.b32.xlu0 %v727, 64
  %v764 = vpop.permute.xlu0 %763
  %765 = vrot.lane.b32.xlu0 %v728, 64
  %v766 = vpop.permute.xlu0 %765
  %767 = vrot.lane.b32.xlu0 %v729, 64
  %v768 = vpop.permute.xlu0 %767
  %769 = vrot.lane.b32.xlu0 %v730, 64
  %v770 = vpop.permute.xlu0 %769
  %775 = vst.msk [vmem:[#allocation3] sm:$0xff] %vm17, %v764
  %776 = vst.msk [vmem:[#allocation3 + $0x8] sm:$0xff] %vm17, %v766
  %777 = vst.msk [vmem:[#allocation3 + $0x10] sm:$0xff] %vm17, %v768
  %778 = vst.msk [vmem:[#allocation3 + $0x18] sm:$0xff] %vm17, %v770
  %s779 = scalar_lea.vmem [#allocation4], 32
  %780 = vst.msk [vmem:[%s779] sm:$0xff] %vm17, %v751
  %781 = vst.msk [vmem:[%s779 + $0x8] sm:$0xff] %vm17, %v752
  %782 = vst.msk [vmem:[%s779 + $0x10] sm:$0xff] %vm17, %v753
  %783 = vst.msk [vmem:[%s779 + $0x18] sm:$0xff] %vm17, %v754
  %v784 = vld [vmem:[#allocation2] sm:$0xff]
  %v785 = vld [vmem:[#allocation2 + $0x8] sm:$0xff]
  %v786 = vld [vmem:[#allocation2 + $0x10] sm:$0xff]
  %v787 = vld [vmem:[#allocation2 + $0x18] sm:$0xff]
  %v788 = vld [vmem:[#allocation3] sm:$0xff]
  %v789 = vld [vmem:[#allocation3 + $0x8] sm:$0xff]
  %v790 = vld [vmem:[#allocation3 + $0x10] sm:$0xff]
  %v791 = vld [vmem:[#allocation3 + $0x18] sm:$0xff]
  %s792 = scalar_lea.vmem %s0, 128
  %v793 = vld [vmem:[%s792] sm:$0xff]
  %v794 = vld [vmem:[%s792 + $0x8] sm:$0xff]
  %v795 = vld [vmem:[%s792 + $0x10] sm:$0xff]
  %v796 = vld [vmem:[%s792 + $0x18] sm:$0xff]
  %v797 = vld [vmem:[%s792 + $0x20] sm:$0xff]
  %v798 = vld [vmem:[%s792 + $0x28] sm:$0xff]
  %v799 = vld [vmem:[%s792 + $0x30] sm:$0xff]
  %v800 = vld [vmem:[%s792 + $0x38] sm:$0xff]
  %v801 = vld [vmem:[%s1] sm:$0xff]
  %v802 = vld [vmem:[%s1 + $0x8] sm:$0xff]
  %v803 = vld [vmem:[%s1 + $0x10] sm:$0xff]
  %v804 = vld [vmem:[%s1 + $0x18] sm:$0xff]
  %v805 = vld [vmem:[%s1 + $0x20] sm:$0xff]
  %v806 = vld [vmem:[%s1 + $0x28] sm:$0xff]
  %v807 = vld [vmem:[%s1 + $0x30] sm:$0xff]
  %v808 = vld [vmem:[%s1 + $0x38] sm:$0xff]
  %v809 = vld [vmem:[%s1 + $0x40] sm:$0xff]
  %v810 = vld [vmem:[%s1 + $0x48] sm:$0xff]
  %v811 = vld [vmem:[%s1 + $0x50] sm:$0xff]
  %v812 = vld [vmem:[%s1 + $0x58] sm:$0xff]
  %v813 = vld [vmem:[%s1 + $0x60] sm:$0xff]
  %v814 = vld [vmem:[%s1 + $0x68] sm:$0xff]
  %v815 = vld [vmem:[%s1 + $0x70] sm:$0xff]
  %v816 = vld [vmem:[%s1 + $0x78] sm:$0xff]
  %v818 = vsel %vm17, %v784, 0
  %v821 = vsel %vm17, %v785, 0
  %v824 = vsel %vm17, %v786, 0
  %v827 = vsel %vm17, %v787, 0
  %829 = vmatpush.msra.mxu0 0.0
  %830 = vmatpush.msra.mxu0 0.0
  %831 = vmatpush.msra.mxu0 0.0
  %832 = vmatpush.msra.mxu0 0.0
  %833 = vmatpush.msra.mxu0 0.0
  %834 = vmatpush.msra.mxu0 0.0
  %835 = vmatpush.msra.mxu0 0.0
  %836 = vmatpush.msra.mxu0 0.0
  %837 = vmatpush.msra.mxu0 %v815
  %838 = vmatpush.msra.mxu0 %v813
  %839 = vmatpush.msra.mxu0 %v811
  %840 = vmatpush.msra.mxu0 %v809
  %841 = vmatpush.msra.mxu0 %v807
  %842 = vmatpush.msra.mxu0 %v805
  %843 = vmatpush.msra.mxu0 %v803
  %844 = vmatpush.msra.mxu0 %v801
  %845 = vmatmul.f32.gmra.mxu0 %v818
  %v846 = vpop.f32.mrf.mxu0
  %v847 = vadd.f32 0.0, %v846
  %848 = vmatmul.f32.gmra.mxu0 %v821
  %v849 = vpop.f32.mrf.mxu0
  %v850 = vadd.f32 0.0, %v849
  %851 = vmatmul.f32.gmra.mxu0 %v824
  %v852 = vpop.f32.mrf.mxu0
  %v853 = vadd.f32 0.0, %v852
  %854 = vmatmul.f32.gmra.mxu0 %v827
  %v855 = vpop.f32.mrf.mxu0
  %v856 = vadd.f32 0.0, %v855
  %857 = vdwg.mxu0
  %858 = vmatpush.msra.mxu0 0.0
  %859 = vmatpush.msra.mxu0 0.0
  %860 = vmatpush.msra.mxu0 0.0
  %861 = vmatpush.msra.mxu0 0.0
  %862 = vmatpush.msra.mxu0 0.0
  %863 = vmatpush.msra.mxu0 0.0
  %864 = vmatpush.msra.mxu0 0.0
  %865 = vmatpush.msra.mxu0 0.0
  %866 = vmatpush.msra.mxu0 %v816
  %867 = vmatpush.msra.mxu0 %v814
  %868 = vmatpush.msra.mxu0 %v812
  %869 = vmatpush.msra.mxu0 %v810
  %870 = vmatpush.msra.mxu0 %v808
  %871 = vmatpush.msra.mxu0 %v806
  %872 = vmatpush.msra.mxu0 %v804
  %873 = vmatpush.msra.mxu0 %v802
  %874 = vmatmul.f32.gmra.mxu0 %v818
  %v875 = vpop.f32.mrf.mxu0
  %v876 = vadd.f32 0.0, %v875
  %877 = vmatmul.f32.gmra.mxu0 %v821
  %v878 = vpop.f32.mrf.mxu0
  %v879 = vadd.f32 0.0, %v878
  %880 = vmatmul.f32.gmra.mxu0 %v824
  %v881 = vpop.f32.mrf.mxu0
  %v882 = vadd.f32 0.0, %v881
  %883 = vmatmul.f32.gmra.mxu0 %v827
  %v884 = vpop.f32.mrf.mxu0
  %v885 = vadd.f32 0.0, %v884
  %886 = vdwg.mxu0
  %v887 = vadd.f32 %v793, %v847
  %v888 = vadd.f32 %v794, %v876
  %v889 = vadd.f32 %v795, %v850
  %v890 = vadd.f32 %v796, %v879
  %v891 = vadd.f32 %v797, %v853
  %v892 = vadd.f32 %v798, %v882
  %v893 = vadd.f32 %v799, %v856
  %v894 = vadd.f32 %v800, %v885
  %v895 = vxor.u32 %v887, 2147483648
  %v896 = vxor.u32 %v888, 2147483648
  %v897 = vxor.u32 %v889, 2147483648
  %v898 = vxor.u32 %v890, 2147483648
  %v899 = vxor.u32 %v891, 2147483648
  %v900 = vxor.u32 %v892, 2147483648
  %v901 = vxor.u32 %v893, 2147483648
  %v902 = vxor.u32 %v894, 2147483648
  %v903 = vmul.f32 %v895, 1.442695
  %v904 = vpow.pop %v903
  %v905 = vmul.f32 %v896, 1.442695
  %v906 = vpow.pop %v905
  %v907 = vmul.f32 %v897, 1.442695
  %v908 = vpow.pop %v907
  %v909 = vmul.f32 %v898, 1.442695
  %v910 = vpow.pop %v909
  %v911 = vmul.f32 %v899, 1.442695
  %v912 = vpow.pop %v911
  %v913 = vmul.f32 %v900, 1.442695
  %v914 = vpow.pop %v913
  %v915 = vmul.f32 %v901, 1.442695
  %v916 = vpow.pop %v915
  %v917 = vmul.f32 %v902, 1.442695
  %v918 = vpow.pop %v917
  %v919 = vadd.f32 %v904, 1.0
  %v920 = vadd.f32 %v906, 1.0
  %v921 = vadd.f32 %v908, 1.0
  %v922 = vadd.f32 %v910, 1.0
  %v923 = vadd.f32 %v912, 1.0
  %v924 = vadd.f32 %v914, 1.0
  %v925 = vadd.f32 %v916, 1.0
  %v926 = vadd.f32 %v918, 1.0
  %v927 = vrcp.pop %v919
  %v928 = vmul.f32 %v919, %v927
  %v929 = vsub.f32 1.0, %v928
  %v930 = vmul.f32 %v927, %v929
  %v931 = vadd.f32 %v927, %v930
  %vm932 = vweird.f32 %v919
  %vm933 = vweird.f32 %v927
  %vm934 = vmor %vm932, %vm933
  %v935 = vsel %vm934, %v927, %v931
  %v936 = vand.u32 2147483647, %v919
  %vm937 = vcmp.eq.f32.partialorder %v936, 8.507059e+37
  %v938 = vand.u32 %v919, 2147483648
  %v939 = vor.u32 1.1754944e-38, %v938
  %v940 = vsel %vm937, %v939, %v935
  %v941 = vmul.f32 1.0, %v940
  %v942 = vrcp.pop %v920
  %v943 = vmul.f32 %v920, %v942
  %v944 = vsub.f32 1.0, %v943
  %v945 = vmul.f32 %v942, %v944
  %v946 = vadd.f32 %v942, %v945
  %vm947 = vweird.f32 %v920
  %vm948 = vweird.f32 %v942
  %vm949 = vmor %vm947, %vm948
  %v950 = vsel %vm949, %v942, %v946
  %v951 = vand.u32 2147483647, %v920
  %vm952 = vcmp.eq.f32.partialorder %v951, 8.507059e+37
  %v953 = vand.u32 %v920, 2147483648
  %v954 = vor.u32 1.1754944e-38, %v953
  %v955 = vsel %vm952, %v954, %v950
  %v956 = vmul.f32 1.0, %v955
  %v957 = vrcp.pop %v921
  %v958 = vmul.f32 %v921, %v957
  %v959 = vsub.f32 1.0, %v958
  %v960 = vmul.f32 %v957, %v959
  %v961 = vadd.f32 %v957, %v960
  %vm962 = vweird.f32 %v921
  %vm963 = vweird.f32 %v957
  %vm964 = vmor %vm962, %vm963
  %v965 = vsel %vm964, %v957, %v961
  %v966 = vand.u32 2147483647, %v921
  %vm967 = vcmp.eq.f32.partialorder %v966, 8.507059e+37
  %v968 = vand.u32 %v921, 2147483648
  %v969 = vor.u32 1.1754944e-38, %v968
  %v970 = vsel %vm967, %v969, %v965
  %v971 = vmul.f32 1.0, %v970
  %v972 = vrcp.pop %v922
  %v973 = vmul.f32 %v922, %v972
  %v974 = vsub.f32 1.0, %v973
  %v975 = vmul.f32 %v972, %v974
  %v976 = vadd.f32 %v972, %v975
  %vm977 = vweird.f32 %v922
  %vm978 = vweird.f32 %v972
  %vm979 = vmor %vm977, %vm978
  %v980 = vsel %vm979, %v972, %v976
  %v981 = vand.u32 2147483647, %v922
  %vm982 = vcmp.eq.f32.partialorder %v981, 8.507059e+37
  %v983 = vand.u32 %v922, 2147483648
  %v984 = vor.u32 1.1754944e-38, %v983
  %v985 = vsel %vm982, %v984, %v980
  %v986 = vmul.f32 1.0, %v985
  %v987 = vrcp.pop %v923
  %v988 = vmul.f32 %v923, %v987
  %v989 = vsub.f32 1.0, %v988
  %v990 = vmul.f32 %v987, %v989
  %v991 = vadd.f32 %v987, %v990
  %vm992 = vweird.f32 %v923
  %vm993 = vweird.f32 %v987
  %vm994 = vmor %vm992, %vm993
  %v995 = vsel %vm994, %v987, %v991
  %v996 = vand.u32 2147483647, %v923
  %vm997 = vcmp.eq.f32.partialorder %v996, 8.507059e+37
  %v998 = vand.u32 %v923, 2147483648
  %v999 = vor.u32 1.1754944e-38, %v998
  %v1000 = vsel %vm997, %v999, %v995
  %v1001 = vmul.f32 1.0, %v1000
  %v1002 = vrcp.pop %v924
  %v1003 = vmul.f32 %v924, %v1002
  %v1004 = vsub.f32 1.0, %v1003
  %v1005 = vmul.f32 %v1002, %v1004
  %v1006 = vadd.f32 %v1002, %v1005
  %vm1007 = vweird.f32 %v924
  %vm1008 = vweird.f32 %v1002
  %vm1009 = vmor %vm1007, %vm1008
  %v1010 = vsel %vm1009, %v1002, %v1006
  %v1011 = vand.u32 2147483647, %v924
  %vm1012 = vcmp.eq.f32.partialorder %v1011, 8.507059e+37
  %v1013 = vand.u32 %v924, 2147483648
  %v1014 = vor.u32 1.1754944e-38, %v1013
  %v1015 = vsel %vm1012, %v1014, %v1010
  %v1016 = vmul.f32 1.0, %v1015
  %v1017 = vrcp.pop %v925
  %v1018 = vmul.f32 %v925, %v1017
  %v1019 = vsub.f32 1.0, %v1018
  %v1020 = vmul.f32 %v1017, %v1019
  %v1021 = vadd.f32 %v1017, %v1020
  %vm1022 = vweird.f32 %v925
  %vm1023 = vweird.f32 %v1017
  %vm1024 = vmor %vm1022, %vm1023
  %v1025 = vsel %vm1024, %v1017, %v1021
  %v1026 = vand.u32 2147483647, %v925
  %vm1027 = vcmp.eq.f32.partialorder %v1026, 8.507059e+37
  %v1028 = vand.u32 %v925, 2147483648
  %v1029 = vor.u32 1.1754944e-38, %v1028
  %v1030 = vsel %vm1027, %v1029, %v1025
  %v1031 = vmul.f32 1.0, %v1030
  %v1032 = vrcp.pop %v926
  %v1033 = vmul.f32 %v926, %v1032
  %v1034 = vsub.f32 1.0, %v1033
  %v1035 = vmul.f32 %v1032, %v1034
  %v1036 = vadd.f32 %v1032, %v1035
  %vm1037 = vweird.f32 %v926
  %vm1038 = vweird.f32 %v1032
  %vm1039 = vmor %vm1037, %vm1038
  %v1040 = vsel %vm1039, %v1032, %v1036
  %v1041 = vand.u32 2147483647, %v926
  %vm1042 = vcmp.eq.f32.partialorder %v1041, 8.507059e+37
  %v1043 = vand.u32 %v926, 2147483648
  %v1044 = vor.u32 1.1754944e-38, %v1043
  %v1045 = vsel %vm1042, %v1044, %v1040
  %v1046 = vmul.f32 1.0, %v1045
  %v1047 = vtanh.pop %v888
  %v1048 = vtanh.pop %v890
  %v1049 = vtanh.pop %v892
  %v1050 = vtanh.pop %v894
  %1055 = vrot.lane.b32.xlu0 %v788, 64
  %v1056 = vpop.permute.xlu0 %1055
  %1057 = vrot.lane.b32.xlu0 %v789, 64
  %v1058 = vpop.permute.xlu0 %1057
  %1059 = vrot.lane.b32.xlu0 %v790, 64
  %v1060 = vpop.permute.xlu0 %1059
  %1061 = vrot.lane.b32.xlu0 %v791, 64
  %v1062 = vpop.permute.xlu0 %1061
  %v1067 = vmul.f32 %v941, %v1056
  %v1068 = vmul.f32 %v971, %v1058
  %v1069 = vmul.f32 %v1001, %v1060
  %v1070 = vmul.f32 %v1031, %v1062
  %1075 = vrot.lane.b32.xlu0 %v1047, 64
  %v1076 = vpop.permute.xlu0 %1075
  %1077 = vrot.lane.b32.xlu0 %v1048, 64
  %v1078 = vpop.permute.xlu0 %1077
  %1079 = vrot.lane.b32.xlu0 %v1049, 64
  %v1080 = vpop.permute.xlu0 %1079
  %1081 = vrot.lane.b32.xlu0 %v1050, 64
  %v1082 = vpop.permute.xlu0 %1081
  %v1087 = vmul.f32 %v941, %v1076
  %v1088 = vmul.f32 %v971, %v1078
  %v1089 = vmul.f32 %v1001, %v1080
  %v1090 = vmul.f32 %v1031, %v1082
  %1095 = vrot.lane.b32.xlu0 %v1087, 64
  %v1096 = vpop.permute.xlu0 %1095
  %1097 = vrot.lane.b32.xlu0 %v1088, 64
  %v1098 = vpop.permute.xlu0 %1097
  %1099 = vrot.lane.b32.xlu0 %v1089, 64
  %v1100 = vpop.permute.xlu0 %1099
  %1101 = vrot.lane.b32.xlu0 %v1090, 64
  %v1102 = vpop.permute.xlu0 %1101
  %v1107 = vadd.f32 %v1067, %v1096
  %v1108 = vadd.f32 %v1068, %v1098
  %v1109 = vadd.f32 %v1069, %v1100
  %v1110 = vadd.f32 %v1070, %v1102
  %v1111 = vtanh.pop %v1107
  %v1112 = vtanh.pop %v1108
  %v1113 = vtanh.pop %v1109
  %v1114 = vtanh.pop %v1110
  %1119 = vrot.lane.b32.xlu0 %v1111, 64
  %v1120 = vpop.permute.xlu0 %1119
  %1121 = vrot.lane.b32.xlu0 %v1112, 64
  %v1122 = vpop.permute.xlu0 %1121
  %1123 = vrot.lane.b32.xlu0 %v1113, 64
  %v1124 = vpop.permute.xlu0 %1123
  %1125 = vrot.lane.b32.xlu0 %v1114, 64
  %v1126 = vpop.permute.xlu0 %1125
  %v1131 = vmul.f32 %v956, %v1120
  %v1132 = vmul.f32 %v986, %v1122
  %v1133 = vmul.f32 %v1016, %v1124
  %v1134 = vmul.f32 %v1046, %v1126
  %1135 = vst.msk [vmem:[#allocation2] sm:$0xff] %vm17, %v1131
  %1136 = vst.msk [vmem:[#allocation2 + $0x8] sm:$0xff] %vm17, %v1132
  %1137 = vst.msk [vmem:[#allocation2 + $0x10] sm:$0xff] %vm17, %v1133
  %1138 = vst.msk [vmem:[#allocation2 + $0x18] sm:$0xff] %vm17, %v1134
  %1143 = vrot.lane.b32.xlu0 %v1107, 64
  %v1144 = vpop.permute.xlu0 %1143
  %1145 = vrot.lane.b32.xlu0 %v1108, 64
  %v1146 = vpop.permute.xlu0 %1145
  %1147 = vrot.lane.b32.xlu0 %v1109, 64
  %v1148 = vpop.permute.xlu0 %1147
  %1149 = vrot.lane.b32.xlu0 %v1110, 64
  %v1150 = vpop.permute.xlu0 %1149
  %1155 = vst.msk [vmem:[#allocation3] sm:$0xff] %vm17, %v1144
  %1156 = vst.msk [vmem:[#allocation3 + $0x8] sm:$0xff] %vm17, %v1146
  %1157 = vst.msk [vmem:[#allocation3 + $0x10] sm:$0xff] %vm17, %v1148
  %1158 = vst.msk [vmem:[#allocation3 + $0x18] sm:$0xff] %vm17, %v1150
  %s1159 = scalar_lea.vmem [#allocation4], 64
  %1160 = vst.msk [vmem:[%s1159] sm:$0xff] %vm17, %v1131
  %1161 = vst.msk [vmem:[%s1159 + $0x8] sm:$0xff] %vm17, %v1132
  %1162 = vst.msk [vmem:[%s1159 + $0x10] sm:$0xff] %vm17, %v1133
  %1163 = vst.msk [vmem:[%s1159 + $0x18] sm:$0xff] %vm17, %v1134
  %v1164 = vld [vmem:[#allocation2] sm:$0xff]
  %v1165 = vld [vmem:[#allocation2 + $0x8] sm:$0xff]
  %v1166 = vld [vmem:[#allocation2 + $0x10] sm:$0xff]
  %v1167 = vld [vmem:[#allocation2 + $0x18] sm:$0xff]
  %v1168 = vld [vmem:[#allocation3] sm:$0xff]
  %v1169 = vld [vmem:[#allocation3 + $0x8] sm:$0xff]
  %v1170 = vld [vmem:[#allocation3 + $0x10] sm:$0xff]
  %v1171 = vld [vmem:[#allocation3 + $0x18] sm:$0xff]
  %s1172 = scalar_lea.vmem %s0, 192
  %v1173 = vld [vmem:[%s1172] sm:$0xff]
  %v1174 = vld [vmem:[%s1172 + $0x8] sm:$0xff]
  %v1175 = vld [vmem:[%s1172 + $0x10] sm:$0xff]
  %v1176 = vld [vmem:[%s1172 + $0x18] sm:$0xff]
  %v1177 = vld [vmem:[%s1172 + $0x20] sm:$0xff]
  %v1178 = vld [vmem:[%s1172 + $0x28] sm:$0xff]
  %v1179 = vld [vmem:[%s1172 + $0x30] sm:$0xff]
  %v1180 = vld [vmem:[%s1172 + $0x38] sm:$0xff]
  %v1181 = vld [vmem:[%s1] sm:$0xff]
  %v1182 = vld [vmem:[%s1 + $0x8] sm:$0xff]
  %v1183 = vld [vmem:[%s1 + $0x10] sm:$0xff]
  %v1184 = vld [vmem:[%s1 + $0x18] sm:$0xff]
  %v1185 = vld [vmem:[%s1 + $0x20] sm:$0xff]
  %v1186 = vld [vmem:[%s1 + $0x28] sm:$0xff]
  %v1187 = vld [vmem:[%s1 + $0x30] sm:$0xff]
  %v1188 = vld [vmem:[%s1 + $0x38] sm:$0xff]
  %v1189 = vld [vmem:[%s1 + $0x40] sm:$0xff]
  %v1190 = vld [vmem:[%s1 + $0x48] sm:$0xff]
  %v1191 = vld [vmem:[%s1 + $0x50] sm:$0xff]
  %v1192 = vld [vmem:[%s1 + $0x58] sm:$0xff]
  %v1193 = vld [vmem:[%s1 + $0x60] sm:$0xff]
  %v1194 = vld [vmem:[%s1 + $0x68] sm:$0xff]
  %v1195 = vld [vmem:[%s1 + $0x70] sm:$0xff]
  %v1196 = vld [vmem:[%s1 + $0x78] sm:$0xff]
  %v1198 = vsel %vm17, %v1164, 0
  %v1201 = vsel %vm17, %v1165, 0
  %v1204 = vsel %vm17, %v1166, 0
  %v1207 = vsel %vm17, %v1167, 0
  %1209 = vmatpush.msra.mxu0 0.0
  %1210 = vmatpush.msra.mxu0 0.0
  %1211 = vmatpush.msra.mxu0 0.0
  %1212 = vmatpush.msra.mxu0 0.0
  %1213 = vmatpush.msra.mxu0 0.0
  %1214 = vmatpush.msra.mxu0 0.0
  %1215 = vmatpush.msra.mxu0 0.0
  %1216 = vmatpush.msra.mxu0 0.0
  %1217 = vmatpush.msra.mxu0 %v1195
  %1218 = vmatpush.msra.mxu0 %v1193
  %1219 = vmatpush.msra.mxu0 %v1191
  %1220 = vmatpush.msra.mxu0 %v1189
  %1221 = vmatpush.msra.mxu0 %v1187
  %1222 = vmatpush.msra.mxu0 %v1185
  %1223 = vmatpush.msra.mxu0 %v1183
  %1224 = vmatpush.msra.mxu0 %v1181
  %1225 = vmatmul.f32.gmra.mxu0 %v1198
  %v1226 = vpop.f32.mrf.mxu0
  %v1227 = vadd.f32 0.0, %v1226
  %1228 = vmatmul.f32.gmra.mxu0 %v1201
  %v1229 = vpop.f32.mrf.mxu0
  %v1230 = vadd.f32 0.0, %v1229
  %1231 = vmatmul.f32.gmra.mxu0 %v1204
  %v1232 = vpop.f32.mrf.mxu0
  %v1233 = vadd.f32 0.0, %v1232
  %1234 = vmatmul.f32.gmra.mxu0 %v1207
  %v1235 = vpop.f32.mrf.mxu0
  %v1236 = vadd.f32 0.0, %v1235
  %1237 = vdwg.mxu0
  %1238 = vmatpush.msra.mxu0 0.0
  %1239 = vmatpush.msra.mxu0 0.0
  %1240 = vmatpush.msra.mxu0 0.0
  %1241 = vmatpush.msra.mxu0 0.0
  %1242 = vmatpush.msra.mxu0 0.0
  %1243 = vmatpush.msra.mxu0 0.0
  %1244 = vmatpush.msra.mxu0 0.0
  %1245 = vmatpush.msra.mxu0 0.0
  %1246 = vmatpush.msra.mxu0 %v1196
  %1247 = vmatpush.msra.mxu0 %v1194
  %1248 = vmatpush.msra.mxu0 %v1192
  %1249 = vmatpush.msra.mxu0 %v1190
  %1250 = vmatpush.msra.mxu0 %v1188
  %1251 = vmatpush.msra.mxu0 %v1186
  %1252 = vmatpush.msra.mxu0 %v1184
  %1253 = vmatpush.msra.mxu0 %v1182
  %1254 = vmatmul.f32.gmra.mxu0 %v1198
  %v1255 = vpop.f32.mrf.mxu0
  %v1256 = vadd.f32 0.0, %v1255
  %1257 = vmatmul.f32.gmra.mxu0 %v1201
  %v1258 = vpop.f32.mrf.mxu0
  %v1259 = vadd.f32 0.0, %v1258
  %1260 = vmatmul.f32.gmra.mxu0 %v1204
  %v1261 = vpop.f32.mrf.mxu0
  %v1262 = vadd.f32 0.0, %v1261
  %1263 = vmatmul.f32.gmra.mxu0 %v1207
  %v1264 = vpop.f32.mrf.mxu0
  %v1265 = vadd.f32 0.0, %v1264
  %1266 = vdwg.mxu0
  %v1267 = vadd.f32 %v1173, %v1227
  %v1268 = vadd.f32 %v1174, %v1256
  %v1269 = vadd.f32 %v1175, %v1230
  %v1270 = vadd.f32 %v1176, %v1259
  %v1271 = vadd.f32 %v1177, %v1233
  %v1272 = vadd.f32 %v1178, %v1262
  %v1273 = vadd.f32 %v1179, %v1236
  %v1274 = vadd.f32 %v1180, %v1265
  %v1275 = vxor.u32 %v1267, 2147483648
  %v1276 = vxor.u32 %v1268, 2147483648
  %v1277 = vxor.u32 %v1269, 2147483648
  %v1278 = vxor.u32 %v1270, 2147483648
  %v1279 = vxor.u32 %v1271, 2147483648
  %v1280 = vxor.u32 %v1272, 2147483648
  %v1281 = vxor.u32 %v1273, 2147483648
  %v1282 = vxor.u32 %v1274, 2147483648
  %v1283 = vmul.f32 %v1275, 1.442695
  %v1284 = vpow.pop %v1283
  %v1285 = vmul.f32 %v1276, 1.442695
  %v1286 = vpow.pop %v1285
  %v1287 = vmul.f32 %v1277, 1.442695
  %v1288 = vpow.pop %v1287
  %v1289 = vmul.f32 %v1278, 1.442695
  %v1290 = vpow.pop %v1289
  %v1291 = vmul.f32 %v1279, 1.442695
  %v1292 = vpow.pop %v1291
  %v1293 = vmul.f32 %v1280, 1.442695
  %v1294 = vpow.pop %v1293
  %v1295 = vmul.f32 %v1281, 1.442695
  %v1296 = vpow.pop %v1295
  %v1297 = vmul.f32 %v1282, 1.442695
  %v1298 = vpow.pop %v1297
  %v1299 = vadd.f32 %v1284, 1.0
  %v1300 = vadd.f32 %v1286, 1.0
  %v1301 = vadd.f32 %v1288, 1.0
  %v1302 = vadd.f32 %v1290, 1.0
  %v1303 = vadd.f32 %v1292, 1.0
  %v1304 = vadd.f32 %v1294, 1.0
  %v1305 = vadd.f32 %v1296, 1.0
  %v1306 = vadd.f32 %v1298, 1.0
  %v1307 = vrcp.pop %v1299
  %v1308 = vmul.f32 %v1299, %v1307
  %v1309 = vsub.f32 1.0, %v1308
  %v1310 = vmul.f32 %v1307, %v1309
  %v1311 = vadd.f32 %v1307, %v1310
  %vm1312 = vweird.f32 %v1299
  %vm1313 = vweird.f32 %v1307
  %vm1314 = vmor %vm1312, %vm1313
  %v1315 = vsel %vm1314, %v1307, %v1311
  %v1316 = vand.u32 2147483647, %v1299
  %vm1317 = vcmp.eq.f32.partialorder %v1316, 8.507059e+37
  %v1318 = vand.u32 %v1299, 2147483648
  %v1319 = vor.u32 1.1754944e-38, %v1318
  %v1320 = vsel %vm1317, %v1319, %v1315
  %v1321 = vmul.f32 1.0, %v1320
  %v1322 = vrcp.pop %v1300
  %v1323 = vmul.f32 %v1300, %v1322
  %v1324 = vsub.f32 1.0, %v1323
  %v1325 = vmul.f32 %v1322, %v1324
  %v1326 = vadd.f32 %v1322, %v1325
  %vm1327 = vweird.f32 %v1300
  %vm1328 = vweird.f32 %v1322
  %vm1329 = vmor %vm1327, %vm1328
  %v1330 = vsel %vm1329, %v1322, %v1326
  %v1331 = vand.u32 2147483647, %v1300
  %vm1332 = vcmp.eq.f32.partialorder %v1331, 8.507059e+37
  %v1333 = vand.u32 %v1300, 2147483648
  %v1334 = vor.u32 1.1754944e-38, %v1333
  %v1335 = vsel %vm1332, %v1334, %v1330
  %v1336 = vmul.f32 1.0, %v1335
  %v1337 = vrcp.pop %v1301
  %v1338 = vmul.f32 %v1301, %v1337
  %v1339 = vsub.f32 1.0, %v1338
  %v1340 = vmul.f32 %v1337, %v1339
  %v1341 = vadd.f32 %v1337, %v1340
  %vm1342 = vweird.f32 %v1301
  %vm1343 = vweird.f32 %v1337
  %vm1344 = vmor %vm1342, %vm1343
  %v1345 = vsel %vm1344, %v1337, %v1341
  %v1346 = vand.u32 2147483647, %v1301
  %vm1347 = vcmp.eq.f32.partialorder %v1346, 8.507059e+37
  %v1348 = vand.u32 %v1301, 2147483648
  %v1349 = vor.u32 1.1754944e-38, %v1348
  %v1350 = vsel %vm1347, %v1349, %v1345
  %v1351 = vmul.f32 1.0, %v1350
  %v1352 = vrcp.pop %v1302
  %v1353 = vmul.f32 %v1302, %v1352
  %v1354 = vsub.f32 1.0, %v1353
  %v1355 = vmul.f32 %v1352, %v1354
  %v1356 = vadd.f32 %v1352, %v1355
  %vm1357 = vweird.f32 %v1302
  %vm1358 = vweird.f32 %v1352
  %vm1359 = vmor %vm1357, %vm1358
  %v1360 = vsel %vm1359, %v1352, %v1356
  %v1361 = vand.u32 2147483647, %v1302
  %vm1362 = vcmp.eq.f32.partialorder %v1361, 8.507059e+37
  %v1363 = vand.u32 %v1302, 2147483648
  %v1364 = vor.u32 1.1754944e-38, %v1363
  %v1365 = vsel %vm1362, %v1364, %v1360
  %v1366 = vmul.f32 1.0, %v1365
  %v1367 = vrcp.pop %v1303
  %v1368 = vmul.f32 %v1303, %v1367
  %v1369 = vsub.f32 1.0, %v1368
  %v1370 = vmul.f32 %v1367, %v1369
  %v1371 = vadd.f32 %v1367, %v1370
  %vm1372 = vweird.f32 %v1303
  %vm1373 = vweird.f32 %v1367
  %vm1374 = vmor %vm1372, %vm1373
  %v1375 = vsel %vm1374, %v1367, %v1371
  %v1376 = vand.u32 2147483647, %v1303
  %vm1377 = vcmp.eq.f32.partialorder %v1376, 8.507059e+37
  %v1378 = vand.u32 %v1303, 2147483648
  %v1379 = vor.u32 1.1754944e-38, %v1378
  %v1380 = vsel %vm1377, %v1379, %v1375
  %v1381 = vmul.f32 1.0, %v1380
  %v1382 = vrcp.pop %v1304
  %v1383 = vmul.f32 %v1304, %v1382
  %v1384 = vsub.f32 1.0, %v1383
  %v1385 = vmul.f32 %v1382, %v1384
  %v1386 = vadd.f32 %v1382, %v1385
  %vm1387 = vweird.f32 %v1304
  %vm1388 = vweird.f32 %v1382
  %vm1389 = vmor %vm1387, %vm1388
  %v1390 = vsel %vm1389, %v1382, %v1386
  %v1391 = vand.u32 2147483647, %v1304
  %vm1392 = vcmp.eq.f32.partialorder %v1391, 8.507059e+37
  %v1393 = vand.u32 %v1304, 2147483648
  %v1394 = vor.u32 1.1754944e-38, %v1393
  %v1395 = vsel %vm1392, %v1394, %v1390
  %v1396 = vmul.f32 1.0, %v1395
  %v1397 = vrcp.pop %v1305
  %v1398 = vmul.f32 %v1305, %v1397
  %v1399 = vsub.f32 1.0, %v1398
  %v1400 = vmul.f32 %v1397, %v1399
  %v1401 = vadd.f32 %v1397, %v1400
  %vm1402 = vweird.f32 %v1305
  %vm1403 = vweird.f32 %v1397
  %vm1404 = vmor %vm1402, %vm1403
  %v1405 = vsel %vm1404, %v1397, %v1401
  %v1406 = vand.u32 2147483647, %v1305
  %vm1407 = vcmp.eq.f32.partialorder %v1406, 8.507059e+37
  %v1408 = vand.u32 %v1305, 2147483648
  %v1409 = vor.u32 1.1754944e-38, %v1408
  %v1410 = vsel %vm1407, %v1409, %v1405
  %v1411 = vmul.f32 1.0, %v1410
  %v1412 = vrcp.pop %v1306
  %v1413 = vmul.f32 %v1306, %v1412
  %v1414 = vsub.f32 1.0, %v1413
  %v1415 = vmul.f32 %v1412, %v1414
  %v1416 = vadd.f32 %v1412, %v1415
  %vm1417 = vweird.f32 %v1306
  %vm1418 = vweird.f32 %v1412
  %vm1419 = vmor %vm1417, %vm1418
  %v1420 = vsel %vm1419, %v1412, %v1416
  %v1421 = vand.u32 2147483647, %v1306
  %vm1422 = vcmp.eq.f32.partialorder %v1421, 8.507059e+37
  %v1423 = vand.u32 %v1306, 2147483648
  %v1424 = vor.u32 1.1754944e-38, %v1423
  %v1425 = vsel %vm1422, %v1424, %v1420
  %v1426 = vmul.f32 1.0, %v1425
  %v1427 = vtanh.pop %v1268
  %v1428 = vtanh.pop %v1270
  %v1429 = vtanh.pop %v1272
  %v1430 = vtanh.pop %v1274
  %1435 = vrot.lane.b32.xlu0 %v1168, 64
  %v1436 = vpop.permute.xlu0 %1435
  %1437 = vrot.lane.b32.xlu0 %v1169, 64
  %v1438 = vpop.permute.xlu0 %1437
  %1439 = vrot.lane.b32.xlu0 %v1170, 64
  %v1440 = vpop.permute.xlu0 %1439
  %1441 = vrot.lane.b32.xlu0 %v1171, 64
  %v1442 = vpop.permute.xlu0 %1441
  %v1447 = vmul.f32 %v1321, %v1436
  %v1448 = vmul.f32 %v1351, %v1438
  %v1449 = vmul.f32 %v1381, %v1440
  %v1450 = vmul.f32 %v1411, %v1442
  %1455 = vrot.lane.b32.xlu0 %v1427, 64
  %v1456 = vpop.permute.xlu0 %1455
  %1457 = vrot.lane.b32.xlu0 %v1428, 64
  %v1458 = vpop.permute.xlu0 %1457
  %1459 = vrot.lane.b32.xlu0 %v1429, 64
  %v1460 = vpop.permute.xlu0 %1459
  %1461 = vrot.lane.b32.xlu0 %v1430, 64
  %v1462 = vpop.permute.xlu0 %1461
  %v1467 = vmul.f32 %v1321, %v1456
  %v1468 = vmul.f32 %v1351, %v1458
  %v1469 = vmul.f32 %v1381, %v1460
  %v1470 = vmul.f32 %v1411, %v1462
  %1475 = vrot.lane.b32.xlu0 %v1467, 64
  %v1476 = vpop.permute.xlu0 %1475
  %1477 = vrot.lane.b32.xlu0 %v1468, 64
  %v1478 = vpop.permute.xlu0 %1477
  %1479 = vrot.lane.b32.xlu0 %v1469, 64
  %v1480 = vpop.permute.xlu0 %1479
  %1481 = vrot.lane.b32.xlu0 %v1470, 64
  %v1482 = vpop.permute.xlu0 %1481
  %v1487 = vadd.f32 %v1447, %v1476
  %v1488 = vadd.f32 %v1448, %v1478
  %v1489 = vadd.f32 %v1449, %v1480
  %v1490 = vadd.f32 %v1450, %v1482
  %v1491 = vtanh.pop %v1487
  %v1492 = vtanh.pop %v1488
  %v1493 = vtanh.pop %v1489
  %v1494 = vtanh.pop %v1490
  %1499 = vrot.lane.b32.xlu0 %v1491, 64
  %v1500 = vpop.permute.xlu0 %1499
  %1501 = vrot.lane.b32.xlu0 %v1492, 64
  %v1502 = vpop.permute.xlu0 %1501
  %1503 = vrot.lane.b32.xlu0 %v1493, 64
  %v1504 = vpop.permute.xlu0 %1503
  %1505 = vrot.lane.b32.xlu0 %v1494, 64
  %v1506 = vpop.permute.xlu0 %1505
  %v1511 = vmul.f32 %v1336, %v1500
  %v1512 = vmul.f32 %v1366, %v1502
  %v1513 = vmul.f32 %v1396, %v1504
  %v1514 = vmul.f32 %v1426, %v1506
  %1515 = vst.msk [vmem:[#allocation2] sm:$0xff] %vm17, %v1511
  %1516 = vst.msk [vmem:[#allocation2 + $0x8] sm:$0xff] %vm17, %v1512
  %1517 = vst.msk [vmem:[#allocation2 + $0x10] sm:$0xff] %vm17, %v1513
  %1518 = vst.msk [vmem:[#allocation2 + $0x18] sm:$0xff] %vm17, %v1514
  %1523 = vrot.lane.b32.xlu0 %v1487, 64
  %v1524 = vpop.permute.xlu0 %1523
  %1525 = vrot.lane.b32.xlu0 %v1488, 64
  %v1526 = vpop.permute.xlu0 %1525
  %1527 = vrot.lane.b32.xlu0 %v1489, 64
  %v1528 = vpop.permute.xlu0 %1527
  %1529 = vrot.lane.b32.xlu0 %v1490, 64
  %v1530 = vpop.permute.xlu0 %1529
  %1535 = vst.msk [vmem:[#allocation3] sm:$0xff] %vm17, %v1524
  %1536 = vst.msk [vmem:[#allocation3 + $0x8] sm:$0xff] %vm17, %v1526
  %1537 = vst.msk [vmem:[#allocation3 + $0x10] sm:$0xff] %vm17, %v1528
  %1538 = vst.msk [vmem:[#allocation3 + $0x18] sm:$0xff] %vm17, %v1530
  %s1539 = scalar_lea.vmem [#allocation4], 96
  %1540 = vst.msk [vmem:[%s1539] sm:$0xff] %vm17, %v1511
  %1541 = vst.msk [vmem:[%s1539 + $0x8] sm:$0xff] %vm17, %v1512
  %1542 = vst.msk [vmem:[%s1539 + $0x10] sm:$0xff] %vm17, %v1513
  %1543 = vst.msk [vmem:[%s1539 + $0x18] sm:$0xff] %vm17, %v1514
  %v1544 = vld [vmem:[#allocation2] sm:$0xff]
  %v1545 = vld [vmem:[#allocation2 + $0x8] sm:$0xff]
  %v1546 = vld [vmem:[#allocation2 + $0x10] sm:$0xff]
  %v1547 = vld [vmem:[#allocation2 + $0x18] sm:$0xff]
  %v1548 = vld [vmem:[#allocation3] sm:$0xff]
  %v1549 = vld [vmem:[#allocation3 + $0x8] sm:$0xff]
  %v1550 = vld [vmem:[#allocation3 + $0x10] sm:$0xff]
  %v1551 = vld [vmem:[#allocation3 + $0x18] sm:$0xff]
  %s1552 = scalar_lea.vmem %s0, 256
  %v1553 = vld [vmem:[%s1552] sm:$0xff]
  %v1554 = vld [vmem:[%s1552 + $0x8] sm:$0xff]
  %v1555 = vld [vmem:[%s1552 + $0x10] sm:$0xff]
  %v1556 = vld [vmem:[%s1552 + $0x18] sm:$0xff]
  %v1557 = vld [vmem:[%s1552 + $0x20] sm:$0xff]
  %v1558 = vld [vmem:[%s1552 + $0x28] sm:$0xff]
  %v1559 = vld [vmem:[%s1552 + $0x30] sm:$0xff]
  %v1560 = vld [vmem:[%s1552 + $0x38] sm:$0xff]
  %v1561 = vld [vmem:[%s1] sm:$0xff]
  %v1562 = vld [vmem:[%s1 + $0x8] sm:$0xff]
  %v1563 = vld [vmem:[%s1 + $0x10] sm:$0xff]
  %v1564 = vld [vmem:[%s1 + $0x18] sm:$0xff]
  %v1565 = vld [vmem:[%s1 + $0x20] sm:$0xff]
  %v1566 = vld [vmem:[%s1 + $0x28] sm:$0xff]
  %v1567 = vld [vmem:[%s1 + $0x30] sm:$0xff]
  %v1568 = vld [vmem:[%s1 + $0x38] sm:$0xff]
  %v1569 = vld [vmem:[%s1 + $0x40] sm:$0xff]
  %v1570 = vld [vmem:[%s1 + $0x48] sm:$0xff]
  %v1571 = vld [vmem:[%s1 + $0x50] sm:$0xff]
  %v1572 = vld [vmem:[%s1 + $0x58] sm:$0xff]
  %v1573 = vld [vmem:[%s1 + $0x60] sm:$0xff]
  %v1574 = vld [vmem:[%s1 + $0x68] sm:$0xff]
  %v1575 = vld [vmem:[%s1 + $0x70] sm:$0xff]
  %v1576 = vld [vmem:[%s1 + $0x78] sm:$0xff]
  %v1578 = vsel %vm17, %v1544, 0
  %v1581 = vsel %vm17, %v1545, 0
  %v1584 = vsel %vm17, %v1546, 0
  %v1587 = vsel %vm17, %v1547, 0
  %1589 = vmatpush.msra.mxu0 0.0
  %1590 = vmatpush.msra.mxu0 0.0
  %1591 = vmatpush.msra.mxu0 0.0
  %1592 = vmatpush.msra.mxu0 0.0
  %1593 = vmatpush.msra.mxu0 0.0
  %1594 = vmatpush.msra.mxu0 0.0
  %1595 = vmatpush.msra.mxu0 0.0
  %1596 = vmatpush.msra.mxu0 0.0
  %1597 = vmatpush.msra.mxu0 %v1575
  %1598 = vmatpush.msra.mxu0 %v1573
  %1599 = vmatpush.msra.mxu0 %v1571
  %1600 = vmatpush.msra.mxu0 %v1569
  %1601 = vmatpush.msra.mxu0 %v1567
  %1602 = vmatpush.msra.mxu0 %v1565
  %1603 = vmatpush.msra.mxu0 %v1563
  %1604 = vmatpush.msra.mxu0 %v1561
  %1605 = vmatmul.f32.gmra.mxu0 %v1578
  %v1606 = vpop.f32.mrf.mxu0
  %v1607 = vadd.f32 0.0, %v1606
  %1608 = vmatmul.f32.gmra.mxu0 %v1581
  %v1609 = vpop.f32.mrf.mxu0
  %v1610 = vadd.f32 0.0, %v1609
  %1611 = vmatmul.f32.gmra.mxu0 %v1584
  %v1612 = vpop.f32.mrf.mxu0
  %v1613 = vadd.f32 0.0, %v1612
  %1614 = vmatmul.f32.gmra.mxu0 %v1587
  %v1615 = vpop.f32.mrf.mxu0
  %v1616 = vadd.f32 0.0, %v1615
  %1617 = vdwg.mxu0
  %1618 = vmatpush.msra.mxu0 0.0
  %1619 = vmatpush.msra.mxu0 0.0
  %1620 = vmatpush.msra.mxu0 0.0
  %1621 = vmatpush.msra.mxu0 0.0
  %1622 = vmatpush.msra.mxu0 0.0
  %1623 = vmatpush.msra.mxu0 0.0
  %1624 = vmatpush.msra.mxu0 0.0
  %1625 = vmatpush.msra.mxu0 0.0
  %1626 = vmatpush.msra.mxu0 %v1576
  %1627 = vmatpush.msra.mxu0 %v1574
  %1628 = vmatpush.msra.mxu0 %v1572
  %1629 = vmatpush.msra.mxu0 %v1570
  %1630 = vmatpush.msra.mxu0 %v1568
  %1631 = vmatpush.msra.mxu0 %v1566
  %1632 = vmatpush.msra.mxu0 %v1564
  %1633 = vmatpush.msra.mxu0 %v1562
  %1634 = vmatmul.f32.gmra.mxu0 %v1578
  %v1635 = vpop.f32.mrf.mxu0
  %v1636 = vadd.f32 0.0, %v1635
  %1637 = vmatmul.f32.gmra.mxu0 %v1581
  %v1638 = vpop.f32.mrf.mxu0
  %v1639 = vadd.f32 0.0, %v1638
  %1640 = vmatmul.f32.gmra.mxu0 %v1584
  %v1641 = vpop.f32.mrf.mxu0
  %v1642 = vadd.f32 0.0, %v1641
  %1643 = vmatmul.f32.gmra.mxu0 %v1587
  %v1644 = vpop.f32.mrf.mxu0
  %v1645 = vadd.f32 0.0, %v1644
  %1646 = vdwg.mxu0
  %v1647 = vadd.f32 %v1553, %v1607
  %v1648 = vadd.f32 %v1554, %v1636
  %v1649 = vadd.f32 %v1555, %v1610
  %v1650 = vadd.f32 %v1556, %v1639
  %v1651 = vadd.f32 %v1557, %v1613
  %v1652 = vadd.f32 %v1558, %v1642
  %v1653 = vadd.f32 %v1559, %v1616
  %v1654 = vadd.f32 %v1560, %v1645
  %v1655 = vxor.u32 %v1647, 2147483648
  %v1656 = vxor.u32 %v1648, 2147483648
  %v1657 = vxor.u32 %v1649, 2147483648
  %v1658 = vxor.u32 %v1650, 2147483648
  %v1659 = vxor.u32 %v1651, 2147483648
  %v1660 = vxor.u32 %v1652, 2147483648
  %v1661 = vxor.u32 %v1653, 2147483648
  %v1662 = vxor.u32 %v1654, 2147483648
  %v1663 = vmul.f32 %v1655, 1.442695
  %v1664 = vpow.pop %v1663
  %v1665 = vmul.f32 %v1656, 1.442695
  %v1666 = vpow.pop %v1665
  %v1667 = vmul.f32 %v1657, 1.442695
  %v1668 = vpow.pop %v1667
  %v1669 = vmul.f32 %v1658, 1.442695
  %v1670 = vpow.pop %v1669
  %v1671 = vmul.f32 %v1659, 1.442695
  %v1672 = vpow.pop %v1671
  %v1673 = vmul.f32 %v1660, 1.442695
  %v1674 = vpow.pop %v1673
  %v1675 = vmul.f32 %v1661, 1.442695
  %v1676 = vpow.pop %v1675
  %v1677 = vmul.f32 %v1662, 1.442695
  %v1678 = vpow.pop %v1677
  %v1679 = vadd.f32 %v1664, 1.0
  %v1680 = vadd.f32 %v1666, 1.0
  %v1681 = vadd.f32 %v1668, 1.0
  %v1682 = vadd.f32 %v1670, 1.0
  %v1683 = vadd.f32 %v1672, 1.0
  %v1684 = vadd.f32 %v1674, 1.0
  %v1685 = vadd.f32 %v1676, 1.0
  %v1686 = vadd.f32 %v1678, 1.0
  %v1687 = vrcp.pop %v1679
  %v1688 = vmul.f32 %v1679, %v1687
  %v1689 = vsub.f32 1.0, %v1688
  %v1690 = vmul.f32 %v1687, %v1689
  %v1691 = vadd.f32 %v1687, %v1690
  %vm1692 = vweird.f32 %v1679
  %vm1693 = vweird.f32 %v1687
  %vm1694 = vmor %vm1692, %vm1693
  %v1695 = vsel %vm1694, %v1687, %v1691
  %v1696 = vand.u32 2147483647, %v1679
  %vm1697 = vcmp.eq.f32.partialorder %v1696, 8.507059e+37
  %v1698 = vand.u32 %v1679, 2147483648
  %v1699 = vor.u32 1.1754944e-38, %v1698
  %v1700 = vsel %vm1697, %v1699, %v1695
  %v1701 = vmul.f32 1.0, %v1700
  %v1702 = vrcp.pop %v1680
  %v1703 = vmul.f32 %v1680, %v1702
  %v1704 = vsub.f32 1.0, %v1703
  %v1705 = vmul.f32 %v1702, %v1704
  %v1706 = vadd.f32 %v1702, %v1705
  %vm1707 = vweird.f32 %v1680
  %vm1708 = vweird.f32 %v1702
  %vm1709 = vmor %vm1707, %vm1708
  %v1710 = vsel %vm1709, %v1702, %v1706
  %v1711 = vand.u32 2147483647, %v1680
  %vm1712 = vcmp.eq.f32.partialorder %v1711, 8.507059e+37
  %v1713 = vand.u32 %v1680, 2147483648
  %v1714 = vor.u32 1.1754944e-38, %v1713
  %v1715 = vsel %vm1712, %v1714, %v1710
  %v1716 = vmul.f32 1.0, %v1715
  %v1717 = vrcp.pop %v1681
  %v1718 = vmul.f32 %v1681, %v1717
  %v1719 = vsub.f32 1.0, %v1718
  %v1720 = vmul.f32 %v1717, %v1719
  %v1721 = vadd.f32 %v1717, %v1720
  %vm1722 = vweird.f32 %v1681
  %vm1723 = vweird.f32 %v1717
  %vm1724 = vmor %vm1722, %vm1723
  %v1725 = vsel %vm1724, %v1717, %v1721
  %v1726 = vand.u32 2147483647, %v1681
  %vm1727 = vcmp.eq.f32.partialorder %v1726, 8.507059e+37
  %v1728 = vand.u32 %v1681, 2147483648
  %v1729 = vor.u32 1.1754944e-38, %v1728
  %v1730 = vsel %vm1727, %v1729, %v1725
  %v1731 = vmul.f32 1.0, %v1730
  %v1732 = vrcp.pop %v1682
  %v1733 = vmul.f32 %v1682, %v1732
  %v1734 = vsub.f32 1.0, %v1733
  %v1735 = vmul.f32 %v1732, %v1734
  %v1736 = vadd.f32 %v1732, %v1735
  %vm1737 = vweird.f32 %v1682
  %vm1738 = vweird.f32 %v1732
  %vm1739 = vmor %vm1737, %vm1738
  %v1740 = vsel %vm1739, %v1732, %v1736
  %v1741 = vand.u32 2147483647, %v1682
  %vm1742 = vcmp.eq.f32.partialorder %v1741, 8.507059e+37
  %v1743 = vand.u32 %v1682, 2147483648
  %v1744 = vor.u32 1.1754944e-38, %v1743
  %v1745 = vsel %vm1742, %v1744, %v1740
  %v1746 = vmul.f32 1.0, %v1745
  %v1747 = vrcp.pop %v1683
  %v1748 = vmul.f32 %v1683, %v1747
  %v1749 = vsub.f32 1.0, %v1748
  %v1750 = vmul.f32 %v1747, %v1749
  %v1751 = vadd.f32 %v1747, %v1750
  %vm1752 = vweird.f32 %v1683
  %vm1753 = vweird.f32 %v1747
  %vm1754 = vmor %vm1752, %vm1753
  %v1755 = vsel %vm1754, %v1747, %v1751
  %v1756 = vand.u32 2147483647, %v1683
  %vm1757 = vcmp.eq.f32.partialorder %v1756, 8.507059e+37
  %v1758 = vand.u32 %v1683, 2147483648
  %v1759 = vor.u32 1.1754944e-38, %v1758
  %v1760 = vsel %vm1757, %v1759, %v1755
  %v1761 = vmul.f32 1.0, %v1760
  %v1762 = vrcp.pop %v1684
  %v1763 = vmul.f32 %v1684, %v1762
  %v1764 = vsub.f32 1.0, %v1763
  %v1765 = vmul.f32 %v1762, %v1764
  %v1766 = vadd.f32 %v1762, %v1765
  %vm1767 = vweird.f32 %v1684
  %vm1768 = vweird.f32 %v1762
  %vm1769 = vmor %vm1767, %vm1768
  %v1770 = vsel %vm1769, %v1762, %v1766
  %v1771 = vand.u32 2147483647, %v1684
  %vm1772 = vcmp.eq.f32.partialorder %v1771, 8.507059e+37
  %v1773 = vand.u32 %v1684, 2147483648
  %v1774 = vor.u32 1.1754944e-38, %v1773
  %v1775 = vsel %vm1772, %v1774, %v1770
  %v1776 = vmul.f32 1.0, %v1775
  %v1777 = vrcp.pop %v1685
  %v1778 = vmul.f32 %v1685, %v1777
  %v1779 = vsub.f32 1.0, %v1778
  %v1780 = vmul.f32 %v1777, %v1779
  %v1781 = vadd.f32 %v1777, %v1780
  %vm1782 = vweird.f32 %v1685
  %vm1783 = vweird.f32 %v1777
  %vm1784 = vmor %vm1782, %vm1783
  %v1785 = vsel %vm1784, %v1777, %v1781
  %v1786 = vand.u32 2147483647, %v1685
  %vm1787 = vcmp.eq.f32.partialorder %v1786, 8.507059e+37
  %v1788 = vand.u32 %v1685, 2147483648
  %v1789 = vor.u32 1.1754944e-38, %v1788
  %v1790 = vsel %vm1787, %v1789, %v1785
  %v1791 = vmul.f32 1.0, %v1790
  %v1792 = vrcp.pop %v1686
  %v1793 = vmul.f32 %v1686, %v1792
  %v1794 = vsub.f32 1.0, %v1793
  %v1795 = vmul.f32 %v1792, %v1794
  %v1796 = vadd.f32 %v1792, %v1795
  %vm1797 = vweird.f32 %v1686
  %vm1798 = vweird.f32 %v1792
  %vm1799 = vmor %vm1797, %vm1798
  %v1800 = vsel %vm1799, %v1792, %v1796
  %v1801 = vand.u32 2147483647, %v1686
  %vm1802 = vcmp.eq.f32.partialorder %v1801, 8.507059e+37
  %v1803 = vand.u32 %v1686, 2147483648
  %v1804 = vor.u32 1.1754944e-38, %v1803
  %v1805 = vsel %vm1802, %v1804, %v1800
  %v1806 = vmul.f32 1.0, %v1805
  %v1807 = vtanh.pop %v1648
  %v1808 = vtanh.pop %v1650
  %v1809 = vtanh.pop %v1652
  %v1810 = vtanh.pop %v1654
  %1815 = vrot.lane.b32.xlu0 %v1548, 64
  %v1816 = vpop.permute.xlu0 %1815
  %1817 = vrot.lane.b32.xlu0 %v1549, 64
  %v1818 = vpop.permute.xlu0 %1817
  %1819 = vrot.lane.b32.xlu0 %v1550, 64
  %v1820 = vpop.permute.xlu0 %1819
  %1821 = vrot.lane.b32.xlu0 %v1551, 64
  %v1822 = vpop.permute.xlu0 %1821
  %v1827 = vmul.f32 %v1701, %v1816
  %v1828 = vmul.f32 %v1731, %v1818
  %v1829 = vmul.f32 %v1761, %v1820
  %v1830 = vmul.f32 %v1791, %v1822
  %1835 = vrot.lane.b32.xlu0 %v1807, 64
  %v1836 = vpop.permute.xlu0 %1835
  %1837 = vrot.lane.b32.xlu0 %v1808, 64
  %v1838 = vpop.permute.xlu0 %1837
  %1839 = vrot.lane.b32.xlu0 %v1809, 64
  %v1840 = vpop.permute.xlu0 %1839
  %1841 = vrot.lane.b32.xlu0 %v1810, 64
  %v1842 = vpop.permute.xlu0 %1841
  %v1847 = vmul.f32 %v1701, %v1836
  %v1848 = vmul.f32 %v1731, %v1838
  %v1849 = vmul.f32 %v1761, %v1840
  %v1850 = vmul.f32 %v1791, %v1842
  %1855 = vrot.lane.b32.xlu0 %v1847, 64
  %v1856 = vpop.permute.xlu0 %1855
  %1857 = vrot.lane.b32.xlu0 %v1848, 64
  %v1858 = vpop.permute.xlu0 %1857
  %1859 = vrot.lane.b32.xlu0 %v1849, 64
  %v1860 = vpop.permute.xlu0 %1859
  %1861 = vrot.lane.b32.xlu0 %v1850, 64
  %v1862 = vpop.permute.xlu0 %1861
  %v1867 = vadd.f32 %v1827, %v1856
  %v1868 = vadd.f32 %v1828, %v1858
  %v1869 = vadd.f32 %v1829, %v1860
  %v1870 = vadd.f32 %v1830, %v1862
  %v1871 = vtanh.pop %v1867
  %v1872 = vtanh.pop %v1868
  %v1873 = vtanh.pop %v1869
  %v1874 = vtanh.pop %v1870
  %1879 = vrot.lane.b32.xlu0 %v1871, 64
  %v1880 = vpop.permute.xlu0 %1879
  %1881 = vrot.lane.b32.xlu0 %v1872, 64
  %v1882 = vpop.permute.xlu0 %1881
  %1883 = vrot.lane.b32.xlu0 %v1873, 64
  %v1884 = vpop.permute.xlu0 %1883
  %1885 = vrot.lane.b32.xlu0 %v1874, 64
  %v1886 = vpop.permute.xlu0 %1885
  %v1891 = vmul.f32 %v1716, %v1880
  %v1892 = vmul.f32 %v1746, %v1882
  %v1893 = vmul.f32 %v1776, %v1884
  %v1894 = vmul.f32 %v1806, %v1886
  %1895 = vst.msk [vmem:[#allocation2] sm:$0xff] %vm17, %v1891
  %1896 = vst.msk [vmem:[#allocation2 + $0x8] sm:$0xff] %vm17, %v1892
  %1897 = vst.msk [vmem:[#allocation2 + $0x10] sm:$0xff] %vm17, %v1893
  %1898 = vst.msk [vmem:[#allocation2 + $0x18] sm:$0xff] %vm17, %v1894
  %1903 = vrot.lane.b32.xlu0 %v1867, 64
  %v1904 = vpop.permute.xlu0 %1903
  %1905 = vrot.lane.b32.xlu0 %v1868, 64
  %v1906 = vpop.permute.xlu0 %1905
  %1907 = vrot.lane.b32.xlu0 %v1869, 64
  %v1908 = vpop.permute.xlu0 %1907
  %1909 = vrot.lane.b32.xlu0 %v1870, 64
  %v1910 = vpop.permute.xlu0 %1909
  %1915 = vst.msk [vmem:[#allocation3] sm:$0xff] %vm17, %v1904
  %1916 = vst.msk [vmem:[#allocation3 + $0x8] sm:$0xff] %vm17, %v1906
  %1917 = vst.msk [vmem:[#allocation3 + $0x10] sm:$0xff] %vm17, %v1908
  %1918 = vst.msk [vmem:[#allocation3 + $0x18] sm:$0xff] %vm17, %v1910
  %s1919 = scalar_lea.vmem [#allocation4], 128
  %1920 = vst.msk [vmem:[%s1919] sm:$0xff] %vm17, %v1891
  %1921 = vst.msk [vmem:[%s1919 + $0x8] sm:$0xff] %vm17, %v1892
  %1922 = vst.msk [vmem:[%s1919 + $0x10] sm:$0xff] %vm17, %v1893
  %1923 = vst.msk [vmem:[%s1919 + $0x18] sm:$0xff] %vm17, %v1894
  %v1924 = vld [vmem:[#allocation2] sm:$0xff]
  %v1925 = vld [vmem:[#allocation2 + $0x8] sm:$0xff]
  %v1926 = vld [vmem:[#allocation2 + $0x10] sm:$0xff]
  %v1927 = vld [vmem:[#allocation2 + $0x18] sm:$0xff]
  %v1928 = vld [vmem:[#allocation3] sm:$0xff]
  %v1929 = vld [vmem:[#allocation3 + $0x8] sm:$0xff]
  %v1930 = vld [vmem:[#allocation3 + $0x10] sm:$0xff]
  %v1931 = vld [vmem:[#allocation3 + $0x18] sm:$0xff]
  %s1932 = scalar_lea.vmem %s0, 320
  %v1933 = vld [vmem:[%s1932] sm:$0xff]
  %v1934 = vld [vmem:[%s1932 + $0x8] sm:$0xff]
  %v1935 = vld [vmem:[%s1932 + $0x10] sm:$0xff]
  %v1936 = vld [vmem:[%s1932 + $0x18] sm:$0xff]
  %v1937 = vld [vmem:[%s1932 + $0x20] sm:$0xff]
  %v1938 = vld [vmem:[%s1932 + $0x28] sm:$0xff]
  %v1939 = vld [vmem:[%s1932 + $0x30] sm:$0xff]
  %v1940 = vld [vmem:[%s1932 + $0x38] sm:$0xff]
  %v1941 = vld [vmem:[%s1] sm:$0xff]
  %v1942 = vld [vmem:[%s1 + $0x8] sm:$0xff]
  %v1943 = vld [vmem:[%s1 + $0x10] sm:$0xff]
  %v1944 = vld [vmem:[%s1 + $0x18] sm:$0xff]
  %v1945 = vld [vmem:[%s1 + $0x20] sm:$0xff]
  %v1946 = vld [vmem:[%s1 + $0x28] sm:$0xff]
  %v1947 = vld [vmem:[%s1 + $0x30] sm:$0xff]
  %v1948 = vld [vmem:[%s1 + $0x38] sm:$0xff]
  %v1949 = vld [vmem:[%s1 + $0x40] sm:$0xff]
  %v1950 = vld [vmem:[%s1 + $0x48] sm:$0xff]
  %v1951 = vld [vmem:[%s1 + $0x50] sm:$0xff]
  %v1952 = vld [vmem:[%s1 + $0x58] sm:$0xff]
  %v1953 = vld [vmem:[%s1 + $0x60] sm:$0xff]
  %v1954 = vld [vmem:[%s1 + $0x68] sm:$0xff]
  %v1955 = vld [vmem:[%s1 + $0x70] sm:$0xff]
  %v1956 = vld [vmem:[%s1 + $0x78] sm:$0xff]
  %v1958 = vsel %vm17, %v1924, 0
  %v1961 = vsel %vm17, %v1925, 0
  %v1964 = vsel %vm17, %v1926, 0
  %v1967 = vsel %vm17, %v1927, 0
  %1969 = vmatpush.msra.mxu0 0.0
  %1970 = vmatpush.msra.mxu0 0.0
  %1971 = vmatpush.msra.mxu0 0.0
  %1972 = vmatpush.msra.mxu0 0.0
  %1973 = vmatpush.msra.mxu0 0.0
  %1974 = vmatpush.msra.mxu0 0.0
  %1975 = vmatpush.msra.mxu0 0.0
  %1976 = vmatpush.msra.mxu0 0.0
  %1977 = vmatpush.msra.mxu0 %v1955
  %1978 = vmatpush.msra.mxu0 %v1953
  %1979 = vmatpush.msra.mxu0 %v1951
  %1980 = vmatpush.msra.mxu0 %v1949
  %1981 = vmatpush.msra.mxu0 %v1947
  %1982 = vmatpush.msra.mxu0 %v1945
  %1983 = vmatpush.msra.mxu0 %v1943
  %1984 = vmatpush.msra.mxu0 %v1941
  %1985 = vmatmul.f32.gmra.mxu0 %v1958
  %v1986 = vpop.f32.mrf.mxu0
  %v1987 = vadd.f32 0.0, %v1986
  %1988 = vmatmul.f32.gmra.mxu0 %v1961
  %v1989 = vpop.f32.mrf.mxu0
  %v1990 = vadd.f32 0.0, %v1989
  %1991 = vmatmul.f32.gmra.mxu0 %v1964
  %v1992 = vpop.f32.mrf.mxu0
  %v1993 = vadd.f32 0.0, %v1992
  %1994 = vmatmul.f32.gmra.mxu0 %v1967
  %v1995 = vpop.f32.mrf.mxu0
  %v1996 = vadd.f32 0.0, %v1995
  %1997 = vdwg.mxu0
  %1998 = vmatpush.msra.mxu0 0.0
  %1999 = vmatpush.msra.mxu0 0.0
  %2000 = vmatpush.msra.mxu0 0.0
  %2001 = vmatpush.msra.mxu0 0.0
  %2002 = vmatpush.msra.mxu0 0.0
  %2003 = vmatpush.msra.mxu0 0.0
  %2004 = vmatpush.msra.mxu0 0.0
  %2005 = vmatpush.msra.mxu0 0.0
  %2006 = vmatpush.msra.mxu0 %v1956
  %2007 = vmatpush.msra.mxu0 %v1954
  %2008 = vmatpush.msra.mxu0 %v1952
  %2009 = vmatpush.msra.mxu0 %v1950
  %2010 = vmatpush.msra.mxu0 %v1948
  %2011 = vmatpush.msra.mxu0 %v1946
  %2012 = vmatpush.msra.mxu0 %v1944
  %2013 = vmatpush.msra.mxu0 %v1942
  %2014 = vmatmul.f32.gmra.mxu0 %v1958
  %v2015 = vpop.f32.mrf.mxu0
  %v2016 = vadd.f32 0.0, %v2015
  %2017 = vmatmul.f32.gmra.mxu0 %v1961
  %v2018 = vpop.f32.mrf.mxu0
  %v2019 = vadd.f32 0.0, %v2018
  %2020 = vmatmul.f32.gmra.mxu0 %v1964
  %v2021 = vpop.f32.mrf.mxu0
  %v2022 = vadd.f32 0.0, %v2021
  %2023 = vmatmul.f32.gmra.mxu0 %v1967
  %v2024 = vpop.f32.mrf.mxu0
  %v2025 = vadd.f32 0.0, %v2024
  %2026 = vdwg.mxu0
  %v2027 = vadd.f32 %v1933, %v1987
  %v2028 = vadd.f32 %v1934, %v2016
  %v2029 = vadd.f32 %v1935, %v1990
  %v2030 = vadd.f32 %v1936, %v2019
  %v2031 = vadd.f32 %v1937, %v1993
  %v2032 = vadd.f32 %v1938, %v2022
  %v2033 = vadd.f32 %v1939, %v1996
  %v2034 = vadd.f32 %v1940, %v2025
  %v2035 = vxor.u32 %v2027, 2147483648
  %v2036 = vxor.u32 %v2028, 2147483648
  %v2037 = vxor.u32 %v2029, 2147483648
  %v2038 = vxor.u32 %v2030, 2147483648
  %v2039 = vxor.u32 %v2031, 2147483648
  %v2040 = vxor.u32 %v2032, 2147483648
  %v2041 = vxor.u32 %v2033, 2147483648
  %v2042 = vxor.u32 %v2034, 2147483648
  %v2043 = vmul.f32 %v2035, 1.442695
  %v2044 = vpow.pop %v2043
  %v2045 = vmul.f32 %v2036, 1.442695
  %v2046 = vpow.pop %v2045
  %v2047 = vmul.f32 %v2037, 1.442695
  %v2048 = vpow.pop %v2047
  %v2049 = vmul.f32 %v2038, 1.442695
  %v2050 = vpow.pop %v2049
  %v2051 = vmul.f32 %v2039, 1.442695
  %v2052 = vpow.pop %v2051
  %v2053 = vmul.f32 %v2040, 1.442695
  %v2054 = vpow.pop %v2053
  %v2055 = vmul.f32 %v2041, 1.442695
  %v2056 = vpow.pop %v2055
  %v2057 = vmul.f32 %v2042, 1.442695
  %v2058 = vpow.pop %v2057
  %v2059 = vadd.f32 %v2044, 1.0
  %v2060 = vadd.f32 %v2046, 1.0
  %v2061 = vadd.f32 %v2048, 1.0
  %v2062 = vadd.f32 %v2050, 1.0
  %v2063 = vadd.f32 %v2052, 1.0
  %v2064 = vadd.f32 %v2054, 1.0
  %v2065 = vadd.f32 %v2056, 1.0
  %v2066 = vadd.f32 %v2058, 1.0
  %v2067 = vrcp.pop %v2059
  %v2068 = vmul.f32 %v2059, %v2067
  %v2069 = vsub.f32 1.0, %v2068
  %v2070 = vmul.f32 %v2067, %v2069
  %v2071 = vadd.f32 %v2067, %v2070
  %vm2072 = vweird.f32 %v2059
  %vm2073 = vweird.f32 %v2067
  %vm2074 = vmor %vm2072, %vm2073
  %v2075 = vsel %vm2074, %v2067, %v2071
  %v2076 = vand.u32 2147483647, %v2059
  %vm2077 = vcmp.eq.f32.partialorder %v2076, 8.507059e+37
  %v2078 = vand.u32 %v2059, 2147483648
  %v2079 = vor.u32 1.1754944e-38, %v2078
  %v2080 = vsel %vm2077, %v2079, %v2075
  %v2081 = vmul.f32 1.0, %v2080
  %v2082 = vrcp.pop %v2060
  %v2083 = vmul.f32 %v2060, %v2082
  %v2084 = vsub.f32 1.0, %v2083
  %v2085 = vmul.f32 %v2082, %v2084
  %v2086 = vadd.f32 %v2082, %v2085
  %vm2087 = vweird.f32 %v2060
  %vm2088 = vweird.f32 %v2082
  %vm2089 = vmor %vm2087, %vm2088
  %v2090 = vsel %vm2089, %v2082, %v2086
  %v2091 = vand.u32 2147483647, %v2060
  %vm2092 = vcmp.eq.f32.partialorder %v2091, 8.507059e+37
  %v2093 = vand.u32 %v2060, 2147483648
  %v2094 = vor.u32 1.1754944e-38, %v2093
  %v2095 = vsel %vm2092, %v2094, %v2090
  %v2096 = vmul.f32 1.0, %v2095
  %v2097 = vrcp.pop %v2061
  %v2098 = vmul.f32 %v2061, %v2097
  %v2099 = vsub.f32 1.0, %v2098
  %v2100 = vmul.f32 %v2097, %v2099
  %v2101 = vadd.f32 %v2097, %v2100
  %vm2102 = vweird.f32 %v2061
  %vm2103 = vweird.f32 %v2097
  %vm2104 = vmor %vm2102, %vm2103
  %v2105 = vsel %vm2104, %v2097, %v2101
  %v2106 = vand.u32 2147483647, %v2061
  %vm2107 = vcmp.eq.f32.partialorder %v2106, 8.507059e+37
  %v2108 = vand.u32 %v2061, 2147483648
  %v2109 = vor.u32 1.1754944e-38, %v2108
  %v2110 = vsel %vm2107, %v2109, %v2105
  %v2111 = vmul.f32 1.0, %v2110
  %v2112 = vrcp.pop %v2062
  %v2113 = vmul.f32 %v2062, %v2112
  %v2114 = vsub.f32 1.0, %v2113
  %v2115 = vmul.f32 %v2112, %v2114
  %v2116 = vadd.f32 %v2112, %v2115
  %vm2117 = vweird.f32 %v2062
  %vm2118 = vweird.f32 %v2112
  %vm2119 = vmor %vm2117, %vm2118
  %v2120 = vsel %vm2119, %v2112, %v2116
  %v2121 = vand.u32 2147483647, %v2062
  %vm2122 = vcmp.eq.f32.partialorder %v2121, 8.507059e+37
  %v2123 = vand.u32 %v2062, 2147483648
  %v2124 = vor.u32 1.1754944e-38, %v2123
  %v2125 = vsel %vm2122, %v2124, %v2120
  %v2126 = vmul.f32 1.0, %v2125
  %v2127 = vrcp.pop %v2063
  %v2128 = vmul.f32 %v2063, %v2127
  %v2129 = vsub.f32 1.0, %v2128
  %v2130 = vmul.f32 %v2127, %v2129
  %v2131 = vadd.f32 %v2127, %v2130
  %vm2132 = vweird.f32 %v2063
  %vm2133 = vweird.f32 %v2127
  %vm2134 = vmor %vm2132, %vm2133
  %v2135 = vsel %vm2134, %v2127, %v2131
  %v2136 = vand.u32 2147483647, %v2063
  %vm2137 = vcmp.eq.f32.partialorder %v2136, 8.507059e+37
  %v2138 = vand.u32 %v2063, 2147483648
  %v2139 = vor.u32 1.1754944e-38, %v2138
  %v2140 = vsel %vm2137, %v2139, %v2135
  %v2141 = vmul.f32 1.0, %v2140
  %v2142 = vrcp.pop %v2064
  %v2143 = vmul.f32 %v2064, %v2142
  %v2144 = vsub.f32 1.0, %v2143
  %v2145 = vmul.f32 %v2142, %v2144
  %v2146 = vadd.f32 %v2142, %v2145
  %vm2147 = vweird.f32 %v2064
  %vm2148 = vweird.f32 %v2142
  %vm2149 = vmor %vm2147, %vm2148
  %v2150 = vsel %vm2149, %v2142, %v2146
  %v2151 = vand.u32 2147483647, %v2064
  %vm2152 = vcmp.eq.f32.partialorder %v2151, 8.507059e+37
  %v2153 = vand.u32 %v2064, 2147483648
  %v2154 = vor.u32 1.1754944e-38, %v2153
  %v2155 = vsel %vm2152, %v2154, %v2150
  %v2156 = vmul.f32 1.0, %v2155
  %v2157 = vrcp.pop %v2065
  %v2158 = vmul.f32 %v2065, %v2157
  %v2159 = vsub.f32 1.0, %v2158
  %v2160 = vmul.f32 %v2157, %v2159
  %v2161 = vadd.f32 %v2157, %v2160
  %vm2162 = vweird.f32 %v2065
  %vm2163 = vweird.f32 %v2157
  %vm2164 = vmor %vm2162, %vm2163
  %v2165 = vsel %vm2164, %v2157, %v2161
  %v2166 = vand.u32 2147483647, %v2065
  %vm2167 = vcmp.eq.f32.partialorder %v2166, 8.507059e+37
  %v2168 = vand.u32 %v2065, 2147483648
  %v2169 = vor.u32 1.1754944e-38, %v2168
  %v2170 = vsel %vm2167, %v2169, %v2165
  %v2171 = vmul.f32 1.0, %v2170
  %v2172 = vrcp.pop %v2066
  %v2173 = vmul.f32 %v2066, %v2172
  %v2174 = vsub.f32 1.0, %v2173
  %v2175 = vmul.f32 %v2172, %v2174
  %v2176 = vadd.f32 %v2172, %v2175
  %vm2177 = vweird.f32 %v2066
  %vm2178 = vweird.f32 %v2172
  %vm2179 = vmor %vm2177, %vm2178
  %v2180 = vsel %vm2179, %v2172, %v2176
  %v2181 = vand.u32 2147483647, %v2066
  %vm2182 = vcmp.eq.f32.partialorder %v2181, 8.507059e+37
  %v2183 = vand.u32 %v2066, 2147483648
  %v2184 = vor.u32 1.1754944e-38, %v2183
  %v2185 = vsel %vm2182, %v2184, %v2180
  %v2186 = vmul.f32 1.0, %v2185
  %v2187 = vtanh.pop %v2028
  %v2188 = vtanh.pop %v2030
  %v2189 = vtanh.pop %v2032
  %v2190 = vtanh.pop %v2034
  %2195 = vrot.lane.b32.xlu0 %v1928, 64
  %v2196 = vpop.permute.xlu0 %2195
  %2197 = vrot.lane.b32.xlu0 %v1929, 64
  %v2198 = vpop.permute.xlu0 %2197
  %2199 = vrot.lane.b32.xlu0 %v1930, 64
  %v2200 = vpop.permute.xlu0 %2199
  %2201 = vrot.lane.b32.xlu0 %v1931, 64
  %v2202 = vpop.permute.xlu0 %2201
  %v2207 = vmul.f32 %v2081, %v2196
  %v2208 = vmul.f32 %v2111, %v2198
  %v2209 = vmul.f32 %v2141, %v2200
  %v2210 = vmul.f32 %v2171, %v2202
  %2215 = vrot.lane.b32.xlu0 %v2187, 64
  %v2216 = vpop.permute.xlu0 %2215
  %2217 = vrot.lane.b32.xlu0 %v2188, 64
  %v2218 = vpop.permute.xlu0 %2217
  %2219 = vrot.lane.b32.xlu0 %v2189, 64
  %v2220 = vpop.permute.xlu0 %2219
  %2221 = vrot.lane.b32.xlu0 %v2190, 64
  %v2222 = vpop.permute.xlu0 %2221
  %v2227 = vmul.f32 %v2081, %v2216
  %v2228 = vmul.f32 %v2111, %v2218
  %v2229 = vmul.f32 %v2141, %v2220
  %v2230 = vmul.f32 %v2171, %v2222
  %2235 = vrot.lane.b32.xlu0 %v2227, 64
  %v2236 = vpop.permute.xlu0 %2235
  %2237 = vrot.lane.b32.xlu0 %v2228, 64
  %v2238 = vpop.permute.xlu0 %2237
  %2239 = vrot.lane.b32.xlu0 %v2229, 64
  %v2240 = vpop.permute.xlu0 %2239
  %2241 = vrot.lane.b32.xlu0 %v2230, 64
  %v2242 = vpop.permute.xlu0 %2241
  %v2247 = vadd.f32 %v2207, %v2236
  %v2248 = vadd.f32 %v2208, %v2238
  %v2249 = vadd.f32 %v2209, %v2240
  %v2250 = vadd.f32 %v2210, %v2242
  %v2251 = vtanh.pop %v2247
  %v2252 = vtanh.pop %v2248
  %v2253 = vtanh.pop %v2249
  %v2254 = vtanh.pop %v2250
  %2259 = vrot.lane.b32.xlu0 %v2251, 64
  %v2260 = vpop.permute.xlu0 %2259
  %2261 = vrot.lane.b32.xlu0 %v2252, 64
  %v2262 = vpop.permute.xlu0 %2261
  %2263 = vrot.lane.b32.xlu0 %v2253, 64
  %v2264 = vpop.permute.xlu0 %2263
  %2265 = vrot.lane.b32.xlu0 %v2254, 64
  %v2266 = vpop.permute.xlu0 %2265
  %v2271 = vmul.f32 %v2096, %v2260
  %v2272 = vmul.f32 %v2126, %v2262
  %v2273 = vmul.f32 %v2156, %v2264
  %v2274 = vmul.f32 %v2186, %v2266
  %2275 = vst.msk [vmem:[#allocation2] sm:$0xff] %vm17, %v2271
  %2276 = vst.msk [vmem:[#allocation2 + $0x8] sm:$0xff] %vm17, %v2272
  %2277 = vst.msk [vmem:[#allocation2 + $0x10] sm:$0xff] %vm17, %v2273
  %2278 = vst.msk [vmem:[#allocation2 + $0x18] sm:$0xff] %vm17, %v2274
  %2283 = vrot.lane.b32.xlu0 %v2247, 64
  %v2284 = vpop.permute.xlu0 %2283
  %2285 = vrot.lane.b32.xlu0 %v2248, 64
  %v2286 = vpop.permute.xlu0 %2285
  %2287 = vrot.lane.b32.xlu0 %v2249, 64
  %v2288 = vpop.permute.xlu0 %2287
  %2289 = vrot.lane.b32.xlu0 %v2250, 64
  %v2290 = vpop.permute.xlu0 %2289
  %2295 = vst.msk [vmem:[#allocation3] sm:$0xff] %vm17, %v2284
  %2296 = vst.msk [vmem:[#allocation3 + $0x8] sm:$0xff] %vm17, %v2286
  %2297 = vst.msk [vmem:[#allocation3 + $0x10] sm:$0xff] %vm17, %v2288
  %2298 = vst.msk [vmem:[#allocation3 + $0x18] sm:$0xff] %vm17, %v2290
  %s2299 = scalar_lea.vmem [#allocation4], 160
  %2300 = vst.msk [vmem:[%s2299] sm:$0xff] %vm17, %v2271
  %2301 = vst.msk [vmem:[%s2299 + $0x8] sm:$0xff] %vm17, %v2272
  %2302 = vst.msk [vmem:[%s2299 + $0x10] sm:$0xff] %vm17, %v2273
  %2303 = vst.msk [vmem:[%s2299 + $0x18] sm:$0xff] %vm17, %v2274
  %v2304 = vld [vmem:[#allocation2] sm:$0xff]
  %v2305 = vld [vmem:[#allocation2 + $0x8] sm:$0xff]
  %v2306 = vld [vmem:[#allocation2 + $0x10] sm:$0xff]
  %v2307 = vld [vmem:[#allocation2 + $0x18] sm:$0xff]
  %v2308 = vld [vmem:[#allocation3] sm:$0xff]
  %v2309 = vld [vmem:[#allocation3 + $0x8] sm:$0xff]
  %v2310 = vld [vmem:[#allocation3 + $0x10] sm:$0xff]
  %v2311 = vld [vmem:[#allocation3 + $0x18] sm:$0xff]
  %s2312 = scalar_lea.vmem %s0, 384
  %v2313 = vld [vmem:[%s2312] sm:$0xff]
  %v2314 = vld [vmem:[%s2312 + $0x8] sm:$0xff]
  %v2315 = vld [vmem:[%s2312 + $0x10] sm:$0xff]
  %v2316 = vld [vmem:[%s2312 + $0x18] sm:$0xff]
  %v2317 = vld [vmem:[%s2312 + $0x20] sm:$0xff]
  %v2318 = vld [vmem:[%s2312 + $0x28] sm:$0xff]
  %v2319 = vld [vmem:[%s2312 + $0x30] sm:$0xff]
  %v2320 = vld [vmem:[%s2312 + $0x38] sm:$0xff]
  %v2321 = vld [vmem:[%s1] sm:$0xff]
  %v2322 = vld [vmem:[%s1 + $0x8] sm:$0xff]
  %v2323 = vld [vmem:[%s1 + $0x10] sm:$0xff]
  %v2324 = vld [vmem:[%s1 + $0x18] sm:$0xff]
  %v2325 = vld [vmem:[%s1 + $0x20] sm:$0xff]
  %v2326 = vld [vmem:[%s1 + $0x28] sm:$0xff]
  %v2327 = vld [vmem:[%s1 + $0x30] sm:$0xff]
  %v2328 = vld [vmem:[%s1 + $0x38] sm:$0xff]
  %v2329 = vld [vmem:[%s1 + $0x40] sm:$0xff]
  %v2330 = vld [vmem:[%s1 + $0x48] sm:$0xff]
  %v2331 = vld [vmem:[%s1 + $0x50] sm:$0xff]
  %v2332 = vld [vmem:[%s1 + $0x58] sm:$0xff]
  %v2333 = vld [vmem:[%s1 + $0x60] sm:$0xff]
  %v2334 = vld [vmem:[%s1 + $0x68] sm:$0xff]
  %v2335 = vld [vmem:[%s1 + $0x70] sm:$0xff]
  %v2336 = vld [vmem:[%s1 + $0x78] sm:$0xff]
  %v2338 = vsel %vm17, %v2304, 0
  %v2341 = vsel %vm17, %v2305, 0
  %v2344 = vsel %vm17, %v2306, 0
  %v2347 = vsel %vm17, %v2307, 0
  %2349 = vmatpush.msra.mxu0 0.0
  %2350 = vmatpush.msra.mxu0 0.0
  %2351 = vmatpush.msra.mxu0 0.0
  %2352 = vmatpush.msra.mxu0 0.0
  %2353 = vmatpush.msra.mxu0 0.0
  %2354 = vmatpush.msra.mxu0 0.0
  %2355 = vmatpush.msra.mxu0 0.0
  %2356 = vmatpush.msra.mxu0 0.0
  %2357 = vmatpush.msra.mxu0 %v2335
  %2358 = vmatpush.msra.mxu0 %v2333
  %2359 = vmatpush.msra.mxu0 %v2331
  %2360 = vmatpush.msra.mxu0 %v2329
  %2361 = vmatpush.msra.mxu0 %v2327
  %2362 = vmatpush.msra.mxu0 %v2325
  %2363 = vmatpush.msra.mxu0 %v2323
  %2364 = vmatpush.msra.mxu0 %v2321
  %2365 = vmatmul.f32.gmra.mxu0 %v2338
  %v2366 = vpop.f32.mrf.mxu0
  %v2367 = vadd.f32 0.0, %v2366
  %2368 = vmatmul.f32.gmra.mxu0 %v2341
  %v2369 = vpop.f32.mrf.mxu0
  %v2370 = vadd.f32 0.0, %v2369
  %2371 = vmatmul.f32.gmra.mxu0 %v2344
  %v2372 = vpop.f32.mrf.mxu0
  %v2373 = vadd.f32 0.0, %v2372
  %2374 = vmatmul.f32.gmra.mxu0 %v2347
  %v2375 = vpop.f32.mrf.mxu0
  %v2376 = vadd.f32 0.0, %v2375
  %2377 = vdwg.mxu0
  %2378 = vmatpush.msra.mxu0 0.0
  %2379 = vmatpush.msra.mxu0 0.0
  %2380 = vmatpush.msra.mxu0 0.0
  %2381 = vmatpush.msra.mxu0 0.0
  %2382 = vmatpush.msra.mxu0 0.0
  %2383 = vmatpush.msra.mxu0 0.0
  %2384 = vmatpush.msra.mxu0 0.0
  %2385 = vmatpush.msra.mxu0 0.0
  %2386 = vmatpush.msra.mxu0 %v2336
  %2387 = vmatpush.msra.mxu0 %v2334
  %2388 = vmatpush.msra.mxu0 %v2332
  %2389 = vmatpush.msra.mxu0 %v2330
  %2390 = vmatpush.msra.mxu0 %v2328
  %2391 = vmatpush.msra.mxu0 %v2326
  %2392 = vmatpush.msra.mxu0 %v2324
  %2393 = vmatpush.msra.mxu0 %v2322
  %2394 = vmatmul.f32.gmra.mxu0 %v2338
  %v2395 = vpop.f32.mrf.mxu0
  %v2396 = vadd.f32 0.0, %v2395
  %2397 = vmatmul.f32.gmra.mxu0 %v2341
  %v2398 = vpop.f32.mrf.mxu0
  %v2399 = vadd.f32 0.0, %v2398
  %2400 = vmatmul.f32.gmra.mxu0 %v2344
  %v2401 = vpop.f32.mrf.mxu0
  %v2402 = vadd.f32 0.0, %v2401
  %2403 = vmatmul.f32.gmra.mxu0 %v2347
  %v2404 = vpop.f32.mrf.mxu0
  %v2405 = vadd.f32 0.0, %v2404
  %2406 = vdwg.mxu0
  %v2407 = vadd.f32 %v2313, %v2367
  %v2408 = vadd.f32 %v2314, %v2396
  %v2409 = vadd.f32 %v2315, %v2370
  %v2410 = vadd.f32 %v2316, %v2399
  %v2411 = vadd.f32 %v2317, %v2373
  %v2412 = vadd.f32 %v2318, %v2402
  %v2413 = vadd.f32 %v2319, %v2376
  %v2414 = vadd.f32 %v2320, %v2405
  %v2415 = vxor.u32 %v2407, 2147483648
  %v2416 = vxor.u32 %v2408, 2147483648
  %v2417 = vxor.u32 %v2409, 2147483648
  %v2418 = vxor.u32 %v2410, 2147483648
  %v2419 = vxor.u32 %v2411, 2147483648
  %v2420 = vxor.u32 %v2412, 2147483648
  %v2421 = vxor.u32 %v2413, 2147483648
  %v2422 = vxor.u32 %v2414, 2147483648
  %v2423 = vmul.f32 %v2415, 1.442695
  %v2424 = vpow.pop %v2423
  %v2425 = vmul.f32 %v2416, 1.442695
  %v2426 = vpow.pop %v2425
  %v2427 = vmul.f32 %v2417, 1.442695
  %v2428 = vpow.pop %v2427
  %v2429 = vmul.f32 %v2418, 1.442695
  %v2430 = vpow.pop %v2429
  %v2431 = vmul.f32 %v2419, 1.442695
  %v2432 = vpow.pop %v2431
  %v2433 = vmul.f32 %v2420, 1.442695
  %v2434 = vpow.pop %v2433
  %v2435 = vmul.f32 %v2421, 1.442695
  %v2436 = vpow.pop %v2435
  %v2437 = vmul.f32 %v2422, 1.442695
  %v2438 = vpow.pop %v2437
  %v2439 = vadd.f32 %v2424, 1.0
  %v2440 = vadd.f32 %v2426, 1.0
  %v2441 = vadd.f32 %v2428, 1.0
  %v2442 = vadd.f32 %v2430, 1.0
  %v2443 = vadd.f32 %v2432, 1.0
  %v2444 = vadd.f32 %v2434, 1.0
  %v2445 = vadd.f32 %v2436, 1.0
  %v2446 = vadd.f32 %v2438, 1.0
  %v2447 = vrcp.pop %v2439
  %v2448 = vmul.f32 %v2439, %v2447
  %v2449 = vsub.f32 1.0, %v2448
  %v2450 = vmul.f32 %v2447, %v2449
  %v2451 = vadd.f32 %v2447, %v2450
  %vm2452 = vweird.f32 %v2439
  %vm2453 = vweird.f32 %v2447
  %vm2454 = vmor %vm2452, %vm2453
  %v2455 = vsel %vm2454, %v2447, %v2451
  %v2456 = vand.u32 2147483647, %v2439
  %vm2457 = vcmp.eq.f32.partialorder %v2456, 8.507059e+37
  %v2458 = vand.u32 %v2439, 2147483648
  %v2459 = vor.u32 1.1754944e-38, %v2458
  %v2460 = vsel %vm2457, %v2459, %v2455
  %v2461 = vmul.f32 1.0, %v2460
  %v2462 = vrcp.pop %v2440
  %v2463 = vmul.f32 %v2440, %v2462
  %v2464 = vsub.f32 1.0, %v2463
  %v2465 = vmul.f32 %v2462, %v2464
  %v2466 = vadd.f32 %v2462, %v2465
  %vm2467 = vweird.f32 %v2440
  %vm2468 = vweird.f32 %v2462
  %vm2469 = vmor %vm2467, %vm2468
  %v2470 = vsel %vm2469, %v2462, %v2466
  %v2471 = vand.u32 2147483647, %v2440
  %vm2472 = vcmp.eq.f32.partialorder %v2471, 8.507059e+37
  %v2473 = vand.u32 %v2440, 2147483648
  %v2474 = vor.u32 1.1754944e-38, %v2473
  %v2475 = vsel %vm2472, %v2474, %v2470
  %v2476 = vmul.f32 1.0, %v2475
  %v2477 = vrcp.pop %v2441
  %v2478 = vmul.f32 %v2441, %v2477
  %v2479 = vsub.f32 1.0, %v2478
  %v2480 = vmul.f32 %v2477, %v2479
  %v2481 = vadd.f32 %v2477, %v2480
  %vm2482 = vweird.f32 %v2441
  %vm2483 = vweird.f32 %v2477
  %vm2484 = vmor %vm2482, %vm2483
  %v2485 = vsel %vm2484, %v2477, %v2481
  %v2486 = vand.u32 2147483647, %v2441
  %vm2487 = vcmp.eq.f32.partialorder %v2486, 8.507059e+37
  %v2488 = vand.u32 %v2441, 2147483648
  %v2489 = vor.u32 1.1754944e-38, %v2488
  %v2490 = vsel %vm2487, %v2489, %v2485
  %v2491 = vmul.f32 1.0, %v2490
  %v2492 = vrcp.pop %v2442
  %v2493 = vmul.f32 %v2442, %v2492
  %v2494 = vsub.f32 1.0, %v2493
  %v2495 = vmul.f32 %v2492, %v2494
  %v2496 = vadd.f32 %v2492, %v2495
  %vm2497 = vweird.f32 %v2442
  %vm2498 = vweird.f32 %v2492
  %vm2499 = vmor %vm2497, %vm2498
  %v2500 = vsel %vm2499, %v2492, %v2496
  %v2501 = vand.u32 2147483647, %v2442
  %vm2502 = vcmp.eq.f32.partialorder %v2501, 8.507059e+37
  %v2503 = vand.u32 %v2442, 2147483648
  %v2504 = vor.u32 1.1754944e-38, %v2503
  %v2505 = vsel %vm2502, %v2504, %v2500
  %v2506 = vmul.f32 1.0, %v2505
  %v2507 = vrcp.pop %v2443
  %v2508 = vmul.f32 %v2443, %v2507
  %v2509 = vsub.f32 1.0, %v2508
  %v2510 = vmul.f32 %v2507, %v2509
  %v2511 = vadd.f32 %v2507, %v2510
  %vm2512 = vweird.f32 %v2443
  %vm2513 = vweird.f32 %v2507
  %vm2514 = vmor %vm2512, %vm2513
  %v2515 = vsel %vm2514, %v2507, %v2511
  %v2516 = vand.u32 2147483647, %v2443
  %vm2517 = vcmp.eq.f32.partialorder %v2516, 8.507059e+37
  %v2518 = vand.u32 %v2443, 2147483648
  %v2519 = vor.u32 1.1754944e-38, %v2518
  %v2520 = vsel %vm2517, %v2519, %v2515
  %v2521 = vmul.f32 1.0, %v2520
  %v2522 = vrcp.pop %v2444
  %v2523 = vmul.f32 %v2444, %v2522
  %v2524 = vsub.f32 1.0, %v2523
  %v2525 = vmul.f32 %v2522, %v2524
  %v2526 = vadd.f32 %v2522, %v2525
  %vm2527 = vweird.f32 %v2444
  %vm2528 = vweird.f32 %v2522
  %vm2529 = vmor %vm2527, %vm2528
  %v2530 = vsel %vm2529, %v2522, %v2526
  %v2531 = vand.u32 2147483647, %v2444
  %vm2532 = vcmp.eq.f32.partialorder %v2531, 8.507059e+37
  %v2533 = vand.u32 %v2444, 2147483648
  %v2534 = vor.u32 1.1754944e-38, %v2533
  %v2535 = vsel %vm2532, %v2534, %v2530
  %v2536 = vmul.f32 1.0, %v2535
  %v2537 = vrcp.pop %v2445
  %v2538 = vmul.f32 %v2445, %v2537
  %v2539 = vsub.f32 1.0, %v2538
  %v2540 = vmul.f32 %v2537, %v2539
  %v2541 = vadd.f32 %v2537, %v2540
  %vm2542 = vweird.f32 %v2445
  %vm2543 = vweird.f32 %v2537
  %vm2544 = vmor %vm2542, %vm2543
  %v2545 = vsel %vm2544, %v2537, %v2541
  %v2546 = vand.u32 2147483647, %v2445
  %vm2547 = vcmp.eq.f32.partialorder %v2546, 8.507059e+37
  %v2548 = vand.u32 %v2445, 2147483648
  %v2549 = vor.u32 1.1754944e-38, %v2548
  %v2550 = vsel %vm2547, %v2549, %v2545
  %v2551 = vmul.f32 1.0, %v2550
  %v2552 = vrcp.pop %v2446
  %v2553 = vmul.f32 %v2446, %v2552
  %v2554 = vsub.f32 1.0, %v2553
  %v2555 = vmul.f32 %v2552, %v2554
  %v2556 = vadd.f32 %v2552, %v2555
  %vm2557 = vweird.f32 %v2446
  %vm2558 = vweird.f32 %v2552
  %vm2559 = vmor %vm2557, %vm2558
  %v2560 = vsel %vm2559, %v2552, %v2556
  %v2561 = vand.u32 2147483647, %v2446
  %vm2562 = vcmp.eq.f32.partialorder %v2561, 8.507059e+37
  %v2563 = vand.u32 %v2446, 2147483648
  %v2564 = vor.u32 1.1754944e-38, %v2563
  %v2565 = vsel %vm2562, %v2564, %v2560
  %v2566 = vmul.f32 1.0, %v2565
  %v2567 = vtanh.pop %v2408
  %v2568 = vtanh.pop %v2410
  %v2569 = vtanh.pop %v2412
  %v2570 = vtanh.pop %v2414
  %2575 = vrot.lane.b32.xlu0 %v2308, 64
  %v2576 = vpop.permute.xlu0 %2575
  %2577 = vrot.lane.b32.xlu0 %v2309, 64
  %v2578 = vpop.permute.xlu0 %2577
  %2579 = vrot.lane.b32.xlu0 %v2310, 64
  %v2580 = vpop.permute.xlu0 %2579
  %2581 = vrot.lane.b32.xlu0 %v2311, 64
  %v2582 = vpop.permute.xlu0 %2581
  %v2587 = vmul.f32 %v2461, %v2576
  %v2588 = vmul.f32 %v2491, %v2578
  %v2589 = vmul.f32 %v2521, %v2580
  %v2590 = vmul.f32 %v2551, %v2582
  %2595 = vrot.lane.b32.xlu0 %v2567, 64
  %v2596 = vpop.permute.xlu0 %2595
  %2597 = vrot.lane.b32.xlu0 %v2568, 64
  %v2598 = vpop.permute.xlu0 %2597
  %2599 = vrot.lane.b32.xlu0 %v2569, 64
  %v2600 = vpop.permute.xlu0 %2599
  %2601 = vrot.lane.b32.xlu0 %v2570, 64
  %v2602 = vpop.permute.xlu0 %2601
  %v2607 = vmul.f32 %v2461, %v2596
  %v2608 = vmul.f32 %v2491, %v2598
  %v2609 = vmul.f32 %v2521, %v2600
  %v2610 = vmul.f32 %v2551, %v2602
  %2615 = vrot.lane.b32.xlu0 %v2607, 64
  %v2616 = vpop.permute.xlu0 %2615
  %2617 = vrot.lane.b32.xlu0 %v2608, 64
  %v2618 = vpop.permute.xlu0 %2617
  %2619 = vrot.lane.b32.xlu0 %v2609, 64
  %v2620 = vpop.permute.xlu0 %2619
  %2621 = vrot.lane.b32.xlu0 %v2610, 64
  %v2622 = vpop.permute.xlu0 %2621
  %v2627 = vadd.f32 %v2587, %v2616
  %v2628 = vadd.f32 %v2588, %v2618
  %v2629 = vadd.f32 %v2589, %v2620
  %v2630 = vadd.f32 %v2590, %v2622
  %v2631 = vtanh.pop %v2627
  %v2632 = vtanh.pop %v2628
  %v2633 = vtanh.pop %v2629
  %v2634 = vtanh.pop %v2630
  %2639 = vrot.lane.b32.xlu0 %v2631, 64
  %v2640 = vpop.permute.xlu0 %2639
  %2641 = vrot.lane.b32.xlu0 %v2632, 64
  %v2642 = vpop.permute.xlu0 %2641
  %2643 = vrot.lane.b32.xlu0 %v2633, 64
  %v2644 = vpop.permute.xlu0 %2643
  %2645 = vrot.lane.b32.xlu0 %v2634, 64
  %v2646 = vpop.permute.xlu0 %2645
  %v2651 = vmul.f32 %v2476, %v2640
  %v2652 = vmul.f32 %v2506, %v2642
  %v2653 = vmul.f32 %v2536, %v2644
  %v2654 = vmul.f32 %v2566, %v2646
  %2655 = vst.msk [vmem:[#allocation2] sm:$0xff] %vm17, %v2651
  %2656 = vst.msk [vmem:[#allocation2 + $0x8] sm:$0xff] %vm17, %v2652
  %2657 = vst.msk [vmem:[#allocation2 + $0x10] sm:$0xff] %vm17, %v2653
  %2658 = vst.msk [vmem:[#allocation2 + $0x18] sm:$0xff] %vm17, %v2654
  %2663 = vrot.lane.b32.xlu0 %v2627, 64
  %v2664 = vpop.permute.xlu0 %2663
  %2665 = vrot.lane.b32.xlu0 %v2628, 64
  %v2666 = vpop.permute.xlu0 %2665
  %2667 = vrot.lane.b32.xlu0 %v2629, 64
  %v2668 = vpop.permute.xlu0 %2667
  %2669 = vrot.lane.b32.xlu0 %v2630, 64
  %v2670 = vpop.permute.xlu0 %2669
  %2675 = vst.msk [vmem:[#allocation3] sm:$0xff] %vm17, %v2664
  %2676 = vst.msk [vmem:[#allocation3 + $0x8] sm:$0xff] %vm17, %v2666
  %2677 = vst.msk [vmem:[#allocation3 + $0x10] sm:$0xff] %vm17, %v2668
  %2678 = vst.msk [vmem:[#allocation3 + $0x18] sm:$0xff] %vm17, %v2670
  %s2679 = scalar_lea.vmem [#allocation4], 192
  %2680 = vst.msk [vmem:[%s2679] sm:$0xff] %vm17, %v2651
  %2681 = vst.msk [vmem:[%s2679 + $0x8] sm:$0xff] %vm17, %v2652
  %2682 = vst.msk [vmem:[%s2679 + $0x10] sm:$0xff] %vm17, %v2653
  %2683 = vst.msk [vmem:[%s2679 + $0x18] sm:$0xff] %vm17, %v2654
  %v2684 = vld [vmem:[#allocation2] sm:$0xff]
  %v2685 = vld [vmem:[#allocation2 + $0x8] sm:$0xff]
  %v2686 = vld [vmem:[#allocation2 + $0x10] sm:$0xff]
  %v2687 = vld [vmem:[#allocation2 + $0x18] sm:$0xff]
  %v2688 = vld [vmem:[#allocation3] sm:$0xff]
  %v2689 = vld [vmem:[#allocation3 + $0x8] sm:$0xff]
  %v2690 = vld [vmem:[#allocation3 + $0x10] sm:$0xff]
  %v2691 = vld [vmem:[#allocation3 + $0x18] sm:$0xff]
  %s2692 = scalar_lea.vmem %s0, 448
  %v2693 = vld [vmem:[%s2692] sm:$0xff]
  %v2694 = vld [vmem:[%s2692 + $0x8] sm:$0xff]
  %v2695 = vld [vmem:[%s2692 + $0x10] sm:$0xff]
  %v2696 = vld [vmem:[%s2692 + $0x18] sm:$0xff]
  %v2697 = vld [vmem:[%s2692 + $0x20] sm:$0xff]
  %v2698 = vld [vmem:[%s2692 + $0x28] sm:$0xff]
  %v2699 = vld [vmem:[%s2692 + $0x30] sm:$0xff]
  %v2700 = vld [vmem:[%s2692 + $0x38] sm:$0xff]
  %v2701 = vld [vmem:[%s1] sm:$0xff]
  %v2702 = vld [vmem:[%s1 + $0x8] sm:$0xff]
  %v2703 = vld [vmem:[%s1 + $0x10] sm:$0xff]
  %v2704 = vld [vmem:[%s1 + $0x18] sm:$0xff]
  %v2705 = vld [vmem:[%s1 + $0x20] sm:$0xff]
  %v2706 = vld [vmem:[%s1 + $0x28] sm:$0xff]
  %v2707 = vld [vmem:[%s1 + $0x30] sm:$0xff]
  %v2708 = vld [vmem:[%s1 + $0x38] sm:$0xff]
  %v2709 = vld [vmem:[%s1 + $0x40] sm:$0xff]
  %v2710 = vld [vmem:[%s1 + $0x48] sm:$0xff]
  %v2711 = vld [vmem:[%s1 + $0x50] sm:$0xff]
  %v2712 = vld [vmem:[%s1 + $0x58] sm:$0xff]
  %v2713 = vld [vmem:[%s1 + $0x60] sm:$0xff]
  %v2714 = vld [vmem:[%s1 + $0x68] sm:$0xff]
  %v2715 = vld [vmem:[%s1 + $0x70] sm:$0xff]
  %v2716 = vld [vmem:[%s1 + $0x78] sm:$0xff]
  %v2718 = vsel %vm17, %v2684, 0
  %v2721 = vsel %vm17, %v2685, 0
  %v2724 = vsel %vm17, %v2686, 0
  %v2727 = vsel %vm17, %v2687, 0
  %2729 = vmatpush.msra.mxu0 0.0
  %2730 = vmatpush.msra.mxu0 0.0
  %2731 = vmatpush.msra.mxu0 0.0
  %2732 = vmatpush.msra.mxu0 0.0
  %2733 = vmatpush.msra.mxu0 0.0
  %2734 = vmatpush.msra.mxu0 0.0
  %2735 = vmatpush.msra.mxu0 0.0
  %2736 = vmatpush.msra.mxu0 0.0
  %2737 = vmatpush.msra.mxu0 %v2715
  %2738 = vmatpush.msra.mxu0 %v2713
  %2739 = vmatpush.msra.mxu0 %v2711
  %2740 = vmatpush.msra.mxu0 %v2709
  %2741 = vmatpush.msra.mxu0 %v2707
  %2742 = vmatpush.msra.mxu0 %v2705
  %2743 = vmatpush.msra.mxu0 %v2703
  %2744 = vmatpush.msra.mxu0 %v2701
  %2745 = vmatmul.f32.gmra.mxu0 %v2718
  %v2746 = vpop.f32.mrf.mxu0
  %v2747 = vadd.f32 0.0, %v2746
  %2748 = vmatmul.f32.gmra.mxu0 %v2721
  %v2749 = vpop.f32.mrf.mxu0
  %v2750 = vadd.f32 0.0, %v2749
  %2751 = vmatmul.f32.gmra.mxu0 %v2724
  %v2752 = vpop.f32.mrf.mxu0
  %v2753 = vadd.f32 0.0, %v2752
  %2754 = vmatmul.f32.gmra.mxu0 %v2727
  %v2755 = vpop.f32.mrf.mxu0
  %v2756 = vadd.f32 0.0, %v2755
  %2757 = vdwg.mxu0
  %2758 = vmatpush.msra.mxu0 0.0
  %2759 = vmatpush.msra.mxu0 0.0
  %2760 = vmatpush.msra.mxu0 0.0
  %2761 = vmatpush.msra.mxu0 0.0
  %2762 = vmatpush.msra.mxu0 0.0
  %2763 = vmatpush.msra.mxu0 0.0
  %2764 = vmatpush.msra.mxu0 0.0
  %2765 = vmatpush.msra.mxu0 0.0
  %2766 = vmatpush.msra.mxu0 %v2716
  %2767 = vmatpush.msra.mxu0 %v2714
  %2768 = vmatpush.msra.mxu0 %v2712
  %2769 = vmatpush.msra.mxu0 %v2710
  %2770 = vmatpush.msra.mxu0 %v2708
  %2771 = vmatpush.msra.mxu0 %v2706
  %2772 = vmatpush.msra.mxu0 %v2704
  %2773 = vmatpush.msra.mxu0 %v2702
  %2774 = vmatmul.f32.gmra.mxu0 %v2718
  %v2775 = vpop.f32.mrf.mxu0
  %v2776 = vadd.f32 0.0, %v2775
  %2777 = vmatmul.f32.gmra.mxu0 %v2721
  %v2778 = vpop.f32.mrf.mxu0
  %v2779 = vadd.f32 0.0, %v2778
  %2780 = vmatmul.f32.gmra.mxu0 %v2724
  %v2781 = vpop.f32.mrf.mxu0
  %v2782 = vadd.f32 0.0, %v2781
  %2783 = vmatmul.f32.gmra.mxu0 %v2727
  %v2784 = vpop.f32.mrf.mxu0
  %v2785 = vadd.f32 0.0, %v2784
  %2786 = vdwg.mxu0
  %v2787 = vadd.f32 %v2693, %v2747
  %v2788 = vadd.f32 %v2694, %v2776
  %v2789 = vadd.f32 %v2695, %v2750
  %v2790 = vadd.f32 %v2696, %v2779
  %v2791 = vadd.f32 %v2697, %v2753
  %v2792 = vadd.f32 %v2698, %v2782
  %v2793 = vadd.f32 %v2699, %v2756
  %v2794 = vadd.f32 %v2700, %v2785
  %v2795 = vxor.u32 %v2787, 2147483648
  %v2796 = vxor.u32 %v2788, 2147483648
  %v2797 = vxor.u32 %v2789, 2147483648
  %v2798 = vxor.u32 %v2790, 2147483648
  %v2799 = vxor.u32 %v2791, 2147483648
  %v2800 = vxor.u32 %v2792, 2147483648
  %v2801 = vxor.u32 %v2793, 2147483648
  %v2802 = vxor.u32 %v2794, 2147483648
  %v2803 = vmul.f32 %v2795, 1.442695
  %v2804 = vpow.pop %v2803
  %v2805 = vmul.f32 %v2796, 1.442695
  %v2806 = vpow.pop %v2805
  %v2807 = vmul.f32 %v2797, 1.442695
  %v2808 = vpow.pop %v2807
  %v2809 = vmul.f32 %v2798, 1.442695
  %v2810 = vpow.pop %v2809
  %v2811 = vmul.f32 %v2799, 1.442695
  %v2812 = vpow.pop %v2811
  %v2813 = vmul.f32 %v2800, 1.442695
  %v2814 = vpow.pop %v2813
  %v2815 = vmul.f32 %v2801, 1.442695
  %v2816 = vpow.pop %v2815
  %v2817 = vmul.f32 %v2802, 1.442695
  %v2818 = vpow.pop %v2817
  %v2819 = vadd.f32 %v2804, 1.0
  %v2820 = vadd.f32 %v2806, 1.0
  %v2821 = vadd.f32 %v2808, 1.0
  %v2822 = vadd.f32 %v2810, 1.0
  %v2823 = vadd.f32 %v2812, 1.0
  %v2824 = vadd.f32 %v2814, 1.0
  %v2825 = vadd.f32 %v2816, 1.0
  %v2826 = vadd.f32 %v2818, 1.0
  %v2827 = vrcp.pop %v2819
  %v2828 = vmul.f32 %v2819, %v2827
  %v2829 = vsub.f32 1.0, %v2828
  %v2830 = vmul.f32 %v2827, %v2829
  %v2831 = vadd.f32 %v2827, %v2830
  %vm2832 = vweird.f32 %v2819
  %vm2833 = vweird.f32 %v2827
  %vm2834 = vmor %vm2832, %vm2833
  %v2835 = vsel %vm2834, %v2827, %v2831
  %v2836 = vand.u32 2147483647, %v2819
  %vm2837 = vcmp.eq.f32.partialorder %v2836, 8.507059e+37
  %v2838 = vand.u32 %v2819, 2147483648
  %v2839 = vor.u32 1.1754944e-38, %v2838
  %v2840 = vsel %vm2837, %v2839, %v2835
  %v2841 = vmul.f32 1.0, %v2840
  %v2842 = vrcp.pop %v2820
  %v2843 = vmul.f32 %v2820, %v2842
  %v2844 = vsub.f32 1.0, %v2843
  %v2845 = vmul.f32 %v2842, %v2844
  %v2846 = vadd.f32 %v2842, %v2845
  %vm2847 = vweird.f32 %v2820
  %vm2848 = vweird.f32 %v2842
  %vm2849 = vmor %vm2847, %vm2848
  %v2850 = vsel %vm2849, %v2842, %v2846
  %v2851 = vand.u32 2147483647, %v2820
  %vm2852 = vcmp.eq.f32.partialorder %v2851, 8.507059e+37
  %v2853 = vand.u32 %v2820, 2147483648
  %v2854 = vor.u32 1.1754944e-38, %v2853
  %v2855 = vsel %vm2852, %v2854, %v2850
  %v2856 = vmul.f32 1.0, %v2855
  %v2857 = vrcp.pop %v2821
  %v2858 = vmul.f32 %v2821, %v2857
  %v2859 = vsub.f32 1.0, %v2858
  %v2860 = vmul.f32 %v2857, %v2859
  %v2861 = vadd.f32 %v2857, %v2860
  %vm2862 = vweird.f32 %v2821
  %vm2863 = vweird.f32 %v2857
  %vm2864 = vmor %vm2862, %vm2863
  %v2865 = vsel %vm2864, %v2857, %v2861
  %v2866 = vand.u32 2147483647, %v2821
  %vm2867 = vcmp.eq.f32.partialorder %v2866, 8.507059e+37
  %v2868 = vand.u32 %v2821, 2147483648
  %v2869 = vor.u32 1.1754944e-38, %v2868
  %v2870 = vsel %vm2867, %v2869, %v2865
  %v2871 = vmul.f32 1.0, %v2870
  %v2872 = vrcp.pop %v2822
  %v2873 = vmul.f32 %v2822, %v2872
  %v2874 = vsub.f32 1.0, %v2873
  %v2875 = vmul.f32 %v2872, %v2874
  %v2876 = vadd.f32 %v2872, %v2875
  %vm2877 = vweird.f32 %v2822
  %vm2878 = vweird.f32 %v2872
  %vm2879 = vmor %vm2877, %vm2878
  %v2880 = vsel %vm2879, %v2872, %v2876
  %v2881 = vand.u32 2147483647, %v2822
  %vm2882 = vcmp.eq.f32.partialorder %v2881, 8.507059e+37
  %v2883 = vand.u32 %v2822, 2147483648
  %v2884 = vor.u32 1.1754944e-38, %v2883
  %v2885 = vsel %vm2882, %v2884, %v2880
  %v2886 = vmul.f32 1.0, %v2885
  %v2887 = vrcp.pop %v2823
  %v2888 = vmul.f32 %v2823, %v2887
  %v2889 = vsub.f32 1.0, %v2888
  %v2890 = vmul.f32 %v2887, %v2889
  %v2891 = vadd.f32 %v2887, %v2890
  %vm2892 = vweird.f32 %v2823
  %vm2893 = vweird.f32 %v2887
  %vm2894 = vmor %vm2892, %vm2893
  %v2895 = vsel %vm2894, %v2887, %v2891
  %v2896 = vand.u32 2147483647, %v2823
  %vm2897 = vcmp.eq.f32.partialorder %v2896, 8.507059e+37
  %v2898 = vand.u32 %v2823, 2147483648
  %v2899 = vor.u32 1.1754944e-38, %v2898
  %v2900 = vsel %vm2897, %v2899, %v2895
  %v2901 = vmul.f32 1.0, %v2900
  %v2902 = vrcp.pop %v2824
  %v2903 = vmul.f32 %v2824, %v2902
  %v2904 = vsub.f32 1.0, %v2903
  %v2905 = vmul.f32 %v2902, %v2904
  %v2906 = vadd.f32 %v2902, %v2905
  %vm2907 = vweird.f32 %v2824
  %vm2908 = vweird.f32 %v2902
  %vm2909 = vmor %vm2907, %vm2908
  %v2910 = vsel %vm2909, %v2902, %v2906
  %v2911 = vand.u32 2147483647, %v2824
  %vm2912 = vcmp.eq.f32.partialorder %v2911, 8.507059e+37
  %v2913 = vand.u32 %v2824, 2147483648
  %v2914 = vor.u32 1.1754944e-38, %v2913
  %v2915 = vsel %vm2912, %v2914, %v2910
  %v2916 = vmul.f32 1.0, %v2915
  %v2917 = vrcp.pop %v2825
  %v2918 = vmul.f32 %v2825, %v2917
  %v2919 = vsub.f32 1.0, %v2918
  %v2920 = vmul.f32 %v2917, %v2919
  %v2921 = vadd.f32 %v2917, %v2920
  %vm2922 = vweird.f32 %v2825
  %vm2923 = vweird.f32 %v2917
  %vm2924 = vmor %vm2922, %vm2923
  %v2925 = vsel %vm2924, %v2917, %v2921
  %v2926 = vand.u32 2147483647, %v2825
  %vm2927 = vcmp.eq.f32.partialorder %v2926, 8.507059e+37
  %v2928 = vand.u32 %v2825, 2147483648
  %v2929 = vor.u32 1.1754944e-38, %v2928
  %v2930 = vsel %vm2927, %v2929, %v2925
  %v2931 = vmul.f32 1.0, %v2930
  %v2932 = vrcp.pop %v2826
  %v2933 = vmul.f32 %v2826, %v2932
  %v2934 = vsub.f32 1.0, %v2933
  %v2935 = vmul.f32 %v2932, %v2934
  %v2936 = vadd.f32 %v2932, %v2935
  %vm2937 = vweird.f32 %v2826
  %vm2938 = vweird.f32 %v2932
  %vm2939 = vmor %vm2937, %vm2938
  %v2940 = vsel %vm2939, %v2932, %v2936
  %v2941 = vand.u32 2147483647, %v2826
  %vm2942 = vcmp.eq.f32.partialorder %v2941, 8.507059e+37
  %v2943 = vand.u32 %v2826, 2147483648
  %v2944 = vor.u32 1.1754944e-38, %v2943
  %v2945 = vsel %vm2942, %v2944, %v2940
  %v2946 = vmul.f32 1.0, %v2945
  %v2947 = vtanh.pop %v2788
  %v2948 = vtanh.pop %v2790
  %v2949 = vtanh.pop %v2792
  %v2950 = vtanh.pop %v2794
  %2955 = vrot.lane.b32.xlu0 %v2688, 64
  %v2956 = vpop.permute.xlu0 %2955
  %2957 = vrot.lane.b32.xlu0 %v2689, 64
  %v2958 = vpop.permute.xlu0 %2957
  %2959 = vrot.lane.b32.xlu0 %v2690, 64
  %v2960 = vpop.permute.xlu0 %2959
  %2961 = vrot.lane.b32.xlu0 %v2691, 64
  %v2962 = vpop.permute.xlu0 %2961
  %v2967 = vmul.f32 %v2841, %v2956
  %v2968 = vmul.f32 %v2871, %v2958
  %v2969 = vmul.f32 %v2901, %v2960
  %v2970 = vmul.f32 %v2931, %v2962
  %2975 = vrot.lane.b32.xlu0 %v2947, 64
  %v2976 = vpop.permute.xlu0 %2975
  %2977 = vrot.lane.b32.xlu0 %v2948, 64
  %v2978 = vpop.permute.xlu0 %2977
  %2979 = vrot.lane.b32.xlu0 %v2949, 64
  %v2980 = vpop.permute.xlu0 %2979
  %2981 = vrot.lane.b32.xlu0 %v2950, 64
  %v2982 = vpop.permute.xlu0 %2981
  %v2987 = vmul.f32 %v2841, %v2976
  %v2988 = vmul.f32 %v2871, %v2978
  %v2989 = vmul.f32 %v2901, %v2980
  %v2990 = vmul.f32 %v2931, %v2982
  %2995 = vrot.lane.b32.xlu0 %v2987, 64
  %v2996 = vpop.permute.xlu0 %2995
  %2997 = vrot.lane.b32.xlu0 %v2988, 64
  %v2998 = vpop.permute.xlu0 %2997
  %2999 = vrot.lane.b32.xlu0 %v2989, 64
  %v3000 = vpop.permute.xlu0 %2999
  %3001 = vrot.lane.b32.xlu0 %v2990, 64
  %v3002 = vpop.permute.xlu0 %3001
  %v3007 = vadd.f32 %v2967, %v2996
  %v3008 = vadd.f32 %v2968, %v2998
  %v3009 = vadd.f32 %v2969, %v3000
  %v3010 = vadd.f32 %v2970, %v3002
  %v3011 = vtanh.pop %v3007
  %v3012 = vtanh.pop %v3008
  %v3013 = vtanh.pop %v3009
  %v3014 = vtanh.pop %v3010
  %3019 = vrot.lane.b32.xlu0 %v3011, 64
  %v3020 = vpop.permute.xlu0 %3019
  %3021 = vrot.lane.b32.xlu0 %v3012, 64
  %v3022 = vpop.permute.xlu0 %3021
  %3023 = vrot.lane.b32.xlu0 %v3013, 64
  %v3024 = vpop.permute.xlu0 %3023
  %3025 = vrot.lane.b32.xlu0 %v3014, 64
  %v3026 = vpop.permute.xlu0 %3025
  %v3031 = vmul.f32 %v2856, %v3020
  %v3032 = vmul.f32 %v2886, %v3022
  %v3033 = vmul.f32 %v2916, %v3024
  %v3034 = vmul.f32 %v2946, %v3026
  %3035 = vst.msk [vmem:[#allocation2] sm:$0xff] %vm17, %v3031
  %3036 = vst.msk [vmem:[#allocation2 + $0x8] sm:$0xff] %vm17, %v3032
  %3037 = vst.msk [vmem:[#allocation2 + $0x10] sm:$0xff] %vm17, %v3033
  %3038 = vst.msk [vmem:[#allocation2 + $0x18] sm:$0xff] %vm17, %v3034
  %3043 = vrot.lane.b32.xlu0 %v3007, 64
  %v3044 = vpop.permute.xlu0 %3043
  %3045 = vrot.lane.b32.xlu0 %v3008, 64
  %v3046 = vpop.permute.xlu0 %3045
  %3047 = vrot.lane.b32.xlu0 %v3009, 64
  %v3048 = vpop.permute.xlu0 %3047
  %3049 = vrot.lane.b32.xlu0 %v3010, 64
  %v3050 = vpop.permute.xlu0 %3049
  %3055 = vst.msk [vmem:[#allocation3] sm:$0xff] %vm17, %v3044
  %3056 = vst.msk [vmem:[#allocation3 + $0x8] sm:$0xff] %vm17, %v3046
  %3057 = vst.msk [vmem:[#allocation3 + $0x10] sm:$0xff] %vm17, %v3048
  %3058 = vst.msk [vmem:[#allocation3 + $0x18] sm:$0xff] %vm17, %v3050
  %s3059 = scalar_lea.vmem [#allocation4], 224
  %3060 = vst.msk [vmem:[%s3059] sm:$0xff] %vm17, %v3031
  %3061 = vst.msk [vmem:[%s3059 + $0x8] sm:$0xff] %vm17, %v3032
  %3062 = vst.msk [vmem:[%s3059 + $0x10] sm:$0xff] %vm17, %v3033
  %3063 = vst.msk [vmem:[%s3059 + $0x18] sm:$0xff] %vm17, %v3034
  %v3064 = vld [vmem:[#allocation4] sm:$0xff]
  %v3065 = vld [vmem:[#allocation4 + $0x8] sm:$0xff]
  %v3066 = vld [vmem:[#allocation4 + $0x10] sm:$0xff]
  %v3067 = vld [vmem:[#allocation4 + $0x18] sm:$0xff]
  %v3068 = vld [vmem:[#allocation4 + $0x20] sm:$0xff]
  %v3069 = vld [vmem:[#allocation4 + $0x28] sm:$0xff]
  %v3070 = vld [vmem:[#allocation4 + $0x30] sm:$0xff]
  %v3071 = vld [vmem:[#allocation4 + $0x38] sm:$0xff]
  %v3072 = vld [vmem:[#allocation4 + $0x40] sm:$0xff]
  %v3073 = vld [vmem:[#allocation4 + $0x48] sm:$0xff]
  %v3074 = vld [vmem:[#allocation4 + $0x50] sm:$0xff]
  %v3075 = vld [vmem:[#allocation4 + $0x58] sm:$0xff]
  %v3076 = vld [vmem:[#allocation4 + $0x60] sm:$0xff]
  %v3077 = vld [vmem:[#allocation4 + $0x68] sm:$0xff]
  %v3078 = vld [vmem:[#allocation4 + $0x70] sm:$0xff]
  %v3079 = vld [vmem:[#allocation4 + $0x78] sm:$0xff]
  %v3080 = vld [vmem:[#allocation4 + $0x80] sm:$0xff]
  %v3081 = vld [vmem:[#allocation4 + $0x88] sm:$0xff]
  %v3082 = vld [vmem:[#allocation4 + $0x90] sm:$0xff]
  %v3083 = vld [vmem:[#allocation4 + $0x98] sm:$0xff]
  %v3084 = vld [vmem:[#allocation4 + $0xa0] sm:$0xff]
  %v3085 = vld [vmem:[#allocation4 + $0xa8] sm:$0xff]
  %v3086 = vld [vmem:[#allocation4 + $0xb0] sm:$0xff]
  %v3087 = vld [vmem:[#allocation4 + $0xb8] sm:$0xff]
  %v3088 = vld [vmem:[#allocation4 + $0xc0] sm:$0xff]
  %v3089 = vld [vmem:[#allocation4 + $0xc8] sm:$0xff]
  %v3090 = vld [vmem:[#allocation4 + $0xd0] sm:$0xff]
  %v3091 = vld [vmem:[#allocation4 + $0xd8] sm:$0xff]
  %v3092 = vld [vmem:[#allocation4 + $0xe0] sm:$0xff]
  %v3093 = vld [vmem:[#allocation4 + $0xe8] sm:$0xff]
  %v3094 = vld [vmem:[#allocation4 + $0xf0] sm:$0xff]
  %v3095 = vld [vmem:[#allocation4 + $0xf8] sm:$0xff]
  %v3096 = vld [vmem:[#allocation2] sm:$0xff]
  %v3097 = vld [vmem:[#allocation2 + $0x8] sm:$0xff]
  %v3098 = vld [vmem:[#allocation2 + $0x10] sm:$0xff]
  %v3099 = vld [vmem:[#allocation2 + $0x18] sm:$0xff]
  %v3100 = vadd.f32 %v3064, %v3096
  %v3101 = vadd.f32 %v3065, %v3097
  %v3102 = vadd.f32 %v3066, %v3098
  %v3103 = vadd.f32 %v3067, %v3099
  %v3104 = vadd.f32 %v3068, %v3096
  %v3105 = vadd.f32 %v3069, %v3097
  %v3106 = vadd.f32 %v3070, %v3098
  %v3107 = vadd.f32 %v3071, %v3099
  %v3108 = vadd.f32 %v3072, %v3096
  %v3109 = vadd.f32 %v3073, %v3097
  %v3110 = vadd.f32 %v3074, %v3098
  %v3111 = vadd.f32 %v3075, %v3099
  %v3112 = vadd.f32 %v3076, %v3096
  %v3113 = vadd.f32 %v3077, %v3097
  %v3114 = vadd.f32 %v3078, %v3098
  %v3115 = vadd.f32 %v3079, %v3099
  %v3116 = vadd.f32 %v3080, %v3096
  %v3117 = vadd.f32 %v3081, %v3097
  %v3118 = vadd.f32 %v3082, %v3098
  %v3119 = vadd.f32 %v3083, %v3099
  %v3120 = vadd.f32 %v3084, %v3096
  %v3121 = vadd.f32 %v3085, %v3097
  %v3122 = vadd.f32 %v3086, %v3098
  %v3123 = vadd.f32 %v3087, %v3099
  %v3124 = vadd.f32 %v3088, %v3096
  %v3125 = vadd.f32 %v3089, %v3097
  %v3126 = vadd.f32 %v3090, %v3098
  %v3127 = vadd.f32 %v3091, %v3099
  %v3128 = vadd.f32 %v3092, %v3096
  %v3129 = vadd.f32 %v3093, %v3097
  %v3130 = vadd.f32 %v3094, %v3098
  %v3131 = vadd.f32 %v3095, %v3099
  %v3132 = vld [vmem:[%s2] sm:$0x3]
  %v3133 = vld [vmem:[%s3] sm:$0xf]
  %3135 = vst [vmem:[#allocation1] ss:$4 sm:$0xff] %v3133
  %v3136 = vld.sshfl [vmem:[#allocation1] sm:$0xff pattern:$0x73625140]
  %v3137 = vld.sshfl [vmem:[#allocation1 + $0x8] sm:$0xff pattern:$0x73625140]
  %v3141 = vsel %vm17, %v3132, 0
  %v3144 = vsel %vm17, %v3100, 0
  %v3147 = vsel %vm17, %v3101, 0
  %v3150 = vsel %vm17, %v3102, 0
  %v3153 = vsel %vm17, %v3103, 0
  %v3156 = vsel %vm17, %v3104, 0
  %v3159 = vsel %vm17, %v3105, 0
  %v3162 = vsel %vm17, %v3106, 0
  %v3165 = vsel %vm17, %v3107, 0
  %v3168 = vsel %vm17, %v3108, 0
  %v3171 = vsel %vm17, %v3109, 0
  %v3174 = vsel %vm17, %v3110, 0
  %v3177 = vsel %vm17, %v3111, 0
  %v3180 = vsel %vm17, %v3112, 0
  %v3183 = vsel %vm17, %v3113, 0
  %v3186 = vsel %vm17, %v3114, 0
  %v3189 = vsel %vm17, %v3115, 0
  %v3192 = vsel %vm17, %v3116, 0
  %v3195 = vsel %vm17, %v3117, 0
  %v3198 = vsel %vm17, %v3118, 0
  %v3201 = vsel %vm17, %v3119, 0
  %v3204 = vsel %vm17, %v3120, 0
  %v3207 = vsel %vm17, %v3121, 0
  %v3210 = vsel %vm17, %v3122, 0
  %v3213 = vsel %vm17, %v3123, 0
  %v3216 = vsel %vm17, %v3124, 0
  %v3219 = vsel %vm17, %v3125, 0
  %v3222 = vsel %vm17, %v3126, 0
  %v3225 = vsel %vm17, %v3127, 0
  %v3228 = vsel %vm17, %v3128, 0
  %v3231 = vsel %vm17, %v3129, 0
  %v3234 = vsel %vm17, %v3130, 0
  %v3237 = vsel %vm17, %v3131, 0
  %3239 = vmatpush.xpose.msra.mxu0 %v3189
  %3240 = vmatpush.xpose.msra.mxu0 %v3186
  %3241 = vmatpush.xpose.msra.mxu0 %v3183
  %3242 = vmatpush.xpose.msra.mxu0 %v3180
  %3243 = vmatpush.xpose.msra.mxu0 %v3177
  %3244 = vmatpush.xpose.msra.mxu0 %v3174
  %3245 = vmatpush.xpose.msra.mxu0 %v3171
  %3246 = vmatpush.xpose.msra.mxu0 %v3168
  %3247 = vmatpush.xpose.msra.mxu0 %v3165
  %3248 = vmatpush.xpose.msra.mxu0 %v3162
  %3249 = vmatpush.xpose.msra.mxu0 %v3159
  %3250 = vmatpush.xpose.msra.mxu0 %v3156
  %3251 = vmatpush.xpose.msra.mxu0 %v3153
  %3252 = vmatpush.xpose.msra.mxu0 %v3150
  %3253 = vmatpush.xpose.msra.mxu0 %v3147
  %3254 = vmatpush.xpose.msra.mxu0 %v3144
  %3255 = vmatmul.f32.gmra.mxu0 %v3141
  %v3256 = vpop.f32.mrf.mxu0
  %v3257 = vadd.f32 %v3136, %v3256
  %3258 = vdwg.mxu0
  %3259 = vmatpush.xpose.msra.mxu0 %v3237
  %3260 = vmatpush.xpose.msra.mxu0 %v3234
  %3261 = vmatpush.xpose.msra.mxu0 %v3231
  %3262 = vmatpush.xpose.msra.mxu0 %v3228
  %3263 = vmatpush.xpose.msra.mxu0 %v3225
  %3264 = vmatpush.xpose.msra.mxu0 %v3222
  %3265 = vmatpush.xpose.msra.mxu0 %v3219
  %3266 = vmatpush.xpose.msra.mxu0 %v3216
  %3267 = vmatpush.xpose.msra.mxu0 %v3213
  %3268 = vmatpush.xpose.msra.mxu0 %v3210
  %3269 = vmatpush.xpose.msra.mxu0 %v3207
  %3270 = vmatpush.xpose.msra.mxu0 %v3204
  %3271 = vmatpush.xpose.msra.mxu0 %v3201
  %3272 = vmatpush.xpose.msra.mxu0 %v3198
  %3273 = vmatpush.xpose.msra.mxu0 %v3195
  %3274 = vmatpush.xpose.msra.mxu0 %v3192
  %3275 = vmatmul.f32.gmra.mxu0 %v3141
  %v3276 = vpop.f32.mrf.mxu0
  %v3277 = vadd.f32 %v3137, %v3276
  %3278 = vdwg.mxu0
  %v3281 = vrot.slane %v3277, 6
  %vm3282 = vcmask 1041408
  %v3283 = vsel %vm3282, %v3257, %v3281
  %3285 = vst [vmem:[%s4] sm:$0xf] %v3283
  // Predicated region
  $region18: #{dmvstnet_forward.3} parent=0 // pred_check
    _
  $region19: #{dmvstnet_forward.3} parent=0 // pred_check_branch
    %3287 = sbr.rel (0) target = $region21
  $region20: #{dmvstnet_forward.3} parent=0 // pred_region
    _
  $region21: #{dmvstnet_forward.3} parent=0 // pred_fallthru
    _
  // Predicated region
  $region22: #{dmvstnet_forward.3} parent=0 // pred_check
    _
  $region23: #{dmvstnet_forward.3} parent=0 // pred_check_branch
    %3289 = sbr.rel (0) target = $region25
  $region24: #{dmvstnet_forward.3} parent=0 // pred_region
    _
  $region25: #{dmvstnet_forward.3} parent=0 // pred_fallthru
    _

</llo_original>
